<compile_context>
chip_gen: v7x
topology: tpu7x:2x2x1
jax: 0.10.0
libtpu: 0.0.40
codegen_flags: <defaults>
</compile_context>

<pallas_src>
import functools
import math

import numpy as np
import jax
import jax.numpy as jnp
from jax import lax
from jax.experimental import pallas as pl
from jax.experimental.pallas import tpu as pltpu

_NEG_INF = -1e30


# ---------------------------------------------------------------------------
# Fused Pallas kernel: affine + 2 transformer encoder layers
# ---------------------------------------------------------------------------

def _itrm_fused_kernel(x_ref, mask_ref, aff_w_ref, slab_e_ref, slab_f_ref,
                       bias_ref, o_ref, *, nhead, E, F, num_layers):
    hd = E // nhead
    per_layer_e = 4 * E + F          # lanes per layer in slab_E: [Wqkv | Wo | W1]

    def layer_norm(y, g, b):
        # LayerNorm over last axis, eps = 1e-5 (PyTorch default)
        mean = jnp.mean(y, axis=-1, keepdims=True)
        var = jnp.mean((y - mean) ** 2, axis=-1, keepdims=True)
        return (y - mean) * lax.rsqrt(var + 1e-5) * g + b

    mask = mask_ref[...]             # (M, M) additive cross-batch mask

    # affine_matrix: (M, Din) @ (Din, E) + b  (rows stay in time-major T*B order)
    x = (jnp.dot(x_ref[...], aff_w_ref[...], preferred_element_type=jnp.float32)
         + bias_ref[0:1, 0:E])

    for li in range(num_layers):     # static unroll (2 layers)
        e0 = li * per_layer_e
        wqkv = slab_e_ref[:, e0:e0 + 3 * E]                 # (E, 3E), q-scale folded in
        wo = slab_e_ref[:, e0 + 3 * E:e0 + 4 * E]           # (E, E)
        w1 = slab_e_ref[:, e0 + 4 * E:e0 + 4 * E + F]       # (E, F)
        w2 = slab_f_ref[:, li * E:(li + 1) * E]             # (F, E)
        b0 = 1 + li * 8
        bqkv = bias_ref[b0 + 0:b0 + 1, 0:3 * E]
        bo = bias_ref[b0 + 1:b0 + 2, 0:E]
        b1 = bias_ref[b0 + 2:b0 + 3, 0:F]
        b2 = bias_ref[b0 + 3:b0 + 4, 0:E]
        ln1g = bias_ref[b0 + 4:b0 + 5, 0:E]
        ln1b = bias_ref[b0 + 5:b0 + 6, 0:E]
        ln2g = bias_ref[b0 + 6:b0 + 7, 0:E]
        ln2b = bias_ref[b0 + 7:b0 + 8, 0:E]

        # ---- fused QKV projection: one MXU push instead of 3*nhead ---------
        qkv = jnp.dot(x, wqkv, preferred_element_type=jnp.float32) + bqkv   # (M, 3E)

        # ---- per-head attention over ALL rows at once, cross-batch masked --
        heads = []
        for h in range(nhead):
            q = qkv[:, h * hd:(h + 1) * hd]
            k = qkv[:, E + h * hd:E + (h + 1) * hd]
            v = qkv[:, 2 * E + h * hd:2 * E + (h + 1) * hd]
            # scores = q @ k^T without materializing a transpose
            s = lax.dot_general(q, k, (((1,), (1,)), ((), ())),
                                preferred_element_type=jnp.float32) + mask
            s = s - jnp.max(s, axis=-1, keepdims=True)
            p = jnp.exp(s)
            p = p * pl.reciprocal(jnp.sum(p, axis=-1, keepdims=True), approx=True)
            heads.append(jnp.dot(p, v, preferred_element_type=jnp.float32))
        # heads occupy contiguous E/nhead lane chunks -> single out-proj matmul
        attn = jnp.concatenate(heads, axis=-1)                              # (M, E)
        attn = jnp.dot(attn, wo, preferred_element_type=jnp.float32) + bo

        # ---- residual + LayerNorm 1 ----------------------------------------
        x = layer_norm(x + attn, ln1g, ln1b)

        # ---- FFN: Linear -> ReLU -> Linear, residual + LayerNorm 2 ---------
        ff = jnp.maximum(jnp.dot(x, w1, preferred_element_type=jnp.float32) + b1, 0.0)
        ff = jnp.dot(ff, w2, preferred_element_type=jnp.float32) + b2
        x = layer_norm(x + ff, ln2g, ln2b)

    o_ref[...] = x.astype(o_ref.dtype)
    # TODO(synk): bf16 MXU operands (v6e/v7x) not applied to keep f32 1e-3 tolerance.


# ---------------------------------------------------------------------------
# Parameter packing (done ONCE): PyTorch (N,K) layouts -> 4 lane-dense slabs
# ---------------------------------------------------------------------------

def pack_params(params, nhead=4):
    E = params["affine_w"].shape[0]
    hd = E // nhead
    scale = 1.0 / math.sqrt(hd)      # fold PyTorch's q-scale into Wq / bq
    layers = params["layers"]
    F = layers[0]["lin1_w"].shape[0]
    BW = max(3 * E, F, E)            # bias-slab row width

    def row(v):
        v = jnp.asarray(v, jnp.float32).reshape(1, -1)
        return jnp.pad(v, ((0, 0), (0, BW - v.shape[1])))

    bias_rows = [row(params["affine_b"])]
    slabs_e, slabs_f = [], []
    for p in layers:
        w_in, b_in = p["in_proj_w"], p["in_proj_b"]          # (3E, E), (3E,)
        # in_proj_weight rows: [0:E]=Wq, [E:2E]=Wk, [2E:3E]=Wv
        wqkv = jnp.concatenate(
            [w_in[:E] * scale, w_in[E:2 * E], w_in[2 * E:]], axis=0).T      # (E, 3E)
        bqkv = jnp.concatenate([b_in[:E] * scale, b_in[E:2 * E], b_in[2 * E:]])
        slabs_e.append(jnp.concatenate(
            [wqkv, p["out_proj_w"].T, p["lin1_w"].T], axis=1))              # (E, 4E+F)
        slabs_f.append(p["lin2_w"].T)                                       # (F, E)
        bias_rows += [row(bqkv), row(p["out_proj_b"]), row(p["lin1_b"]),
                      row(p["lin2_b"]), row(p["ln1_g"]), row(p["ln1_b"]),
                      row(p["ln2_g"]), row(p["ln2_b"])]

    aff_w = jnp.asarray(params["affine_w"], jnp.float32).T                  # (Din, E)
    slab_e = jnp.concatenate(slabs_e, axis=1)                               # (E, L*(4E+F))
    slab_f = jnp.concatenate(slabs_f, axis=1)                               # (F, L*E)
    slab_b = jnp.concatenate(bias_rows, axis=0)                             # (1+8L, BW)
    return aff_w, slab_e, slab_f, slab_b


@functools.lru_cache(maxsize=None)
def _batch_mask(T, B):
    """Additive mask over flattened (T*B) rows: row r belongs to batch r % B."""
    b = np.arange(T * B) % B
    m = np.where(b[:, None] == b[None, :], 0.0, _NEG_INF).astype(np.float32)
    return jnp.asarray(m)


# ---------------------------------------------------------------------------
# Module forward: single pallas_call, no host transposes
# ---------------------------------------------------------------------------

def internal_temporal_relation_forward(feature, packed_params, nhead=4):
    """feature: (T, B, input_dim) -> (T, B, d_model). One fused Pallas kernel."""
    T, B, Din = feature.shape
    aff_w, slab_e, slab_f, slab_b = packed_params
    E = aff_w.shape[1]
    F = slab_f.shape[0]
    L = (slab_b.shape[0] - 1) // 8
    M = T * B

    x = feature.reshape(M, Din)      # free leading-dim collapse, no transpose
    mask = _batch_mask(T, B)

    kernel = functools.partial(_itrm_fused_kernel, nhead=nhead, E=E, F=F,
                               num_layers=L)
    vmem = pl.BlockSpec(memory_space=pltpu.MemorySpace.VMEM)
    out = pl.pallas_call(
        kernel,
        out_shape=jax.ShapeDtypeStruct((M, E), feature.dtype),
        in_specs=[vmem] * 6,
        out_specs=vmem,
    )(x, mask, aff_w, slab_e, slab_f, slab_b)

    # TODO(synk): CMRAN's Encoder takes an optional final `norm`; it is None for
    # this module, so no final LayerNorm is applied here.
    return out.reshape(T, B, E)      # free leading-dim split


# ---------------------------------------------------------------------------
# Deterministic parameter construction (PyTorch layouts)
# ---------------------------------------------------------------------------

def init_params(key, input_dim, d_model, dim_feedforward, num_layers=2):
    def dense(k, out_dim, in_dim, scale=0.05):
        return scale * jax.random.normal(k, (out_dim, in_dim), jnp.float32)

    keys = jax.random.split(key, 1 + num_layers)
    params = {
        "affine_w": dense(keys[0], d_model, input_dim),
        "affine_b": jnp.zeros((d_model,), jnp.float32),
        "layers": [],
    }
    for li in range(num_layers):
        lk = jax.random.split(keys[1 + li], 4)
        params["layers"].append({
            "in_proj_w": dense(lk[0], 3 * d_model, d_model),
            "in_proj_b": jnp.zeros((3 * d_model,), jnp.float32),
            "out_proj_w": dense(lk[1], d_model, d_model),
            "out_proj_b": jnp.zeros((d_model,), jnp.float32),
            "lin1_w": dense(lk[2], dim_feedforward, d_model),
            "lin1_b": jnp.zeros((dim_feedforward,), jnp.float32),
            "lin2_w": dense(lk[3], d_model, dim_feedforward),
            "lin2_b": jnp.zeros((d_model,), jnp.float32),
            "ln1_g": jnp.ones((d_model,), jnp.float32),
            "ln1_b": jnp.zeros((d_model,), jnp.float32),
            "ln2_g": jnp.ones((d_model,), jnp.float32),
            "ln2_b": jnp.zeros((d_model,), jnp.float32),
        })
    return params


# ---------------------------------------------------------------------------
# Pure-JAX reference (same math, no Pallas) for a sanity check
# ---------------------------------------------------------------------------

def _ref_forward(feature, params, nhead=4):
    def lin(x, w, b):
        return x @ w.T + b

    def ln(y, g, b):
        m = jnp.mean(y, -1, keepdims=True)
        v = jnp.mean((y - m) ** 2, -1, keepdims=True)
        return (y - m) * jax.lax.rsqrt(v + 1e-5) * g + b

    T, B, Din = feature.shape
    E = params["affine_w"].shape[0]
    hd = E // nhead
    x = lin(feature, params["affine_w"], params["affine_b"])
    for p in params["layers"]:
        qkv = lin(x, p["in_proj_w"], p["in_proj_b"])
        q, k, v = jnp.split(qkv, 3, axis=-1)
        rs = lambda t: t.reshape(T, B, nhead, hd).transpose(1, 2, 0, 3)
        q, k, v = rs(q) / math.sqrt(hd), rs(k), rs(v)
        s = jnp.einsum("bhqd,bhkd->bhqk", q, k)
        p_attn = jax.nn.softmax(s, axis=-1)
        a = jnp.einsum("bhqk,bhkd->bhqd", p_attn, v)
        a = a.transpose(2, 0, 1, 3).reshape(T, B, E)
        a = lin(a, p["out_proj_w"], p["out_proj_b"])
        x = ln(x + a, p["ln1_g"], p["ln1_b"])
        ff = lin(jax.nn.relu(lin(x, p["lin1_w"], p["lin1_b"])),
                 p["lin2_w"], p["lin2_b"])
        x = ln(x + ff, p["ln2_g"], p["ln2_b"])
    return x


# ---------------------------------------------------------------------------
# Main
# ---------------------------------------------------------------------------

if __name__ == "__main__":
    # Small synthetic shapes consistent with the module:
    #   seq T=8, batch B=2, input_dim=64, d_model=32 (nhead=4), ffn=64
    T, B, INPUT_DIM, D_MODEL, FFN, NHEAD = 8, 2, 64, 32, 64, 4

    key = jax.random.PRNGKey(0)
    k_param, k_feat = jax.random.split(key)
    params = init_params(k_param, INPUT_DIM, D_MODEL, FFN, num_layers=2)
    feature = jax.random.normal(k_feat, (T, B, INPUT_DIM), jnp.float32)

    packed = pack_params(params, nhead=NHEAD)        # one-time weight packing
    fwd = jax.jit(internal_temporal_relation_forward)
    out = jax.block_until_ready(fwd(feature, packed))

    ref = _ref_forward(feature, params, nhead=NHEAD)
    assert out.shape == (T, B, D_MODEL)
    assert jnp.allclose(out, ref, rtol=1e-3, atol=1e-3), "mismatch vs reference"

    print("KERNEL_OK")
</pallas_src>

<mosaic_0001>
module attributes {stable_mosaic.version = 11 : i64} {
  func.func @_itrm_fused_kernel(%arg0: memref<16x64xf32, #tpu.memory_space<vmem>>, %arg1: memref<16x16xf32, #tpu.memory_space<vmem>>, %arg2: memref<64x32xf32, #tpu.memory_space<vmem>>, %arg3: memref<32x384xf32, #tpu.memory_space<vmem>>, %arg4: memref<64x64xf32, #tpu.memory_space<vmem>>, %arg5: memref<17x96xf32, #tpu.memory_space<vmem>>, %arg6: memref<16x32xf32, #tpu.memory_space<vmem>>) attributes {dimension_semantics = [], scalar_prefetch = 0 : i64, scratch_operands = 0 : i64, tpu.core_type = #tpu.core_type<tc>} {
    %c0 = arith.constant 0 : index
    %c0_0 = arith.constant 0 : index
    %0 = vector.load %arg1[%c0, %c0_0] : memref<16x16xf32, #tpu.memory_space<vmem>>, vector<16x16xf32>
    %c0_1 = arith.constant 0 : index
    %c0_2 = arith.constant 0 : index
    %1 = vector.load %arg0[%c0_1, %c0_2] : memref<16x64xf32, #tpu.memory_space<vmem>>, vector<16x64xf32>
    %c0_3 = arith.constant 0 : index
    %c0_4 = arith.constant 0 : index
    %2 = vector.load %arg2[%c0_3, %c0_4] : memref<64x32xf32, #tpu.memory_space<vmem>>, vector<64x32xf32>
    %cst = arith.constant dense<0.000000e+00> : vector<16x32xf32>
    %3 = tpu.matmul %1, %2, %cst {dimension_numbers = #tpu.dot_dimension_numbers<[1], [0], [0], [1], [0, 0, 1, 1], [], []>} : vector<16x64xf32>, vector<64x32xf32>, vector<16x32xf32> -> vector<16x32xf32>
    %c0_5 = arith.constant 0 : index
    %c0_6 = arith.constant 0 : index
    %4 = vector.load %arg5[%c0_5, %c0_6] : memref<17x96xf32, #tpu.memory_space<vmem>>, vector<1x32xf32>
    %5 = vector.broadcast %4 : vector<1x32xf32> to vector<16x32xf32>
    %6 = arith.addf %3, %5 : vector<16x32xf32>
    %c0_7 = arith.constant 0 : index
    %c0_8 = arith.constant 0 : index
    %7 = vector.load %arg3[%c0_7, %c0_8] : memref<32x384xf32, #tpu.memory_space<vmem>>, vector<32x96xf32>
    %c0_9 = arith.constant 0 : index
    %c96 = arith.constant 96 : index
    %8 = vector.load %arg3[%c0_9, %c96] : memref<32x384xf32, #tpu.memory_space<vmem>>, vector<32x32xf32>
    %c0_10 = arith.constant 0 : index
    %c128 = arith.constant 128 : index
    %9 = vector.load %arg3[%c0_10, %c128] : memref<32x384xf32, #tpu.memory_space<vmem>>, vector<32x64xf32>
    %c0_11 = arith.constant 0 : index
    %c0_12 = arith.constant 0 : index
    %10 = vector.load %arg4[%c0_11, %c0_12] : memref<64x64xf32, #tpu.memory_space<vmem>>, vector<64x32xf32>
    %c1 = arith.constant 1 : index
    %c0_13 = arith.constant 0 : index
    %11 = vector.load %arg5[%c1, %c0_13] : memref<17x96xf32, #tpu.memory_space<vmem>>, vector<1x96xf32>
    %c2 = arith.constant 2 : index
    %c0_14 = arith.constant 0 : index
    %12 = vector.load %arg5[%c2, %c0_14] : memref<17x96xf32, #tpu.memory_space<vmem>>, vector<1x32xf32>
    %c3 = arith.constant 3 : index
    %c0_15 = arith.constant 0 : index
    %13 = vector.load %arg5[%c3, %c0_15] : memref<17x96xf32, #tpu.memory_space<vmem>>, vector<1x64xf32>
    %c4 = arith.constant 4 : index
    %c0_16 = arith.constant 0 : index
    %14 = vector.load %arg5[%c4, %c0_16] : memref<17x96xf32, #tpu.memory_space<vmem>>, vector<1x32xf32>
    %c5 = arith.constant 5 : index
    %c0_17 = arith.constant 0 : index
    %15 = vector.load %arg5[%c5, %c0_17] : memref<17x96xf32, #tpu.memory_space<vmem>>, vector<1x32xf32>
    %c6 = arith.constant 6 : index
    %c0_18 = arith.constant 0 : index
    %16 = vector.load %arg5[%c6, %c0_18] : memref<17x96xf32, #tpu.memory_space<vmem>>, vector<1x32xf32>
    %c7 = arith.constant 7 : index
    %c0_19 = arith.constant 0 : index
    %17 = vector.load %arg5[%c7, %c0_19] : memref<17x96xf32, #tpu.memory_space<vmem>>, vector<1x32xf32>
    %c8 = arith.constant 8 : index
    %c0_20 = arith.constant 0 : index
    %18 = vector.load %arg5[%c8, %c0_20] : memref<17x96xf32, #tpu.memory_space<vmem>>, vector<1x32xf32>
    %cst_21 = arith.constant dense<0.000000e+00> : vector<16x96xf32>
    %19 = tpu.matmul %6, %7, %cst_21 {dimension_numbers = #tpu.dot_dimension_numbers<[1], [0], [0], [1], [0, 0, 1, 1], [], []>} : vector<16x32xf32>, vector<32x96xf32>, vector<16x96xf32> -> vector<16x96xf32>
    %20 = vector.broadcast %11 : vector<1x96xf32> to vector<16x96xf32>
    %21 = arith.addf %19, %20 : vector<16x96xf32>
    %22 = vector.extract_strided_slice %21 {offsets = [0, 0], sizes = [16, 8], strides = [1, 1]} : vector<16x96xf32> to vector<16x8xf32>
    %23 = vector.extract_strided_slice %21 {offsets = [0, 32], sizes = [16, 8], strides = [1, 1]} : vector<16x96xf32> to vector<16x8xf32>
    %24 = vector.extract_strided_slice %21 {offsets = [0, 64], sizes = [16, 8], strides = [1, 1]} : vector<16x96xf32> to vector<16x8xf32>
    %cst_22 = arith.constant dense<0.000000e+00> : vector<16x16xf32>
    %25 = tpu.matmul %22, %23, %cst_22 {dimension_numbers = #tpu.dot_dimension_numbers<[1], [1], [0], [0], [0, 0, 1, 0], [], []>} : vector<16x8xf32>, vector<16x8xf32>, vector<16x16xf32> -> vector<16x16xf32>
    %26 = arith.addf %25, %0 : vector<16x16xf32>
    %cst_23 = arith.constant dense<0xFF800000> : vector<16xf32>
    %27 = vector.multi_reduction <maximumf>, %26, %cst_23 [1] : vector<16x16xf32> to vector<16xf32>
    %28 = vector.shape_cast %27 : vector<16xf32> to vector<16x1xf32>
    %29 = vector.broadcast %28 : vector<16x1xf32> to vector<16x16xf32>
    %30 = arith.subf %26, %29 : vector<16x16xf32>
    %31 = math.exp %30 : vector<16x16xf32>
    %cst_24 = arith.constant dense<0.000000e+00> : vector<16xf32>
    %32 = vector.multi_reduction <add>, %31, %cst_24 [1] : vector<16x16xf32> to vector<16xf32>
    %33 = vector.shape_cast %32 : vector<16xf32> to vector<16x1xf32>
    %34 = tpu.reciprocal %33 {approx = true} : vector<16x1xf32> -> vector<16x1xf32>
    %35 = vector.broadcast %34 : vector<16x1xf32> to vector<16x16xf32>
    %36 = arith.mulf %31, %35 : vector<16x16xf32>
    %cst_25 = arith.constant dense<0.000000e+00> : vector<16x8xf32>
    %37 = tpu.matmul %36, %24, %cst_25 {dimension_numbers = #tpu.dot_dimension_numbers<[1], [0], [0], [1], [0, 0, 1, 1], [], []>} : vector<16x16xf32>, vector<16x8xf32>, vector<16x8xf32> -> vector<16x8xf32>
    %38 = vector.extract_strided_slice %21 {offsets = [0, 8], sizes = [16, 8], strides = [1, 1]} : vector<16x96xf32> to vector<16x8xf32>
    %39 = vector.extract_strided_slice %21 {offsets = [0, 40], sizes = [16, 8], strides = [1, 1]} : vector<16x96xf32> to vector<16x8xf32>
    %40 = vector.extract_strided_slice %21 {offsets = [0, 72], sizes = [16, 8], strides = [1, 1]} : vector<16x96xf32> to vector<16x8xf32>
    %cst_26 = arith.constant dense<0.000000e+00> : vector<16x16xf32>
    %41 = tpu.matmul %38, %39, %cst_26 {dimension_numbers = #tpu.dot_dimension_numbers<[1], [1], [0], [0], [0, 0, 1, 0], [], []>} : vector<16x8xf32>, vector<16x8xf32>, vector<16x16xf32> -> vector<16x16xf32>
    %42 = arith.addf %41, %0 : vector<16x16xf32>
    %cst_27 = arith.constant dense<0xFF800000> : vector<16xf32>
    %43 = vector.multi_reduction <maximumf>, %42, %cst_27 [1] : vector<16x16xf32> to vector<16xf32>
    %44 = vector.shape_cast %43 : vector<16xf32> to vector<16x1xf32>
    %45 = vector.broadcast %44 : vector<16x1xf32> to vector<16x16xf32>
    %46 = arith.subf %42, %45 : vector<16x16xf32>
    %47 = math.exp %46 : vector<16x16xf32>
    %cst_28 = arith.constant dense<0.000000e+00> : vector<16xf32>
    %48 = vector.multi_reduction <add>, %47, %cst_28 [1] : vector<16x16xf32> to vector<16xf32>
    %49 = vector.shape_cast %48 : vector<16xf32> to vector<16x1xf32>
    %50 = tpu.reciprocal %49 {approx = true} : vector<16x1xf32> -> vector<16x1xf32>
    %51 = vector.broadcast %50 : vector<16x1xf32> to vector<16x16xf32>
    %52 = arith.mulf %47, %51 : vector<16x16xf32>
    %cst_29 = arith.constant dense<0.000000e+00> : vector<16x8xf32>
    %53 = tpu.matmul %52, %40, %cst_29 {dimension_numbers = #tpu.dot_dimension_numbers<[1], [0], [0], [1], [0, 0, 1, 1], [], []>} : vector<16x16xf32>, vector<16x8xf32>, vector<16x8xf32> -> vector<16x8xf32>
    %54 = vector.extract_strided_slice %21 {offsets = [0, 16], sizes = [16, 8], strides = [1, 1]} : vector<16x96xf32> to vector<16x8xf32>
    %55 = vector.extract_strided_slice %21 {offsets = [0, 48], sizes = [16, 8], strides = [1, 1]} : vector<16x96xf32> to vector<16x8xf32>
    %56 = vector.extract_strided_slice %21 {offsets = [0, 80], sizes = [16, 8], strides = [1, 1]} : vector<16x96xf32> to vector<16x8xf32>
    %cst_30 = arith.constant dense<0.000000e+00> : vector<16x16xf32>
    %57 = tpu.matmul %54, %55, %cst_30 {dimension_numbers = #tpu.dot_dimension_numbers<[1], [1], [0], [0], [0, 0, 1, 0], [], []>} : vector<16x8xf32>, vector<16x8xf32>, vector<16x16xf32> -> vector<16x16xf32>
    %58 = arith.addf %57, %0 : vector<16x16xf32>
    %cst_31 = arith.constant dense<0xFF800000> : vector<16xf32>
    %59 = vector.multi_reduction <maximumf>, %58, %cst_31 [1] : vector<16x16xf32> to vector<16xf32>
    %60 = vector.shape_cast %59 : vector<16xf32> to vector<16x1xf32>
    %61 = vector.broadcast %60 : vector<16x1xf32> to vector<16x16xf32>
    %62 = arith.subf %58, %61 : vector<16x16xf32>
    %63 = math.exp %62 : vector<16x16xf32>
    %cst_32 = arith.constant dense<0.000000e+00> : vector<16xf32>
    %64 = vector.multi_reduction <add>, %63, %cst_32 [1] : vector<16x16xf32> to vector<16xf32>
    %65 = vector.shape_cast %64 : vector<16xf32> to vector<16x1xf32>
    %66 = tpu.reciprocal %65 {approx = true} : vector<16x1xf32> -> vector<16x1xf32>
    %67 = vector.broadcast %66 : vector<16x1xf32> to vector<16x16xf32>
    %68 = arith.mulf %63, %67 : vector<16x16xf32>
    %cst_33 = arith.constant dense<0.000000e+00> : vector<16x8xf32>
    %69 = tpu.matmul %68, %56, %cst_33 {dimension_numbers = #tpu.dot_dimension_numbers<[1], [0], [0], [1], [0, 0, 1, 1], [], []>} : vector<16x16xf32>, vector<16x8xf32>, vector<16x8xf32> -> vector<16x8xf32>
    %70 = vector.extract_strided_slice %21 {offsets = [0, 24], sizes = [16, 8], strides = [1, 1]} : vector<16x96xf32> to vector<16x8xf32>
    %71 = vector.extract_strided_slice %21 {offsets = [0, 56], sizes = [16, 8], strides = [1, 1]} : vector<16x96xf32> to vector<16x8xf32>
    %72 = vector.extract_strided_slice %21 {offsets = [0, 88], sizes = [16, 8], strides = [1, 1]} : vector<16x96xf32> to vector<16x8xf32>
    %cst_34 = arith.constant dense<0.000000e+00> : vector<16x16xf32>
    %73 = tpu.matmul %70, %71, %cst_34 {dimension_numbers = #tpu.dot_dimension_numbers<[1], [1], [0], [0], [0, 0, 1, 0], [], []>} : vector<16x8xf32>, vector<16x8xf32>, vector<16x16xf32> -> vector<16x16xf32>
    %74 = arith.addf %73, %0 : vector<16x16xf32>
    %cst_35 = arith.constant dense<0xFF800000> : vector<16xf32>
    %75 = vector.multi_reduction <maximumf>, %74, %cst_35 [1] : vector<16x16xf32> to vector<16xf32>
    %76 = vector.shape_cast %75 : vector<16xf32> to vector<16x1xf32>
    %77 = vector.broadcast %76 : vector<16x1xf32> to vector<16x16xf32>
    %78 = arith.subf %74, %77 : vector<16x16xf32>
    %79 = math.exp %78 : vector<16x16xf32>
    %cst_36 = arith.constant dense<0.000000e+00> : vector<16xf32>
    %80 = vector.multi_reduction <add>, %79, %cst_36 [1] : vector<16x16xf32> to vector<16xf32>
    %81 = vector.shape_cast %80 : vector<16xf32> to vector<16x1xf32>
    %82 = tpu.reciprocal %81 {approx = true} : vector<16x1xf32> -> vector<16x1xf32>
    %83 = vector.broadcast %82 : vector<16x1xf32> to vector<16x16xf32>
    %84 = arith.mulf %79, %83 : vector<16x16xf32>
    %cst_37 = arith.constant dense<0.000000e+00> : vector<16x8xf32>
    %85 = tpu.matmul %84, %72, %cst_37 {dimension_numbers = #tpu.dot_dimension_numbers<[1], [0], [0], [1], [0, 0, 1, 1], [], []>} : vector<16x16xf32>, vector<16x8xf32>, vector<16x8xf32> -> vector<16x8xf32>
    %86 = tpu.concatenate %37, %53, %69, %85 in 1 : vector<16x8xf32>, vector<16x8xf32>, vector<16x8xf32>, vector<16x8xf32> -> vector<16x32xf32>
    %cst_38 = arith.constant dense<0.000000e+00> : vector<16x32xf32>
    %87 = tpu.matmul %86, %8, %cst_38 {dimension_numbers = #tpu.dot_dimension_numbers<[1], [0], [0], [1], [0, 0, 1, 1], [], []>} : vector<16x32xf32>, vector<32x32xf32>, vector<16x32xf32> -> vector<16x32xf32>
    %88 = vector.broadcast %12 : vector<1x32xf32> to vector<16x32xf32>
    %89 = arith.addf %87, %88 : vector<16x32xf32>
    %90 = arith.addf %6, %89 : vector<16x32xf32>
    %cst_39 = arith.constant dense<0.000000e+00> : vector<16xf32>
    %91 = vector.multi_reduction <add>, %90, %cst_39 [1] : vector<16x32xf32> to vector<16xf32>
    %92 = vector.shape_cast %91 : vector<16xf32> to vector<16x1xf32>
    %cst_40 = arith.constant 3.200000e+01 : f32
    %93 = vector.broadcast %cst_40 : f32 to vector<16x1xf32>
    %94 = arith.divf %92, %93 : vector<16x1xf32>
    %95 = vector.broadcast %94 : vector<16x1xf32> to vector<16x32xf32>
    %96 = arith.subf %90, %95 : vector<16x32xf32>
    %97 = arith.mulf %96, %96 : vector<16x32xf32>
    %cst_41 = arith.constant dense<0.000000e+00> : vector<16xf32>
    %98 = vector.multi_reduction <add>, %97, %cst_41 [1] : vector<16x32xf32> to vector<16xf32>
    %99 = vector.shape_cast %98 : vector<16xf32> to vector<16x1xf32>
    %cst_42 = arith.constant 3.200000e+01 : f32
    %100 = vector.broadcast %cst_42 : f32 to vector<16x1xf32>
    %101 = arith.divf %99, %100 : vector<16x1xf32>
    %102 = vector.broadcast %94 : vector<16x1xf32> to vector<16x32xf32>
    %103 = arith.subf %90, %102 : vector<16x32xf32>
    %cst_43 = arith.constant 9.99999974E-6 : f32
    %104 = vector.broadcast %cst_43 : f32 to vector<16x1xf32>
    %105 = arith.addf %101, %104 : vector<16x1xf32>
    %106 = math.rsqrt %105 : vector<16x1xf32>
    %107 = vector.broadcast %106 : vector<16x1xf32> to vector<16x32xf32>
    %108 = arith.mulf %103, %107 : vector<16x32xf32>
    %109 = vector.broadcast %15 : vector<1x32xf32> to vector<16x32xf32>
    %110 = arith.mulf %108, %109 : vector<16x32xf32>
    %111 = vector.broadcast %16 : vector<1x32xf32> to vector<16x32xf32>
    %112 = arith.addf %110, %111 : vector<16x32xf32>
    %cst_44 = arith.constant dense<0.000000e+00> : vector<16x64xf32>
    %113 = tpu.matmul %112, %9, %cst_44 {dimension_numbers = #tpu.dot_dimension_numbers<[1], [0], [0], [1], [0, 0, 1, 1], [], []>} : vector<16x32xf32>, vector<32x64xf32>, vector<16x64xf32> -> vector<16x64xf32>
    %114 = vector.broadcast %13 : vector<1x64xf32> to vector<16x64xf32>
    %115 = arith.addf %113, %114 : vector<16x64xf32>
    %cst_45 = arith.constant 0.000000e+00 : f32
    %116 = vector.broadcast %cst_45 : f32 to vector<16x64xf32>
    %117 = arith.maximumf %115, %116 : vector<16x64xf32>
    %cst_46 = arith.constant dense<0.000000e+00> : vector<16x32xf32>
    %118 = tpu.matmul %117, %10, %cst_46 {dimension_numbers = #tpu.dot_dimension_numbers<[1], [0], [0], [1], [0, 0, 1, 1], [], []>} : vector<16x64xf32>, vector<64x32xf32>, vector<16x32xf32> -> vector<16x32xf32>
    %119 = vector.broadcast %14 : vector<1x32xf32> to vector<16x32xf32>
    %120 = arith.addf %118, %119 : vector<16x32xf32>
    %121 = arith.addf %112, %120 : vector<16x32xf32>
    %cst_47 = arith.constant dense<0.000000e+00> : vector<16xf32>
    %122 = vector.multi_reduction <add>, %121, %cst_47 [1] : vector<16x32xf32> to vector<16xf32>
    %123 = vector.shape_cast %122 : vector<16xf32> to vector<16x1xf32>
    %cst_48 = arith.constant 3.200000e+01 : f32
    %124 = vector.broadcast %cst_48 : f32 to vector<16x1xf32>
    %125 = arith.divf %123, %124 : vector<16x1xf32>
    %126 = vector.broadcast %125 : vector<16x1xf32> to vector<16x32xf32>
    %127 = arith.subf %121, %126 : vector<16x32xf32>
    %128 = arith.mulf %127, %127 : vector<16x32xf32>
    %cst_49 = arith.constant dense<0.000000e+00> : vector<16xf32>
    %129 = vector.multi_reduction <add>, %128, %cst_49 [1] : vector<16x32xf32> to vector<16xf32>
    %130 = vector.shape_cast %129 : vector<16xf32> to vector<16x1xf32>
    %cst_50 = arith.constant 3.200000e+01 : f32
    %131 = vector.broadcast %cst_50 : f32 to vector<16x1xf32>
    %132 = arith.divf %130, %131 : vector<16x1xf32>
    %133 = vector.broadcast %125 : vector<16x1xf32> to vector<16x32xf32>
    %134 = arith.subf %121, %133 : vector<16x32xf32>
    %cst_51 = arith.constant 9.99999974E-6 : f32
    %135 = vector.broadcast %cst_51 : f32 to vector<16x1xf32>
    %136 = arith.addf %132, %135 : vector<16x1xf32>
    %137 = math.rsqrt %136 : vector<16x1xf32>
    %138 = vector.broadcast %137 : vector<16x1xf32> to vector<16x32xf32>
    %139 = arith.mulf %134, %138 : vector<16x32xf32>
    %140 = vector.broadcast %17 : vector<1x32xf32> to vector<16x32xf32>
    %141 = arith.mulf %139, %140 : vector<16x32xf32>
    %142 = vector.broadcast %18 : vector<1x32xf32> to vector<16x32xf32>
    %143 = arith.addf %141, %142 : vector<16x32xf32>
    %c0_52 = arith.constant 0 : index
    %c192 = arith.constant 192 : index
    %144 = vector.load %arg3[%c0_52, %c192] : memref<32x384xf32, #tpu.memory_space<vmem>>, vector<32x96xf32>
    %c0_53 = arith.constant 0 : index
    %c288 = arith.constant 288 : index
    %145 = vector.load %arg3[%c0_53, %c288] : memref<32x384xf32, #tpu.memory_space<vmem>>, vector<32x32xf32>
    %c0_54 = arith.constant 0 : index
    %c320 = arith.constant 320 : index
    %146 = vector.load %arg3[%c0_54, %c320] : memref<32x384xf32, #tpu.memory_space<vmem>>, vector<32x64xf32>
    %c0_55 = arith.constant 0 : index
    %c32 = arith.constant 32 : index
    %147 = vector.load %arg4[%c0_55, %c32] : memref<64x64xf32, #tpu.memory_space<vmem>>, vector<64x32xf32>
    %c9 = arith.constant 9 : index
    %c0_56 = arith.constant 0 : index
    %148 = vector.load %arg5[%c9, %c0_56] : memref<17x96xf32, #tpu.memory_space<vmem>>, vector<1x96xf32>
    %c10 = arith.constant 10 : index
    %c0_57 = arith.constant 0 : index
    %149 = vector.load %arg5[%c10, %c0_57] : memref<17x96xf32, #tpu.memory_space<vmem>>, vector<1x32xf32>
    %c11 = arith.constant 11 : index
    %c0_58 = arith.constant 0 : index
    %150 = vector.load %arg5[%c11, %c0_58] : memref<17x96xf32, #tpu.memory_space<vmem>>, vector<1x64xf32>
    %c12 = arith.constant 12 : index
    %c0_59 = arith.constant 0 : index
    %151 = vector.load %arg5[%c12, %c0_59] : memref<17x96xf32, #tpu.memory_space<vmem>>, vector<1x32xf32>
    %c13 = arith.constant 13 : index
    %c0_60 = arith.constant 0 : index
    %152 = vector.load %arg5[%c13, %c0_60] : memref<17x96xf32, #tpu.memory_space<vmem>>, vector<1x32xf32>
    %c14 = arith.constant 14 : index
    %c0_61 = arith.constant 0 : index
    %153 = vector.load %arg5[%c14, %c0_61] : memref<17x96xf32, #tpu.memory_space<vmem>>, vector<1x32xf32>
    %c15 = arith.constant 15 : index
    %c0_62 = arith.constant 0 : index
    %154 = vector.load %arg5[%c15, %c0_62] : memref<17x96xf32, #tpu.memory_space<vmem>>, vector<1x32xf32>
    %c16 = arith.constant 16 : index
    %c0_63 = arith.constant 0 : index
    %155 = vector.load %arg5[%c16, %c0_63] : memref<17x96xf32, #tpu.memory_space<vmem>>, vector<1x32xf32>
    %cst_64 = arith.constant dense<0.000000e+00> : vector<16x96xf32>
    %156 = tpu.matmul %143, %144, %cst_64 {dimension_numbers = #tpu.dot_dimension_numbers<[1], [0], [0], [1], [0, 0, 1, 1], [], []>} : vector<16x32xf32>, vector<32x96xf32>, vector<16x96xf32> -> vector<16x96xf32>
    %157 = vector.broadcast %148 : vector<1x96xf32> to vector<16x96xf32>
    %158 = arith.addf %156, %157 : vector<16x96xf32>
    %159 = vector.extract_strided_slice %158 {offsets = [0, 0], sizes = [16, 8], strides = [1, 1]} : vector<16x96xf32> to vector<16x8xf32>
    %160 = vector.extract_strided_slice %158 {offsets = [0, 32], sizes = [16, 8], strides = [1, 1]} : vector<16x96xf32> to vector<16x8xf32>
    %161 = vector.extract_strided_slice %158 {offsets = [0, 64], sizes = [16, 8], strides = [1, 1]} : vector<16x96xf32> to vector<16x8xf32>
    %cst_65 = arith.constant dense<0.000000e+00> : vector<16x16xf32>
    %162 = tpu.matmul %159, %160, %cst_65 {dimension_numbers = #tpu.dot_dimension_numbers<[1], [1], [0], [0], [0, 0, 1, 0], [], []>} : vector<16x8xf32>, vector<16x8xf32>, vector<16x16xf32> -> vector<16x16xf32>
    %163 = arith.addf %162, %0 : vector<16x16xf32>
    %cst_66 = arith.constant dense<0xFF800000> : vector<16xf32>
    %164 = vector.multi_reduction <maximumf>, %163, %cst_66 [1] : vector<16x16xf32> to vector<16xf32>
    %165 = vector.shape_cast %164 : vector<16xf32> to vector<16x1xf32>
    %166 = vector.broadcast %165 : vector<16x1xf32> to vector<16x16xf32>
    %167 = arith.subf %163, %166 : vector<16x16xf32>
    %168 = math.exp %167 : vector<16x16xf32>
    %cst_67 = arith.constant dense<0.000000e+00> : vector<16xf32>
    %169 = vector.multi_reduction <add>, %168, %cst_67 [1] : vector<16x16xf32> to vector<16xf32>
    %170 = vector.shape_cast %169 : vector<16xf32> to vector<16x1xf32>
    %171 = tpu.reciprocal %170 {approx = true} : vector<16x1xf32> -> vector<16x1xf32>
    %172 = vector.broadcast %171 : vector<16x1xf32> to vector<16x16xf32>
    %173 = arith.mulf %168, %172 : vector<16x16xf32>
    %cst_68 = arith.constant dense<0.000000e+00> : vector<16x8xf32>
    %174 = tpu.matmul %173, %161, %cst_68 {dimension_numbers = #tpu.dot_dimension_numbers<[1], [0], [0], [1], [0, 0, 1, 1], [], []>} : vector<16x16xf32>, vector<16x8xf32>, vector<16x8xf32> -> vector<16x8xf32>
    %175 = vector.extract_strided_slice %158 {offsets = [0, 8], sizes = [16, 8], strides = [1, 1]} : vector<16x96xf32> to vector<16x8xf32>
    %176 = vector.extract_strided_slice %158 {offsets = [0, 40], sizes = [16, 8], strides = [1, 1]} : vector<16x96xf32> to vector<16x8xf32>
    %177 = vector.extract_strided_slice %158 {offsets = [0, 72], sizes = [16, 8], strides = [1, 1]} : vector<16x96xf32> to vector<16x8xf32>
    %cst_69 = arith.constant dense<0.000000e+00> : vector<16x16xf32>
    %178 = tpu.matmul %175, %176, %cst_69 {dimension_numbers = #tpu.dot_dimension_numbers<[1], [1], [0], [0], [0, 0, 1, 0], [], []>} : vector<16x8xf32>, vector<16x8xf32>, vector<16x16xf32> -> vector<16x16xf32>
    %179 = arith.addf %178, %0 : vector<16x16xf32>
    %cst_70 = arith.constant dense<0xFF800000> : vector<16xf32>
    %180 = vector.multi_reduction <maximumf>, %179, %cst_70 [1] : vector<16x16xf32> to vector<16xf32>
    %181 = vector.shape_cast %180 : vector<16xf32> to vector<16x1xf32>
    %182 = vector.broadcast %181 : vector<16x1xf32> to vector<16x16xf32>
    %183 = arith.subf %179, %182 : vector<16x16xf32>
    %184 = math.exp %183 : vector<16x16xf32>
    %cst_71 = arith.constant dense<0.000000e+00> : vector<16xf32>
    %185 = vector.multi_reduction <add>, %184, %cst_71 [1] : vector<16x16xf32> to vector<16xf32>
    %186 = vector.shape_cast %185 : vector<16xf32> to vector<16x1xf32>
    %187 = tpu.reciprocal %186 {approx = true} : vector<16x1xf32> -> vector<16x1xf32>
    %188 = vector.broadcast %187 : vector<16x1xf32> to vector<16x16xf32>
    %189 = arith.mulf %184, %188 : vector<16x16xf32>
    %cst_72 = arith.constant dense<0.000000e+00> : vector<16x8xf32>
    %190 = tpu.matmul %189, %177, %cst_72 {dimension_numbers = #tpu.dot_dimension_numbers<[1], [0], [0], [1], [0, 0, 1, 1], [], []>} : vector<16x16xf32>, vector<16x8xf32>, vector<16x8xf32> -> vector<16x8xf32>
    %191 = vector.extract_strided_slice %158 {offsets = [0, 16], sizes = [16, 8], strides = [1, 1]} : vector<16x96xf32> to vector<16x8xf32>
    %192 = vector.extract_strided_slice %158 {offsets = [0, 48], sizes = [16, 8], strides = [1, 1]} : vector<16x96xf32> to vector<16x8xf32>
    %193 = vector.extract_strided_slice %158 {offsets = [0, 80], sizes = [16, 8], strides = [1, 1]} : vector<16x96xf32> to vector<16x8xf32>
    %cst_73 = arith.constant dense<0.000000e+00> : vector<16x16xf32>
    %194 = tpu.matmul %191, %192, %cst_73 {dimension_numbers = #tpu.dot_dimension_numbers<[1], [1], [0], [0], [0, 0, 1, 0], [], []>} : vector<16x8xf32>, vector<16x8xf32>, vector<16x16xf32> -> vector<16x16xf32>
    %195 = arith.addf %194, %0 : vector<16x16xf32>
    %cst_74 = arith.constant dense<0xFF800000> : vector<16xf32>
    %196 = vector.multi_reduction <maximumf>, %195, %cst_74 [1] : vector<16x16xf32> to vector<16xf32>
    %197 = vector.shape_cast %196 : vector<16xf32> to vector<16x1xf32>
    %198 = vector.broadcast %197 : vector<16x1xf32> to vector<16x16xf32>
    %199 = arith.subf %195, %198 : vector<16x16xf32>
    %200 = math.exp %199 : vector<16x16xf32>
    %cst_75 = arith.constant dense<0.000000e+00> : vector<16xf32>
    %201 = vector.multi_reduction <add>, %200, %cst_75 [1] : vector<16x16xf32> to vector<16xf32>
    %202 = vector.shape_cast %201 : vector<16xf32> to vector<16x1xf32>
    %203 = tpu.reciprocal %202 {approx = true} : vector<16x1xf32> -> vector<16x1xf32>
    %204 = vector.broadcast %203 : vector<16x1xf32> to vector<16x16xf32>
    %205 = arith.mulf %200, %204 : vector<16x16xf32>
    %cst_76 = arith.constant dense<0.000000e+00> : vector<16x8xf32>
    %206 = tpu.matmul %205, %193, %cst_76 {dimension_numbers = #tpu.dot_dimension_numbers<[1], [0], [0], [1], [0, 0, 1, 1], [], []>} : vector<16x16xf32>, vector<16x8xf32>, vector<16x8xf32> -> vector<16x8xf32>
    %207 = vector.extract_strided_slice %158 {offsets = [0, 24], sizes = [16, 8], strides = [1, 1]} : vector<16x96xf32> to vector<16x8xf32>
    %208 = vector.extract_strided_slice %158 {offsets = [0, 56], sizes = [16, 8], strides = [1, 1]} : vector<16x96xf32> to vector<16x8xf32>
    %209 = vector.extract_strided_slice %158 {offsets = [0, 88], sizes = [16, 8], strides = [1, 1]} : vector<16x96xf32> to vector<16x8xf32>
    %cst_77 = arith.constant dense<0.000000e+00> : vector<16x16xf32>
    %210 = tpu.matmul %207, %208, %cst_77 {dimension_numbers = #tpu.dot_dimension_numbers<[1], [1], [0], [0], [0, 0, 1, 0], [], []>} : vector<16x8xf32>, vector<16x8xf32>, vector<16x16xf32> -> vector<16x16xf32>
    %211 = arith.addf %210, %0 : vector<16x16xf32>
    %cst_78 = arith.constant dense<0xFF800000> : vector<16xf32>
    %212 = vector.multi_reduction <maximumf>, %211, %cst_78 [1] : vector<16x16xf32> to vector<16xf32>
    %213 = vector.shape_cast %212 : vector<16xf32> to vector<16x1xf32>
    %214 = vector.broadcast %213 : vector<16x1xf32> to vector<16x16xf32>
    %215 = arith.subf %211, %214 : vector<16x16xf32>
    %216 = math.exp %215 : vector<16x16xf32>
    %cst_79 = arith.constant dense<0.000000e+00> : vector<16xf32>
    %217 = vector.multi_reduction <add>, %216, %cst_79 [1] : vector<16x16xf32> to vector<16xf32>
    %218 = vector.shape_cast %217 : vector<16xf32> to vector<16x1xf32>
    %219 = tpu.reciprocal %218 {approx = true} : vector<16x1xf32> -> vector<16x1xf32>
    %220 = vector.broadcast %219 : vector<16x1xf32> to vector<16x16xf32>
    %221 = arith.mulf %216, %220 : vector<16x16xf32>
    %cst_80 = arith.constant dense<0.000000e+00> : vector<16x8xf32>
    %222 = tpu.matmul %221, %209, %cst_80 {dimension_numbers = #tpu.dot_dimension_numbers<[1], [0], [0], [1], [0, 0, 1, 1], [], []>} : vector<16x16xf32>, vector<16x8xf32>, vector<16x8xf32> -> vector<16x8xf32>
    %223 = tpu.concatenate %174, %190, %206, %222 in 1 : vector<16x8xf32>, vector<16x8xf32>, vector<16x8xf32>, vector<16x8xf32> -> vector<16x32xf32>
    %cst_81 = arith.constant dense<0.000000e+00> : vector<16x32xf32>
    %224 = tpu.matmul %223, %145, %cst_81 {dimension_numbers = #tpu.dot_dimension_numbers<[1], [0], [0], [1], [0, 0, 1, 1], [], []>} : vector<16x32xf32>, vector<32x32xf32>, vector<16x32xf32> -> vector<16x32xf32>
    %225 = vector.broadcast %149 : vector<1x32xf32> to vector<16x32xf32>
    %226 = arith.addf %224, %225 : vector<16x32xf32>
    %227 = arith.addf %143, %226 : vector<16x32xf32>
    %cst_82 = arith.constant dense<0.000000e+00> : vector<16xf32>
    %228 = vector.multi_reduction <add>, %227, %cst_82 [1] : vector<16x32xf32> to vector<16xf32>
    %229 = vector.shape_cast %228 : vector<16xf32> to vector<16x1xf32>
    %cst_83 = arith.constant 3.200000e+01 : f32
    %230 = vector.broadcast %cst_83 : f32 to vector<16x1xf32>
    %231 = arith.divf %229, %230 : vector<16x1xf32>
    %232 = vector.broadcast %231 : vector<16x1xf32> to vector<16x32xf32>
    %233 = arith.subf %227, %232 : vector<16x32xf32>
    %234 = arith.mulf %233, %233 : vector<16x32xf32>
    %cst_84 = arith.constant dense<0.000000e+00> : vector<16xf32>
    %235 = vector.multi_reduction <add>, %234, %cst_84 [1] : vector<16x32xf32> to vector<16xf32>
    %236 = vector.shape_cast %235 : vector<16xf32> to vector<16x1xf32>
    %cst_85 = arith.constant 3.200000e+01 : f32
    %237 = vector.broadcast %cst_85 : f32 to vector<16x1xf32>
    %238 = arith.divf %236, %237 : vector<16x1xf32>
    %239 = vector.broadcast %231 : vector<16x1xf32> to vector<16x32xf32>
    %240 = arith.subf %227, %239 : vector<16x32xf32>
    %cst_86 = arith.constant 9.99999974E-6 : f32
    %241 = vector.broadcast %cst_86 : f32 to vector<16x1xf32>
    %242 = arith.addf %238, %241 : vector<16x1xf32>
    %243 = math.rsqrt %242 : vector<16x1xf32>
    %244 = vector.broadcast %243 : vector<16x1xf32> to vector<16x32xf32>
    %245 = arith.mulf %240, %244 : vector<16x32xf32>
    %246 = vector.broadcast %152 : vector<1x32xf32> to vector<16x32xf32>
    %247 = arith.mulf %245, %246 : vector<16x32xf32>
    %248 = vector.broadcast %153 : vector<1x32xf32> to vector<16x32xf32>
    %249 = arith.addf %247, %248 : vector<16x32xf32>
    %cst_87 = arith.constant dense<0.000000e+00> : vector<16x64xf32>
    %250 = tpu.matmul %249, %146, %cst_87 {dimension_numbers = #tpu.dot_dimension_numbers<[1], [0], [0], [1], [0, 0, 1, 1], [], []>} : vector<16x32xf32>, vector<32x64xf32>, vector<16x64xf32> -> vector<16x64xf32>
    %251 = vector.broadcast %150 : vector<1x64xf32> to vector<16x64xf32>
    %252 = arith.addf %250, %251 : vector<16x64xf32>
    %cst_88 = arith.constant 0.000000e+00 : f32
    %253 = vector.broadcast %cst_88 : f32 to vector<16x64xf32>
    %254 = arith.maximumf %252, %253 : vector<16x64xf32>
    %cst_89 = arith.constant dense<0.000000e+00> : vector<16x32xf32>
    %255 = tpu.matmul %254, %147, %cst_89 {dimension_numbers = #tpu.dot_dimension_numbers<[1], [0], [0], [1], [0, 0, 1, 1], [], []>} : vector<16x64xf32>, vector<64x32xf32>, vector<16x32xf32> -> vector<16x32xf32>
    %256 = vector.broadcast %151 : vector<1x32xf32> to vector<16x32xf32>
    %257 = arith.addf %255, %256 : vector<16x32xf32>
    %258 = arith.addf %249, %257 : vector<16x32xf32>
    %cst_90 = arith.constant dense<0.000000e+00> : vector<16xf32>
    %259 = vector.multi_reduction <add>, %258, %cst_90 [1] : vector<16x32xf32> to vector<16xf32>
    %260 = vector.shape_cast %259 : vector<16xf32> to vector<16x1xf32>
    %cst_91 = arith.constant 3.200000e+01 : f32
    %261 = vector.broadcast %cst_91 : f32 to vector<16x1xf32>
    %262 = arith.divf %260, %261 : vector<16x1xf32>
    %263 = vector.broadcast %262 : vector<16x1xf32> to vector<16x32xf32>
    %264 = arith.subf %258, %263 : vector<16x32xf32>
    %265 = arith.mulf %264, %264 : vector<16x32xf32>
    %cst_92 = arith.constant dense<0.000000e+00> : vector<16xf32>
    %266 = vector.multi_reduction <add>, %265, %cst_92 [1] : vector<16x32xf32> to vector<16xf32>
    %267 = vector.shape_cast %266 : vector<16xf32> to vector<16x1xf32>
    %cst_93 = arith.constant 3.200000e+01 : f32
    %268 = vector.broadcast %cst_93 : f32 to vector<16x1xf32>
    %269 = arith.divf %267, %268 : vector<16x1xf32>
    %270 = vector.broadcast %262 : vector<16x1xf32> to vector<16x32xf32>
    %271 = arith.subf %258, %270 : vector<16x32xf32>
    %cst_94 = arith.constant 9.99999974E-6 : f32
    %272 = vector.broadcast %cst_94 : f32 to vector<16x1xf32>
    %273 = arith.addf %269, %272 : vector<16x1xf32>
    %274 = math.rsqrt %273 : vector<16x1xf32>
    %275 = vector.broadcast %274 : vector<16x1xf32> to vector<16x32xf32>
    %276 = arith.mulf %271, %275 : vector<16x32xf32>
    %277 = vector.broadcast %154 : vector<1x32xf32> to vector<16x32xf32>
    %278 = arith.mulf %276, %277 : vector<16x32xf32>
    %279 = vector.broadcast %155 : vector<1x32xf32> to vector<16x32xf32>
    %280 = arith.addf %278, %279 : vector<16x32xf32>
    %c0_95 = arith.constant 0 : index
    %c0_96 = arith.constant 0 : index
    %281 = vector.load %arg6[%c0_95, %c0_96] : memref<16x32xf32, #tpu.memory_space<vmem>>, vector<16x32xf32>
    tpu.vector_store %arg6[%c0_95, %c0_96], %280 {strides = array<i32>} : memref<16x32xf32, #tpu.memory_space<vmem>>, vector<16x32xf32>,
    return
  }
}

</mosaic_0001>

<llo_original>
// kernel: internal_temporal_relation_forward.1
$region0: #{internal_temporal_relation_forward.1}
  #allocation0 [shape = 'u32[]', space=smem, size = 0x4, offset = 0x4, fixed_abs, tag = 'smem constant byte address 0x4 - core index']
  #allocation1 [shape = 'u32[144,128]{1,0:T(1,128)}', space=vmem, size = 0x12000, scoped, tag = 'internal scratch']
  %s0 = inlined_call_operand.hbm [shape: f32[16,64], index: 0, kind: input, shape index: {}]
  %s1 = inlined_call_operand.vmem [shape: f32[16,16], index: 1, kind: input, shape index: {}]
  %s2 = inlined_call_operand.vmem [shape: f32[64,32], index: 2, kind: input, shape index: {}]
  %s3 = inlined_call_operand.vmem [shape: f32[32,384], index: 3, kind: input, shape index: {}]
  %s4 = inlined_call_operand.hbm [shape: f32[64,64], index: 4, kind: input, shape index: {}]
  %s5 = inlined_call_operand.hbm [shape: f32[17,96], index: 5, kind: input, shape index: {}]
  %s6 = inlined_call_operand.hbm [shape: f32[16,32], index: 6, kind: output, shape index: {}]
  %s7 = sld [smem:[#allocation0]]
  $region46: #{internal_temporal_relation_forward.1} parent=0
    _
  %s9 = ssub.s32 1, %s7
  %s10 = scalar_select 0, %s9, %s7
  $region1: #{internal_temporal_relation_forward.1} parent=0
    #allocation2 [shape = 'u8[8192]{0}', space=vmem, size = 0x2000, scoped, tag = 'input window, operand 0, single buffered']
    #allocation3 [shape = 's32[1]{0}', space=sflag, size = 0x4, scoped, tag = 'scoped memory for internal_temporal_relation_forward.1']
    #allocation4 [shape = 's32[1]{0}', space=sflag, size = 0x4, scoped, tag = 'scoped memory for internal_temporal_relation_forward.1']
    #allocation5 [shape = 'u8[32768]{0}', space=vmem, size = 0x8000, scoped, tag = 'input window, operand 4, single buffered']
    #allocation6 [shape = 's32[1]{0}', space=sflag, size = 0x4, scoped, tag = 'scoped memory for internal_temporal_relation_forward.1']
    #allocation7 [shape = 'u8[12288]{0}', space=vmem, size = 0x3000, scoped, tag = 'input window, operand 5, single buffered']
    #allocation8 [shape = 'u8[8192]{0}', space=vmem, size = 0x2000, scoped, tag = 'output window, operand 0, single buffered']
    %11 = vsyncpa [#allocation3], 0
    %12 = vsyncpa [#allocation6], 0
    %13 = vsyncpa [#allocation4], 0
    // Predicated region
    $region2: #{internal_temporal_relation_forward.1} parent=1 // pred_check
      _
    $region3: #{internal_temporal_relation_forward.1} parent=1 // pred_check_branch
      %15 = sbr.rel (0) target = $region5
    $region4: #{internal_temporal_relation_forward.1} parent=1 // pred_region
      %s17 = ssub.s32 256, 256
      %18 = vsyncadd [#allocation3], %s17
      %s19 = sshll.u32 [#allocation2], 4
      %s20 = int_to_ptr.vmem [resolvable:$true] %s19
      %25 = dma.hbm_to_vmem [thread:$0]  %s0, 256, %s20, [#allocation3], 128, 128, 8
    $region5: #{internal_temporal_relation_forward.1} parent=1 // pred_fallthru
      _
    // Predicated region
    $region6: #{internal_temporal_relation_forward.1} parent=1 // pred_check
      _
    $region7: #{internal_temporal_relation_forward.1} parent=1 // pred_check_branch
      %27 = sbr.rel (0) target = $region9
    $region8: #{internal_temporal_relation_forward.1} parent=1 // pred_region
      _
    $region9: #{internal_temporal_relation_forward.1} parent=1 // pred_fallthru
      _
    // Predicated region
    $region10: #{internal_temporal_relation_forward.1} parent=1 // pred_check
      _
    $region11: #{internal_temporal_relation_forward.1} parent=1 // pred_check_branch
      %29 = sbr.rel (0) target = $region13
    $region12: #{internal_temporal_relation_forward.1} parent=1 // pred_region
      _
    $region13: #{internal_temporal_relation_forward.1} parent=1 // pred_fallthru
      _
    // Predicated region
    $region14: #{internal_temporal_relation_forward.1} parent=1 // pred_check
      _
    $region15: #{internal_temporal_relation_forward.1} parent=1 // pred_check_branch
      %31 = sbr.rel (0) target = $region17
    $region16: #{internal_temporal_relation_forward.1} parent=1 // pred_region
      _
    $region17: #{internal_temporal_relation_forward.1} parent=1 // pred_fallthru
      _
    // Predicated region
    $region18: #{internal_temporal_relation_forward.1} parent=1 // pred_check
      _
    $region19: #{internal_temporal_relation_forward.1} parent=1 // pred_check_branch
      %33 = sbr.rel (0) target = $region21
    $region20: #{internal_temporal_relation_forward.1} parent=1 // pred_region
      %s35 = ssub.s32 1024, 1024
      %36 = vsyncadd [#allocation6], %s35
      %s37 = sshll.u32 [#allocation5], 4
      %s38 = int_to_ptr.vmem [resolvable:$true] %s37
      %43 = dma.hbm_to_vmem [thread:$0]  %s4, 1024, %s38, [#allocation6], 128, 128, 8
    $region21: #{internal_temporal_relation_forward.1} parent=1 // pred_fallthru
      _
    // Predicated region
    $region22: #{internal_temporal_relation_forward.1} parent=1 // pred_check
      _
    $region23: #{internal_temporal_relation_forward.1} parent=1 // pred_check_branch
      %45 = sbr.rel (0) target = $region25
    $region24: #{internal_temporal_relation_forward.1} parent=1 // pred_region
      %s47 = ssub.s32 384, 384
      %48 = vsyncadd [#allocation6], %s47
      %s49 = sshll.u32 [#allocation7], 4
      %s50 = int_to_ptr.vmem [resolvable:$true] %s49
      %55 = dma.hbm_to_vmem [thread:$0]  %s5, 384, %s50, [#allocation6], 128, 128, 8
    $region25: #{internal_temporal_relation_forward.1} parent=1 // pred_fallthru
      _
    // Predicated region
    $region26: #{internal_temporal_relation_forward.1} parent=1 // pred_check
      _
    $region27: #{internal_temporal_relation_forward.1} parent=1 // pred_check_branch
      %57 = sbr.rel (0) target = $region29
    $region28: #{internal_temporal_relation_forward.1} parent=1 // pred_region
      %58 = dma.done [#allocation3], 256
    $region29: #{internal_temporal_relation_forward.1} parent=1 // pred_fallthru
      _
    // Predicated region
    $region30: #{internal_temporal_relation_forward.1} parent=1 // pred_check
      _
    $region31: #{internal_temporal_relation_forward.1} parent=1 // pred_check_branch
      %60 = sbr.rel (0) target = $region33
    $region32: #{internal_temporal_relation_forward.1} parent=1 // pred_region
      %61 = dma.done [#allocation6], 1024
    $region33: #{internal_temporal_relation_forward.1} parent=1 // pred_fallthru
      _
    // Predicated region
    $region34: #{internal_temporal_relation_forward.1} parent=1 // pred_check
      _
    $region35: #{internal_temporal_relation_forward.1} parent=1 // pred_check_branch
      %63 = sbr.rel (0) target = $region37
    $region36: #{internal_temporal_relation_forward.1} parent=1 // pred_region
      %64 = dma.done [#allocation6], 384
    $region37: #{internal_temporal_relation_forward.1} parent=1 // pred_fallthru
      _
    %v65 = vld [vmem:[%s1] sm:$0xff]
    %v66 = vld [vmem:[%s1 + $0x8] sm:$0xff]
    %v67 = vld [vmem:[#allocation2] sm:$0xff]
    %v68 = vld [vmem:[#allocation2 + $0x8] sm:$0xff]
    %v69 = vld [vmem:[%s2] sm:$0xff]
    %v70 = vld [vmem:[%s2 + $0x8] sm:$0xff]
    %v71 = vld [vmem:[%s2 + $0x10] sm:$0xff]
    %v72 = vld [vmem:[%s2 + $0x18] sm:$0xff]
    %v73 = vld [vmem:[%s2 + $0x20] sm:$0xff]
    %v74 = vld [vmem:[%s2 + $0x28] sm:$0xff]
    %v75 = vld [vmem:[%s2 + $0x30] sm:$0xff]
    %v76 = vld [vmem:[%s2 + $0x38] sm:$0xff]
    %v77 = vld [vmem:[#allocation7] sm:$0x1]
    %v78 = vlaneseq
    %v79 = vshrl.u32 %v78, 7
    %v80 = vsub.s32 0, %v79
    %v81 = vrot.slane %v77, %v80
    %vm82 = vcmask 523264
    %v84 = vsel %vm82, %v67, 0
    %v87 = vsel %vm82, %v68, 0
    %89 = vmatprep.subr.mxu0 0.0
    %90 = vmatpush1.msra.mxu0 %v69
    %91 = vmatprep.subr.mxu0 0.0
    %92 = vmatpush1.msra.mxu0 %v70
    %93 = vmatprep.subr.mxu0 0.0
    %94 = vmatpush1.msra.mxu0 %v71
    %95 = vmatprep.subr.mxu0 0.0
    %96 = vmatpush1.msra.mxu0 %v72
    %97 = vmatprep.subr.mxu0 0.0
    %98 = vmatpush1.msra.mxu0 %v73
    %99 = vmatprep.subr.mxu0 0.0
    %100 = vmatpush1.msra.mxu0 %v74
    %101 = vmatprep.subr.mxu0 0.0
    %102 = vmatpush1.msra.mxu0 %v75
    %103 = vmatprep.subr.mxu0 0.0
    %104 = vmatpush1.msra.mxu0 %v76
    %105 = vmatprep.subr.mxu0 0.0
    %106 = vmatpush1.msra.mxu0 0.0
    %107 = vmatprep.subr.mxu0 0.0
    %108 = vmatpush1.msra.mxu0 0.0
    %109 = vmatprep.subr.mxu0 0.0
    %110 = vmatpush1.msra.mxu0 0.0
    %111 = vmatprep.subr.mxu0 0.0
    %112 = vmatpush1.msra.mxu0 0.0
    %113 = vmatprep.subr.mxu0 0.0
    %114 = vmatpush1.msra.mxu0 0.0
    %115 = vmatprep.subr.mxu0 0.0
    %116 = vmatpush1.msra.mxu0 0.0
    %117 = vmatprep.subr.mxu0 0.0
    %118 = vmatpush1.msra.mxu0 0.0
    %119 = vmatprep.subr.mxu0 0.0
    %120 = vmatpush1.msra.mxu0 0.0
    %121 = vmatprep.subr.mxu0 0.0
    %122 = vmatpush1.msra.mxu0 0.0
    %123 = vmatprep.subr.mxu0 0.0
    %124 = vmatpush1.msra.mxu0 0.0
    %125 = vmatprep.subr.mxu0 0.0
    %126 = vmatpush1.msra.mxu0 0.0
    %127 = vmatprep.subr.mxu0 0.0
    %128 = vmatpush1.msra.mxu0 0.0
    %129 = vmatprep.subr.mxu0 0.0
    %130 = vmatpush1.msra.mxu0 0.0
    %131 = vmatprep.subr.mxu0 0.0
    %132 = vmatpush1.msra.mxu0 0.0
    %133 = vmatprep.subr.mxu0 0.0
    %134 = vmatpush1.msra.mxu0 0.0
    %135 = vmatprep.subr.mxu0 0.0
    %136 = vmatpush1.msra.mxu0 0.0
    %137 = vmatprep.subr.mxu0 0.0
    %138 = vmatpush1.msra.mxu0 0.0
    %139 = vmatprep.subr.mxu0 0.0
    %140 = vmatpush1.msra.mxu0 0.0
    %141 = vmatprep.subr.mxu0 0.0
    %142 = vmatpush1.msra.mxu0 0.0
    %143 = vmatprep.subr.mxu0 0.0
    %144 = vmatpush1.msra.mxu0 0.0
    %145 = vmatprep.subr.mxu0 0.0
    %146 = vmatpush1.msra.mxu0 0.0
    %147 = vmatprep.subr.mxu0 0.0
    %148 = vmatpush1.msra.mxu0 0.0
    %149 = vmatprep.subr.mxu0 0.0
    %150 = vmatpush1.msra.mxu0 0.0
    %151 = vmatprep.subr.mxu0 0.0
    %152 = vmatpush1.msra.mxu0 0.0
    %153 = vmatprep.mubr.f32.mxu0 0.0
    %154 = vmatmul.mubr.f32.gmra.mrb[0].mxu0 %v84
    %v155 = vpop.f32.mrb[0].mxu0
    %v156 = vadd.f32 %v81, %v155
    %v157 = vpop.f32.mrb[0].mxu0
    %158 = vmatprep.mubr.f32.mxu0 0.0
    %159 = vmatmul.mubr.f32.gmra.mrb[0].mxu0 %v87
    %v160 = vpop.f32.mrb[0].mxu0
    %v161 = vadd.f32 %v81, %v160
    %v162 = vpop.f32.mrb[0].mxu0
    %163 = vdwg.mxu0
    %v164 = vld [vmem:[%s3] sm:$0xff]
    %v165 = vld [vmem:[%s3 + $0x18] sm:$0xff]
    %v166 = vld [vmem:[%s3 + $0x30] sm:$0xff]
    %v167 = vld [vmem:[%s3 + $0x48] sm:$0xff]
    %v168 = vld [vmem:[%s3 + $0x8] sm:$0xff]
    %v169 = vld [vmem:[%s3 + $0x20] sm:$0xff]
    %v170 = vld [vmem:[%s3 + $0x38] sm:$0xff]
    %v171 = vld [vmem:[%s3 + $0x50] sm:$0xff]
    %v172 = vld [vmem:[#allocation5] sm:$0xff]
    %v173 = vld [vmem:[#allocation5 + $0x8] sm:$0xff]
    %v174 = vld [vmem:[#allocation5 + $0x10] sm:$0xff]
    %v175 = vld [vmem:[#allocation5 + $0x18] sm:$0xff]
    %v176 = vld [vmem:[#allocation5 + $0x20] sm:$0xff]
    %v177 = vld [vmem:[#allocation5 + $0x28] sm:$0xff]
    %v178 = vld [vmem:[#allocation5 + $0x30] sm:$0xff]
    %v179 = vld [vmem:[#allocation5 + $0x38] sm:$0xff]
    %v180 = vld [vmem:[#allocation7 + $0x1] sm:$0x1]
    %v181 = vld [vmem:[#allocation7 + $0x2] sm:$0x1]
    %v182 = vld [vmem:[#allocation7 + $0x3] sm:$0x1]
    %v183 = vld [vmem:[#allocation7 + $0x4] sm:$0x1]
    %v184 = vld [vmem:[#allocation7 + $0x5] sm:$0x1]
    %v185 = vld [vmem:[#allocation7 + $0x6] sm:$0x1]
    %v186 = vld [vmem:[#allocation7 + $0x7] sm:$0x1]
    %v187 = vld [vmem:[#allocation7 + $0x8] sm:$0x1]
    %v188 = vlaneseq
    %v189 = vshrl.u32 %v188, 7
    %v190 = vsub.s32 0, %v189
    %v191 = vrot.slane %v180, %v190
    %vm192 = vcmask 261120
    %v194 = vsel %vm192, %v156, 0
    %v197 = vsel %vm192, %v161, 0
    %199 = vmatprep.subr.mxu0 0.0
    %200 = vmatpush1.msra.mxu0 %v164
    %201 = vmatprep.subr.mxu0 0.0
    %202 = vmatpush1.msra.mxu0 %v165
    %203 = vmatprep.subr.mxu0 0.0
    %204 = vmatpush1.msra.mxu0 %v166
    %205 = vmatprep.subr.mxu0 0.0
    %206 = vmatpush1.msra.mxu0 %v167
    %207 = vmatprep.subr.mxu0 0.0
    %208 = vmatpush1.msra.mxu0 0.0
    %209 = vmatprep.subr.mxu0 0.0
    %210 = vmatpush1.msra.mxu0 0.0
    %211 = vmatprep.subr.mxu0 0.0
    %212 = vmatpush1.msra.mxu0 0.0
    %213 = vmatprep.subr.mxu0 0.0
    %214 = vmatpush1.msra.mxu0 0.0
    %215 = vmatprep.subr.mxu0 0.0
    %216 = vmatpush1.msra.mxu0 0.0
    %217 = vmatprep.subr.mxu0 0.0
    %218 = vmatpush1.msra.mxu0 0.0
    %219 = vmatprep.subr.mxu0 0.0
    %220 = vmatpush1.msra.mxu0 0.0
    %221 = vmatprep.subr.mxu0 0.0
    %222 = vmatpush1.msra.mxu0 0.0
    %223 = vmatprep.subr.mxu0 0.0
    %224 = vmatpush1.msra.mxu0 0.0
    %225 = vmatprep.subr.mxu0 0.0
    %226 = vmatpush1.msra.mxu0 0.0
    %227 = vmatprep.subr.mxu0 0.0
    %228 = vmatpush1.msra.mxu0 0.0
    %229 = vmatprep.subr.mxu0 0.0
    %230 = vmatpush1.msra.mxu0 0.0
    %231 = vmatprep.subr.mxu0 0.0
    %232 = vmatpush1.msra.mxu0 0.0
    %233 = vmatprep.subr.mxu0 0.0
    %234 = vmatpush1.msra.mxu0 0.0
    %235 = vmatprep.subr.mxu0 0.0
    %236 = vmatpush1.msra.mxu0 0.0
    %237 = vmatprep.subr.mxu0 0.0
    %238 = vmatpush1.msra.mxu0 0.0
    %239 = vmatprep.subr.mxu0 0.0
    %240 = vmatpush1.msra.mxu0 0.0
    %241 = vmatprep.subr.mxu0 0.0
    %242 = vmatpush1.msra.mxu0 0.0
    %243 = vmatprep.subr.mxu0 0.0
    %244 = vmatpush1.msra.mxu0 0.0
    %245 = vmatprep.subr.mxu0 0.0
    %246 = vmatpush1.msra.mxu0 0.0
    %247 = vmatprep.subr.mxu0 0.0
    %248 = vmatpush1.msra.mxu0 0.0
    %249 = vmatprep.subr.mxu0 0.0
    %250 = vmatpush1.msra.mxu0 0.0
    %251 = vmatprep.subr.mxu0 0.0
    %252 = vmatpush1.msra.mxu0 0.0
    %253 = vmatprep.subr.mxu0 0.0
    %254 = vmatpush1.msra.mxu0 0.0
    %255 = vmatprep.subr.mxu0 0.0
    %256 = vmatpush1.msra.mxu0 0.0
    %257 = vmatprep.subr.mxu0 0.0
    %258 = vmatpush1.msra.mxu0 0.0
    %259 = vmatprep.subr.mxu0 0.0
    %260 = vmatpush1.msra.mxu0 0.0
    %261 = vmatprep.subr.mxu0 0.0
    %262 = vmatpush1.msra.mxu0 0.0
    %263 = vmatprep.mubr.f32.mxu0 0.0
    %264 = vmatmul.mubr.f32.gmra.mrb[0].mxu0 %v194
    %v265 = vpop.f32.mrb[0].mxu0
    %v266 = vadd.f32 %v191, %v265
    %v267 = vpop.f32.mrb[0].mxu0
    %268 = vmatprep.mubr.f32.mxu0 0.0
    %269 = vmatmul.mubr.f32.gmra.mrb[0].mxu0 %v197
    %v270 = vpop.f32.mrb[0].mxu0
    %v271 = vadd.f32 %v191, %v270
    %v272 = vpop.f32.mrb[0].mxu0
    %273 = vdwg.mxu0
    %276 = vrot.lane.b32.xlu0 %v266, 96
    %v277 = vpop.permute.xlu0 %276
    %278 = vrot.lane.b32.xlu0 %v271, 96
    %v279 = vpop.permute.xlu0 %278
    %vm280 = vcmask 64512
    %v281 = vsel %vm280, %v266, 0
    %v283 = vsel %vm280, %v271, 0
    %v285 = vsel %vm280, %v277, 0
    %v287 = vsel %vm280, %v279, 0
    %289 = vmatprep.subr.mxu0 0.0
    %290 = vmatpush1.xpose.msra.mxu0 %v285
    %291 = vmatprep.subr.mxu0 0.0
    %292 = vmatpush1.xpose.msra.mxu0 %v287
    %293 = vmatprep.subr.mxu0 0.0
    %294 = vmatpush1.xpose.msra.mxu0 0.0
    %295 = vmatprep.subr.mxu0 0.0
    %296 = vmatpush1.xpose.msra.mxu0 0.0
    %297 = vmatprep.subr.mxu0 0.0
    %298 = vmatpush1.xpose.msra.mxu0 0.0
    %299 = vmatprep.subr.mxu0 0.0
    %300 = vmatpush1.xpose.msra.mxu0 0.0
    %301 = vmatprep.subr.mxu0 0.0
    %302 = vmatpush1.xpose.msra.mxu0 0.0
    %303 = vmatprep.subr.mxu0 0.0
    %304 = vmatpush1.xpose.msra.mxu0 0.0
    %305 = vmatprep.subr.mxu0 0.0
    %306 = vmatpush1.xpose.msra.mxu0 0.0
    %307 = vmatprep.subr.mxu0 0.0
    %308 = vmatpush1.xpose.msra.mxu0 0.0
    %309 = vmatprep.subr.mxu0 0.0
    %310 = vmatpush1.xpose.msra.mxu0 0.0
    %311 = vmatprep.subr.mxu0 0.0
    %312 = vmatpush1.xpose.msra.mxu0 0.0
    %313 = vmatprep.subr.mxu0 0.0
    %314 = vmatpush1.xpose.msra.mxu0 0.0
    %315 = vmatprep.subr.mxu0 0.0
    %316 = vmatpush1.xpose.msra.mxu0 0.0
    %317 = vmatprep.subr.mxu0 0.0
    %318 = vmatpush1.xpose.msra.mxu0 0.0
    %319 = vmatprep.subr.mxu0 0.0
    %320 = vmatpush1.xpose.msra.mxu0 0.0
    %321 = vmatprep.subr.mxu0 0.0
    %322 = vmatpush1.xpose.msra.mxu0 0.0
    %323 = vmatprep.subr.mxu0 0.0
    %324 = vmatpush1.xpose.msra.mxu0 0.0
    %325 = vmatprep.subr.mxu0 0.0
    %326 = vmatpush1.xpose.msra.mxu0 0.0
    %327 = vmatprep.subr.mxu0 0.0
    %328 = vmatpush1.xpose.msra.mxu0 0.0
    %329 = vmatprep.subr.mxu0 0.0
    %330 = vmatpush1.xpose.msra.mxu0 0.0
    %331 = vmatprep.subr.mxu0 0.0
    %332 = vmatpush1.xpose.msra.mxu0 0.0
    %333 = vmatprep.subr.mxu0 0.0
    %334 = vmatpush1.xpose.msra.mxu0 0.0
    %335 = vmatprep.subr.mxu0 0.0
    %336 = vmatpush1.xpose.msra.mxu0 0.0
    %337 = vmatprep.subr.mxu0 0.0
    %338 = vmatpush1.xpose.msra.mxu0 0.0
    %339 = vmatprep.subr.mxu0 0.0
    %340 = vmatpush1.xpose.msra.mxu0 0.0
    %341 = vmatprep.subr.mxu0 0.0
    %342 = vmatpush1.xpose.msra.mxu0 0.0
    %343 = vmatprep.subr.mxu0 0.0
    %344 = vmatpush1.xpose.msra.mxu0 0.0
    %345 = vmatprep.subr.mxu0 0.0
    %346 = vmatpush1.xpose.msra.mxu0 0.0
    %347 = vmatprep.subr.mxu0 0.0
    %348 = vmatpush1.xpose.msra.mxu0 0.0
    %349 = vmatprep.subr.mxu0 0.0
    %350 = vmatpush1.xpose.msra.mxu0 0.0
    %351 = vmatprep.subr.mxu0 0.0
    %352 = vmatpush1.xpose.msra.mxu0 0.0
    %353 = vmatprep.mubr.f32.mxu0 0.0
    %354 = vmatmul.mubr.f32.gmra.mrb[0].mxu0 %v281
    %v355 = vpop.f32.mrb[0].mxu0
    %v356 = vadd.f32 %v65, %v355
    %v357 = vpop.f32.mrb[0].mxu0
    %358 = vmatprep.mubr.f32.mxu0 0.0
    %359 = vmatmul.mubr.f32.gmra.mrb[0].mxu0 %v283
    %v360 = vpop.f32.mrb[0].mxu0
    %v361 = vadd.f32 %v66, %v360
    %v362 = vpop.f32.mrb[0].mxu0
    %363 = vdwg.mxu0
    %vm364 = vcmask 130048
    %v365 = vsel %vm364, %v356, -inf
    %366 = vmax.xlane.f32.xlu0 %v365
    %v367 = vpop.xlane.xlu0 %366
    %v368 = vsel %vm364, %v361, -inf
    %369 = vmax.xlane.f32.xlu0 %v368
    %v370 = vpop.xlane.xlu0 %369
    %v371 = vsub.f32 %v356, %v367
    %v372 = vsub.f32 %v361, %v370
    %v373 = vmul.f32 %v371, 1.442695
    %v374 = vpow.pop %v373
    %v375 = vmul.f32 %v372, 1.442695
    %v376 = vpow.pop %v375
    %v377 = vsel %vm364, %v374, 0.0
    %378 = vadd.xlane.f32.xlu0 %v377
    %v379 = vpop.xlane.xlu0 %378
    %v380 = vsel %vm364, %v376, 0.0
    %381 = vadd.xlane.f32.xlu0 %v380
    %v382 = vpop.xlane.xlu0 %381
    %v383 = vrcp.pop %v379
    %v384 = vrcp.pop %v382
    %v385 = vmul.f32 %v374, %v383
    %v386 = vmul.f32 %v376, %v384
    %387 = vrot.lane.b32.xlu0 %v266, 64
    %v388 = vpop.permute.xlu0 %387
    %389 = vrot.lane.b32.xlu0 %v271, 64
    %v390 = vpop.permute.xlu0 %389
    %v394 = vsel %vm364, %v385, 0
    %v397 = vsel %vm364, %v386, 0
    %399 = vmatprep.subr.mxu0 0.0
    %400 = vmatpush1.msra.mxu0 %v388
    %401 = vmatprep.subr.mxu0 0.0
    %402 = vmatpush1.msra.mxu0 %v390
    %403 = vmatprep.subr.mxu0 0.0
    %404 = vmatpush1.msra.mxu0 0.0
    %405 = vmatprep.subr.mxu0 0.0
    %406 = vmatpush1.msra.mxu0 0.0
    %407 = vmatprep.subr.mxu0 0.0
    %408 = vmatpush1.msra.mxu0 0.0
    %409 = vmatprep.subr.mxu0 0.0
    %410 = vmatpush1.msra.mxu0 0.0
    %411 = vmatprep.subr.mxu0 0.0
    %412 = vmatpush1.msra.mxu0 0.0
    %413 = vmatprep.subr.mxu0 0.0
    %414 = vmatpush1.msra.mxu0 0.0
    %415 = vmatprep.subr.mxu0 0.0
    %416 = vmatpush1.msra.mxu0 0.0
    %417 = vmatprep.subr.mxu0 0.0
    %418 = vmatpush1.msra.mxu0 0.0
    %419 = vmatprep.subr.mxu0 0.0
    %420 = vmatpush1.msra.mxu0 0.0
    %421 = vmatprep.subr.mxu0 0.0
    %422 = vmatpush1.msra.mxu0 0.0
    %423 = vmatprep.subr.mxu0 0.0
    %424 = vmatpush1.msra.mxu0 0.0
    %425 = vmatprep.subr.mxu0 0.0
    %426 = vmatpush1.msra.mxu0 0.0
    %427 = vmatprep.subr.mxu0 0.0
    %428 = vmatpush1.msra.mxu0 0.0
    %429 = vmatprep.subr.mxu0 0.0
    %430 = vmatpush1.msra.mxu0 0.0
    %431 = vmatprep.subr.mxu0 0.0
    %432 = vmatpush1.msra.mxu0 0.0
    %433 = vmatprep.subr.mxu0 0.0
    %434 = vmatpush1.msra.mxu0 0.0
    %435 = vmatprep.subr.mxu0 0.0
    %436 = vmatpush1.msra.mxu0 0.0
    %437 = vmatprep.subr.mxu0 0.0
    %438 = vmatpush1.msra.mxu0 0.0
    %439 = vmatprep.subr.mxu0 0.0
    %440 = vmatpush1.msra.mxu0 0.0
    %441 = vmatprep.subr.mxu0 0.0
    %442 = vmatpush1.msra.mxu0 0.0
    %443 = vmatprep.subr.mxu0 0.0
    %444 = vmatpush1.msra.mxu0 0.0
    %445 = vmatprep.subr.mxu0 0.0
    %446 = vmatpush1.msra.mxu0 0.0
    %447 = vmatprep.subr.mxu0 0.0
    %448 = vmatpush1.msra.mxu0 0.0
    %449 = vmatprep.subr.mxu0 0.0
    %450 = vmatpush1.msra.mxu0 0.0
    %451 = vmatprep.subr.mxu0 0.0
    %452 = vmatpush1.msra.mxu0 0.0
    %453 = vmatprep.subr.mxu0 0.0
    %454 = vmatpush1.msra.mxu0 0.0
    %455 = vmatprep.subr.mxu0 0.0
    %456 = vmatpush1.msra.mxu0 0.0
    %457 = vmatprep.subr.mxu0 0.0
    %458 = vmatpush1.msra.mxu0 0.0
    %459 = vmatprep.subr.mxu0 0.0
    %460 = vmatpush1.msra.mxu0 0.0
    %461 = vmatprep.subr.mxu0 0.0
    %462 = vmatpush1.msra.mxu0 0.0
    %463 = vmatprep.mubr.f32.mxu0 0.0
    %464 = vmatmul.mubr.f32.gmra.mrb[0].mxu0 %v394
    %v465 = vpop.f32.mrb[0].mxu0
    %v466 = vadd.f32 0.0, %v465
    %v467 = vpop.f32.mrb[0].mxu0
    %468 = vmatprep.mubr.f32.mxu0 0.0
    %469 = vmatmul.mubr.f32.gmra.mrb[0].mxu0 %v397
    %v470 = vpop.f32.mrb[0].mxu0
    %v471 = vadd.f32 0.0, %v470
    %v472 = vpop.f32.mrb[0].mxu0
    %473 = vdwg.mxu0
    %474 = vrot.lane.b32.xlu0 %v266, 120
    %v475 = vpop.permute.xlu0 %474
    %476 = vrot.lane.b32.xlu0 %v271, 120
    %v477 = vpop.permute.xlu0 %476
    %478 = vrot.lane.b32.xlu0 %v266, 88
    %v479 = vpop.permute.xlu0 %478
    %480 = vrot.lane.b32.xlu0 %v271, 88
    %v481 = vpop.permute.xlu0 %480
    %v482 = vsel %vm280, %v475, 0
    %v484 = vsel %vm280, %v477, 0
    %v486 = vsel %vm280, %v479, 0
    %v488 = vsel %vm280, %v481, 0
    %490 = vmatprep.subr.mxu0 0.0
    %491 = vmatpush1.xpose.msra.mxu0 %v486
    %492 = vmatprep.subr.mxu0 0.0
    %493 = vmatpush1.xpose.msra.mxu0 %v488
    %494 = vmatprep.subr.mxu0 0.0
    %495 = vmatpush1.xpose.msra.mxu0 0.0
    %496 = vmatprep.subr.mxu0 0.0
    %497 = vmatpush1.xpose.msra.mxu0 0.0
    %498 = vmatprep.subr.mxu0 0.0
    %499 = vmatpush1.xpose.msra.mxu0 0.0
    %500 = vmatprep.subr.mxu0 0.0
    %501 = vmatpush1.xpose.msra.mxu0 0.0
    %502 = vmatprep.subr.mxu0 0.0
    %503 = vmatpush1.xpose.msra.mxu0 0.0
    %504 = vmatprep.subr.mxu0 0.0
    %505 = vmatpush1.xpose.msra.mxu0 0.0
    %506 = vmatprep.subr.mxu0 0.0
    %507 = vmatpush1.xpose.msra.mxu0 0.0
    %508 = vmatprep.subr.mxu0 0.0
    %509 = vmatpush1.xpose.msra.mxu0 0.0
    %510 = vmatprep.subr.mxu0 0.0
    %511 = vmatpush1.xpose.msra.mxu0 0.0
    %512 = vmatprep.subr.mxu0 0.0
    %513 = vmatpush1.xpose.msra.mxu0 0.0
    %514 = vmatprep.subr.mxu0 0.0
    %515 = vmatpush1.xpose.msra.mxu0 0.0
    %516 = vmatprep.subr.mxu0 0.0
    %517 = vmatpush1.xpose.msra.mxu0 0.0
    %518 = vmatprep.subr.mxu0 0.0
    %519 = vmatpush1.xpose.msra.mxu0 0.0
    %520 = vmatprep.subr.mxu0 0.0
    %521 = vmatpush1.xpose.msra.mxu0 0.0
    %522 = vmatprep.subr.mxu0 0.0
    %523 = vmatpush1.xpose.msra.mxu0 0.0
    %524 = vmatprep.subr.mxu0 0.0
    %525 = vmatpush1.xpose.msra.mxu0 0.0
    %526 = vmatprep.subr.mxu0 0.0
    %527 = vmatpush1.xpose.msra.mxu0 0.0
    %528 = vmatprep.subr.mxu0 0.0
    %529 = vmatpush1.xpose.msra.mxu0 0.0
    %530 = vmatprep.subr.mxu0 0.0
    %531 = vmatpush1.xpose.msra.mxu0 0.0
    %532 = vmatprep.subr.mxu0 0.0
    %533 = vmatpush1.xpose.msra.mxu0 0.0
    %534 = vmatprep.subr.mxu0 0.0
    %535 = vmatpush1.xpose.msra.mxu0 0.0
    %536 = vmatprep.subr.mxu0 0.0
    %537 = vmatpush1.xpose.msra.mxu0 0.0
    %538 = vmatprep.subr.mxu0 0.0
    %539 = vmatpush1.xpose.msra.mxu0 0.0
    %540 = vmatprep.subr.mxu0 0.0
    %541 = vmatpush1.xpose.msra.mxu0 0.0
    %542 = vmatprep.subr.mxu0 0.0
    %543 = vmatpush1.xpose.msra.mxu0 0.0
    %544 = vmatprep.subr.mxu0 0.0
    %545 = vmatpush1.xpose.msra.mxu0 0.0
    %546 = vmatprep.subr.mxu0 0.0
    %547 = vmatpush1.xpose.msra.mxu0 0.0
    %548 = vmatprep.subr.mxu0 0.0
    %549 = vmatpush1.xpose.msra.mxu0 0.0
    %550 = vmatprep.subr.mxu0 0.0
    %551 = vmatpush1.xpose.msra.mxu0 0.0
    %552 = vmatprep.subr.mxu0 0.0
    %553 = vmatpush1.xpose.msra.mxu0 0.0
    %554 = vmatprep.mubr.f32.mxu0 0.0
    %555 = vmatmul.mubr.f32.gmra.mrb[0].mxu0 %v482
    %v556 = vpop.f32.mrb[0].mxu0
    %v557 = vadd.f32 %v65, %v556
    %v558 = vpop.f32.mrb[0].mxu0
    %559 = vmatprep.mubr.f32.mxu0 0.0
    %560 = vmatmul.mubr.f32.gmra.mrb[0].mxu0 %v484
    %v561 = vpop.f32.mrb[0].mxu0
    %v562 = vadd.f32 %v66, %v561
    %v563 = vpop.f32.mrb[0].mxu0
    %564 = vdwg.mxu0
    %v565 = vsel %vm364, %v557, -inf
    %566 = vmax.xlane.f32.xlu0 %v565
    %v567 = vpop.xlane.xlu0 %566
    %v568 = vsel %vm364, %v562, -inf
    %569 = vmax.xlane.f32.xlu0 %v568
    %v570 = vpop.xlane.xlu0 %569
    %v571 = vsub.f32 %v557, %v567
    %v572 = vsub.f32 %v562, %v570
    %v573 = vmul.f32 %v571, 1.442695
    %v574 = vpow.pop %v573
    %v575 = vmul.f32 %v572, 1.442695
    %v576 = vpow.pop %v575
    %v577 = vsel %vm364, %v574, 0.0
    %578 = vadd.xlane.f32.xlu0 %v577
    %v579 = vpop.xlane.xlu0 %578
    %v580 = vsel %vm364, %v576, 0.0
    %581 = vadd.xlane.f32.xlu0 %v580
    %v582 = vpop.xlane.xlu0 %581
    %v583 = vrcp.pop %v579
    %v584 = vrcp.pop %v582
    %v585 = vmul.f32 %v574, %v583
    %v586 = vmul.f32 %v576, %v584
    %587 = vrot.lane.b32.xlu0 %v266, 56
    %v588 = vpop.permute.xlu0 %587
    %589 = vrot.lane.b32.xlu0 %v271, 56
    %v590 = vpop.permute.xlu0 %589
    %v594 = vsel %vm364, %v585, 0
    %v597 = vsel %vm364, %v586, 0
    %599 = vmatprep.subr.mxu0 0.0
    %600 = vmatpush1.msra.mxu0 %v588
    %601 = vmatprep.subr.mxu0 0.0
    %602 = vmatpush1.msra.mxu0 %v590
    %603 = vmatprep.subr.mxu0 0.0
    %604 = vmatpush1.msra.mxu0 0.0
    %605 = vmatprep.subr.mxu0 0.0
    %606 = vmatpush1.msra.mxu0 0.0
    %607 = vmatprep.subr.mxu0 0.0
    %608 = vmatpush1.msra.mxu0 0.0
    %609 = vmatprep.subr.mxu0 0.0
    %610 = vmatpush1.msra.mxu0 0.0
    %611 = vmatprep.subr.mxu0 0.0
    %612 = vmatpush1.msra.mxu0 0.0
    %613 = vmatprep.subr.mxu0 0.0
    %614 = vmatpush1.msra.mxu0 0.0
    %615 = vmatprep.subr.mxu0 0.0
    %616 = vmatpush1.msra.mxu0 0.0
    %617 = vmatprep.subr.mxu0 0.0
    %618 = vmatpush1.msra.mxu0 0.0
    %619 = vmatprep.subr.mxu0 0.0
    %620 = vmatpush1.msra.mxu0 0.0
    %621 = vmatprep.subr.mxu0 0.0
    %622 = vmatpush1.msra.mxu0 0.0
    %623 = vmatprep.subr.mxu0 0.0
    %624 = vmatpush1.msra.mxu0 0.0
    %625 = vmatprep.subr.mxu0 0.0
    %626 = vmatpush1.msra.mxu0 0.0
    %627 = vmatprep.subr.mxu0 0.0
    %628 = vmatpush1.msra.mxu0 0.0
    %629 = vmatprep.subr.mxu0 0.0
    %630 = vmatpush1.msra.mxu0 0.0
    %631 = vmatprep.subr.mxu0 0.0
    %632 = vmatpush1.msra.mxu0 0.0
    %633 = vmatprep.subr.mxu0 0.0
    %634 = vmatpush1.msra.mxu0 0.0
    %635 = vmatprep.subr.mxu0 0.0
    %636 = vmatpush1.msra.mxu0 0.0
    %637 = vmatprep.subr.mxu0 0.0
    %638 = vmatpush1.msra.mxu0 0.0
    %639 = vmatprep.subr.mxu0 0.0
    %640 = vmatpush1.msra.mxu0 0.0
    %641 = vmatprep.subr.mxu0 0.0
    %642 = vmatpush1.msra.mxu0 0.0
    %643 = vmatprep.subr.mxu0 0.0
    %644 = vmatpush1.msra.mxu0 0.0
    %645 = vmatprep.subr.mxu0 0.0
    %646 = vmatpush1.msra.mxu0 0.0
    %647 = vmatprep.subr.mxu0 0.0
    %648 = vmatpush1.msra.mxu0 0.0
    %649 = vmatprep.subr.mxu0 0.0
    %650 = vmatpush1.msra.mxu0 0.0
    %651 = vmatprep.subr.mxu0 0.0
    %652 = vmatpush1.msra.mxu0 0.0
    %653 = vmatprep.subr.mxu0 0.0
    %654 = vmatpush1.msra.mxu0 0.0
    %655 = vmatprep.subr.mxu0 0.0
    %656 = vmatpush1.msra.mxu0 0.0
    %657 = vmatprep.subr.mxu0 0.0
    %658 = vmatpush1.msra.mxu0 0.0
    %659 = vmatprep.subr.mxu0 0.0
    %660 = vmatpush1.msra.mxu0 0.0
    %661 = vmatprep.subr.mxu0 0.0
    %662 = vmatpush1.msra.mxu0 0.0
    %663 = vmatprep.mubr.f32.mxu0 0.0
    %664 = vmatmul.mubr.f32.gmra.mrb[0].mxu0 %v594
    %v665 = vpop.f32.mrb[0].mxu0
    %v666 = vadd.f32 0.0, %v665
    %v667 = vpop.f32.mrb[0].mxu0
    %668 = vmatprep.mubr.f32.mxu0 0.0
    %669 = vmatmul.mubr.f32.gmra.mrb[0].mxu0 %v597
    %v670 = vpop.f32.mrb[0].mxu0
    %v671 = vadd.f32 0.0, %v670
    %v672 = vpop.f32.mrb[0].mxu0
    %673 = vdwg.mxu0
    %674 = vrot.lane.b32.xlu0 %v266, 112
    %v675 = vpop.permute.xlu0 %674
    %676 = vrot.lane.b32.xlu0 %v271, 112
    %v677 = vpop.permute.xlu0 %676
    %678 = vrot.lane.b32.xlu0 %v266, 80
    %v679 = vpop.permute.xlu0 %678
    %680 = vrot.lane.b32.xlu0 %v271, 80
    %v681 = vpop.permute.xlu0 %680
    %v682 = vsel %vm280, %v675, 0
    %v684 = vsel %vm280, %v677, 0
    %v686 = vsel %vm280, %v679, 0
    %v688 = vsel %vm280, %v681, 0
    %690 = vmatprep.subr.mxu0 0.0
    %691 = vmatpush1.xpose.msra.mxu0 %v686
    %692 = vmatprep.subr.mxu0 0.0
    %693 = vmatpush1.xpose.msra.mxu0 %v688
    %694 = vmatprep.subr.mxu0 0.0
    %695 = vmatpush1.xpose.msra.mxu0 0.0
    %696 = vmatprep.subr.mxu0 0.0
    %697 = vmatpush1.xpose.msra.mxu0 0.0
    %698 = vmatprep.subr.mxu0 0.0
    %699 = vmatpush1.xpose.msra.mxu0 0.0
    %700 = vmatprep.subr.mxu0 0.0
    %701 = vmatpush1.xpose.msra.mxu0 0.0
    %702 = vmatprep.subr.mxu0 0.0
    %703 = vmatpush1.xpose.msra.mxu0 0.0
    %704 = vmatprep.subr.mxu0 0.0
    %705 = vmatpush1.xpose.msra.mxu0 0.0
    %706 = vmatprep.subr.mxu0 0.0
    %707 = vmatpush1.xpose.msra.mxu0 0.0
    %708 = vmatprep.subr.mxu0 0.0
    %709 = vmatpush1.xpose.msra.mxu0 0.0
    %710 = vmatprep.subr.mxu0 0.0
    %711 = vmatpush1.xpose.msra.mxu0 0.0
    %712 = vmatprep.subr.mxu0 0.0
    %713 = vmatpush1.xpose.msra.mxu0 0.0
    %714 = vmatprep.subr.mxu0 0.0
    %715 = vmatpush1.xpose.msra.mxu0 0.0
    %716 = vmatprep.subr.mxu0 0.0
    %717 = vmatpush1.xpose.msra.mxu0 0.0
    %718 = vmatprep.subr.mxu0 0.0
    %719 = vmatpush1.xpose.msra.mxu0 0.0
    %720 = vmatprep.subr.mxu0 0.0
    %721 = vmatpush1.xpose.msra.mxu0 0.0
    %722 = vmatprep.subr.mxu0 0.0
    %723 = vmatpush1.xpose.msra.mxu0 0.0
    %724 = vmatprep.subr.mxu0 0.0
    %725 = vmatpush1.xpose.msra.mxu0 0.0
    %726 = vmatprep.subr.mxu0 0.0
    %727 = vmatpush1.xpose.msra.mxu0 0.0
    %728 = vmatprep.subr.mxu0 0.0
    %729 = vmatpush1.xpose.msra.mxu0 0.0
    %730 = vmatprep.subr.mxu0 0.0
    %731 = vmatpush1.xpose.msra.mxu0 0.0
    %732 = vmatprep.subr.mxu0 0.0
    %733 = vmatpush1.xpose.msra.mxu0 0.0
    %734 = vmatprep.subr.mxu0 0.0
    %735 = vmatpush1.xpose.msra.mxu0 0.0
    %736 = vmatprep.subr.mxu0 0.0
    %737 = vmatpush1.xpose.msra.mxu0 0.0
    %738 = vmatprep.subr.mxu0 0.0
    %739 = vmatpush1.xpose.msra.mxu0 0.0
    %740 = vmatprep.subr.mxu0 0.0
    %741 = vmatpush1.xpose.msra.mxu0 0.0
    %742 = vmatprep.subr.mxu0 0.0
    %743 = vmatpush1.xpose.msra.mxu0 0.0
    %744 = vmatprep.subr.mxu0 0.0
    %745 = vmatpush1.xpose.msra.mxu0 0.0
    %746 = vmatprep.subr.mxu0 0.0
    %747 = vmatpush1.xpose.msra.mxu0 0.0
    %748 = vmatprep.subr.mxu0 0.0
    %749 = vmatpush1.xpose.msra.mxu0 0.0
    %750 = vmatprep.subr.mxu0 0.0
    %751 = vmatpush1.xpose.msra.mxu0 0.0
    %752 = vmatprep.subr.mxu0 0.0
    %753 = vmatpush1.xpose.msra.mxu0 0.0
    %754 = vmatprep.mubr.f32.mxu0 0.0
    %755 = vmatmul.mubr.f32.gmra.mrb[0].mxu0 %v682
    %v756 = vpop.f32.mrb[0].mxu0
    %v757 = vadd.f32 %v65, %v756
    %v758 = vpop.f32.mrb[0].mxu0
    %759 = vmatprep.mubr.f32.mxu0 0.0
    %760 = vmatmul.mubr.f32.gmra.mrb[0].mxu0 %v684
    %v761 = vpop.f32.mrb[0].mxu0
    %v762 = vadd.f32 %v66, %v761
    %v763 = vpop.f32.mrb[0].mxu0
    %764 = vdwg.mxu0
    %v765 = vsel %vm364, %v757, -inf
    %766 = vmax.xlane.f32.xlu0 %v765
    %v767 = vpop.xlane.xlu0 %766
    %v768 = vsel %vm364, %v762, -inf
    %769 = vmax.xlane.f32.xlu0 %v768
    %v770 = vpop.xlane.xlu0 %769
    %v771 = vsub.f32 %v757, %v767
    %v772 = vsub.f32 %v762, %v770
    %v773 = vmul.f32 %v771, 1.442695
    %v774 = vpow.pop %v773
    %v775 = vmul.f32 %v772, 1.442695
    %v776 = vpow.pop %v775
    %v777 = vsel %vm364, %v774, 0.0
    %778 = vadd.xlane.f32.xlu0 %v777
    %v779 = vpop.xlane.xlu0 %778
    %v780 = vsel %vm364, %v776, 0.0
    %781 = vadd.xlane.f32.xlu0 %v780
    %v782 = vpop.xlane.xlu0 %781
    %v783 = vrcp.pop %v779
    %v784 = vrcp.pop %v782
    %v785 = vmul.f32 %v774, %v783
    %v786 = vmul.f32 %v776, %v784
    %787 = vrot.lane.b32.xlu0 %v266, 48
    %v788 = vpop.permute.xlu0 %787
    %789 = vrot.lane.b32.xlu0 %v271, 48
    %v790 = vpop.permute.xlu0 %789
    %v794 = vsel %vm364, %v785, 0
    %v797 = vsel %vm364, %v786, 0
    %799 = vmatprep.subr.mxu0 0.0
    %800 = vmatpush1.msra.mxu0 %v788
    %801 = vmatprep.subr.mxu0 0.0
    %802 = vmatpush1.msra.mxu0 %v790
    %803 = vmatprep.subr.mxu0 0.0
    %804 = vmatpush1.msra.mxu0 0.0
    %805 = vmatprep.subr.mxu0 0.0
    %806 = vmatpush1.msra.mxu0 0.0
    %807 = vmatprep.subr.mxu0 0.0
    %808 = vmatpush1.msra.mxu0 0.0
    %809 = vmatprep.subr.mxu0 0.0
    %810 = vmatpush1.msra.mxu0 0.0
    %811 = vmatprep.subr.mxu0 0.0
    %812 = vmatpush1.msra.mxu0 0.0
    %813 = vmatprep.subr.mxu0 0.0
    %814 = vmatpush1.msra.mxu0 0.0
    %815 = vmatprep.subr.mxu0 0.0
    %816 = vmatpush1.msra.mxu0 0.0
    %817 = vmatprep.subr.mxu0 0.0
    %818 = vmatpush1.msra.mxu0 0.0
    %819 = vmatprep.subr.mxu0 0.0
    %820 = vmatpush1.msra.mxu0 0.0
    %821 = vmatprep.subr.mxu0 0.0
    %822 = vmatpush1.msra.mxu0 0.0
    %823 = vmatprep.subr.mxu0 0.0
    %824 = vmatpush1.msra.mxu0 0.0
    %825 = vmatprep.subr.mxu0 0.0
    %826 = vmatpush1.msra.mxu0 0.0
    %827 = vmatprep.subr.mxu0 0.0
    %828 = vmatpush1.msra.mxu0 0.0
    %829 = vmatprep.subr.mxu0 0.0
    %830 = vmatpush1.msra.mxu0 0.0
    %831 = vmatprep.subr.mxu0 0.0
    %832 = vmatpush1.msra.mxu0 0.0
    %833 = vmatprep.subr.mxu0 0.0
    %834 = vmatpush1.msra.mxu0 0.0
    %835 = vmatprep.subr.mxu0 0.0
    %836 = vmatpush1.msra.mxu0 0.0
    %837 = vmatprep.subr.mxu0 0.0
    %838 = vmatpush1.msra.mxu0 0.0
    %839 = vmatprep.subr.mxu0 0.0
    %840 = vmatpush1.msra.mxu0 0.0
    %841 = vmatprep.subr.mxu0 0.0
    %842 = vmatpush1.msra.mxu0 0.0
    %843 = vmatprep.subr.mxu0 0.0
    %844 = vmatpush1.msra.mxu0 0.0
    %845 = vmatprep.subr.mxu0 0.0
    %846 = vmatpush1.msra.mxu0 0.0
    %847 = vmatprep.subr.mxu0 0.0
    %848 = vmatpush1.msra.mxu0 0.0
    %849 = vmatprep.subr.mxu0 0.0
    %850 = vmatpush1.msra.mxu0 0.0
    %851 = vmatprep.subr.mxu0 0.0
    %852 = vmatpush1.msra.mxu0 0.0
    %853 = vmatprep.subr.mxu0 0.0
    %854 = vmatpush1.msra.mxu0 0.0
    %855 = vmatprep.subr.mxu0 0.0
    %856 = vmatpush1.msra.mxu0 0.0
    %857 = vmatprep.subr.mxu0 0.0
    %858 = vmatpush1.msra.mxu0 0.0
    %859 = vmatprep.subr.mxu0 0.0
    %860 = vmatpush1.msra.mxu0 0.0
    %861 = vmatprep.subr.mxu0 0.0
    %862 = vmatpush1.msra.mxu0 0.0
    %863 = vmatprep.mubr.f32.mxu0 0.0
    %864 = vmatmul.mubr.f32.gmra.mrb[0].mxu0 %v794
    %v865 = vpop.f32.mrb[0].mxu0
    %v866 = vadd.f32 0.0, %v865
    %v867 = vpop.f32.mrb[0].mxu0
    %868 = vmatprep.mubr.f32.mxu0 0.0
    %869 = vmatmul.mubr.f32.gmra.mrb[0].mxu0 %v797
    %v870 = vpop.f32.mrb[0].mxu0
    %v871 = vadd.f32 0.0, %v870
    %v872 = vpop.f32.mrb[0].mxu0
    %873 = vdwg.mxu0
    %874 = vrot.lane.b32.xlu0 %v266, 104
    %v875 = vpop.permute.xlu0 %874
    %876 = vrot.lane.b32.xlu0 %v271, 104
    %v877 = vpop.permute.xlu0 %876
    %878 = vrot.lane.b32.xlu0 %v266, 72
    %v879 = vpop.permute.xlu0 %878
    %880 = vrot.lane.b32.xlu0 %v271, 72
    %v881 = vpop.permute.xlu0 %880
    %v882 = vsel %vm280, %v875, 0
    %v884 = vsel %vm280, %v877, 0
    %v886 = vsel %vm280, %v879, 0
    %v888 = vsel %vm280, %v881, 0
    %890 = vmatprep.subr.mxu0 0.0
    %891 = vmatpush1.xpose.msra.mxu0 %v886
    %892 = vmatprep.subr.mxu0 0.0
    %893 = vmatpush1.xpose.msra.mxu0 %v888
    %894 = vmatprep.subr.mxu0 0.0
    %895 = vmatpush1.xpose.msra.mxu0 0.0
    %896 = vmatprep.subr.mxu0 0.0
    %897 = vmatpush1.xpose.msra.mxu0 0.0
    %898 = vmatprep.subr.mxu0 0.0
    %899 = vmatpush1.xpose.msra.mxu0 0.0
    %900 = vmatprep.subr.mxu0 0.0
    %901 = vmatpush1.xpose.msra.mxu0 0.0
    %902 = vmatprep.subr.mxu0 0.0
    %903 = vmatpush1.xpose.msra.mxu0 0.0
    %904 = vmatprep.subr.mxu0 0.0
    %905 = vmatpush1.xpose.msra.mxu0 0.0
    %906 = vmatprep.subr.mxu0 0.0
    %907 = vmatpush1.xpose.msra.mxu0 0.0
    %908 = vmatprep.subr.mxu0 0.0
    %909 = vmatpush1.xpose.msra.mxu0 0.0
    %910 = vmatprep.subr.mxu0 0.0
    %911 = vmatpush1.xpose.msra.mxu0 0.0
    %912 = vmatprep.subr.mxu0 0.0
    %913 = vmatpush1.xpose.msra.mxu0 0.0
    %914 = vmatprep.subr.mxu0 0.0
    %915 = vmatpush1.xpose.msra.mxu0 0.0
    %916 = vmatprep.subr.mxu0 0.0
    %917 = vmatpush1.xpose.msra.mxu0 0.0
    %918 = vmatprep.subr.mxu0 0.0
    %919 = vmatpush1.xpose.msra.mxu0 0.0
    %920 = vmatprep.subr.mxu0 0.0
    %921 = vmatpush1.xpose.msra.mxu0 0.0
    %922 = vmatprep.subr.mxu0 0.0
    %923 = vmatpush1.xpose.msra.mxu0 0.0
    %924 = vmatprep.subr.mxu0 0.0
    %925 = vmatpush1.xpose.msra.mxu0 0.0
    %926 = vmatprep.subr.mxu0 0.0
    %927 = vmatpush1.xpose.msra.mxu0 0.0
    %928 = vmatprep.subr.mxu0 0.0
    %929 = vmatpush1.xpose.msra.mxu0 0.0
    %930 = vmatprep.subr.mxu0 0.0
    %931 = vmatpush1.xpose.msra.mxu0 0.0
    %932 = vmatprep.subr.mxu0 0.0
    %933 = vmatpush1.xpose.msra.mxu0 0.0
    %934 = vmatprep.subr.mxu0 0.0
    %935 = vmatpush1.xpose.msra.mxu0 0.0
    %936 = vmatprep.subr.mxu0 0.0
    %937 = vmatpush1.xpose.msra.mxu0 0.0
    %938 = vmatprep.subr.mxu0 0.0
    %939 = vmatpush1.xpose.msra.mxu0 0.0
    %940 = vmatprep.subr.mxu0 0.0
    %941 = vmatpush1.xpose.msra.mxu0 0.0
    %942 = vmatprep.subr.mxu0 0.0
    %943 = vmatpush1.xpose.msra.mxu0 0.0
    %944 = vmatprep.subr.mxu0 0.0
    %945 = vmatpush1.xpose.msra.mxu0 0.0
    %946 = vmatprep.subr.mxu0 0.0
    %947 = vmatpush1.xpose.msra.mxu0 0.0
    %948 = vmatprep.subr.mxu0 0.0
    %949 = vmatpush1.xpose.msra.mxu0 0.0
    %950 = vmatprep.subr.mxu0 0.0
    %951 = vmatpush1.xpose.msra.mxu0 0.0
    %952 = vmatprep.subr.mxu0 0.0
    %953 = vmatpush1.xpose.msra.mxu0 0.0
    %954 = vmatprep.mubr.f32.mxu0 0.0
    %955 = vmatmul.mubr.f32.gmra.mrb[0].mxu0 %v882
    %v956 = vpop.f32.mrb[0].mxu0
    %v957 = vadd.f32 %v65, %v956
    %v958 = vpop.f32.mrb[0].mxu0
    %959 = vmatprep.mubr.f32.mxu0 0.0
    %960 = vmatmul.mubr.f32.gmra.mrb[0].mxu0 %v884
    %v961 = vpop.f32.mrb[0].mxu0
    %v962 = vadd.f32 %v66, %v961
    %v963 = vpop.f32.mrb[0].mxu0
    %964 = vdwg.mxu0
    %v965 = vsel %vm364, %v957, -inf
    %966 = vmax.xlane.f32.xlu0 %v965
    %v967 = vpop.xlane.xlu0 %966
    %v968 = vsel %vm364, %v962, -inf
    %969 = vmax.xlane.f32.xlu0 %v968
    %v970 = vpop.xlane.xlu0 %969
    %v971 = vsub.f32 %v957, %v967
    %v972 = vsub.f32 %v962, %v970
    %v973 = vmul.f32 %v971, 1.442695
    %v974 = vpow.pop %v973
    %v975 = vmul.f32 %v972, 1.442695
    %v976 = vpow.pop %v975
    %v977 = vsel %vm364, %v974, 0.0
    %978 = vadd.xlane.f32.xlu0 %v977
    %v979 = vpop.xlane.xlu0 %978
    %v980 = vsel %vm364, %v976, 0.0
    %981 = vadd.xlane.f32.xlu0 %v980
    %v982 = vpop.xlane.xlu0 %981
    %v983 = vrcp.pop %v979
    %v984 = vrcp.pop %v982
    %v985 = vmul.f32 %v974, %v983
    %v986 = vmul.f32 %v976, %v984
    %987 = vrot.lane.b32.xlu0 %v266, 40
    %v988 = vpop.permute.xlu0 %987
    %989 = vrot.lane.b32.xlu0 %v271, 40
    %v990 = vpop.permute.xlu0 %989
    %v994 = vsel %vm364, %v985, 0
    %v997 = vsel %vm364, %v986, 0
    %999 = vmatprep.subr.mxu0 0.0
    %1000 = vmatpush1.msra.mxu0 %v988
    %1001 = vmatprep.subr.mxu0 0.0
    %1002 = vmatpush1.msra.mxu0 %v990
    %1003 = vmatprep.subr.mxu0 0.0
    %1004 = vmatpush1.msra.mxu0 0.0
    %1005 = vmatprep.subr.mxu0 0.0
    %1006 = vmatpush1.msra.mxu0 0.0
    %1007 = vmatprep.subr.mxu0 0.0
    %1008 = vmatpush1.msra.mxu0 0.0
    %1009 = vmatprep.subr.mxu0 0.0
    %1010 = vmatpush1.msra.mxu0 0.0
    %1011 = vmatprep.subr.mxu0 0.0
    %1012 = vmatpush1.msra.mxu0 0.0
    %1013 = vmatprep.subr.mxu0 0.0
    %1014 = vmatpush1.msra.mxu0 0.0
    %1015 = vmatprep.subr.mxu0 0.0
    %1016 = vmatpush1.msra.mxu0 0.0
    %1017 = vmatprep.subr.mxu0 0.0
    %1018 = vmatpush1.msra.mxu0 0.0
    %1019 = vmatprep.subr.mxu0 0.0
    %1020 = vmatpush1.msra.mxu0 0.0
    %1021 = vmatprep.subr.mxu0 0.0
    %1022 = vmatpush1.msra.mxu0 0.0
    %1023 = vmatprep.subr.mxu0 0.0
    %1024 = vmatpush1.msra.mxu0 0.0
    %1025 = vmatprep.subr.mxu0 0.0
    %1026 = vmatpush1.msra.mxu0 0.0
    %1027 = vmatprep.subr.mxu0 0.0
    %1028 = vmatpush1.msra.mxu0 0.0
    %1029 = vmatprep.subr.mxu0 0.0
    %1030 = vmatpush1.msra.mxu0 0.0
    %1031 = vmatprep.subr.mxu0 0.0
    %1032 = vmatpush1.msra.mxu0 0.0
    %1033 = vmatprep.subr.mxu0 0.0
    %1034 = vmatpush1.msra.mxu0 0.0
    %1035 = vmatprep.subr.mxu0 0.0
    %1036 = vmatpush1.msra.mxu0 0.0
    %1037 = vmatprep.subr.mxu0 0.0
    %1038 = vmatpush1.msra.mxu0 0.0
    %1039 = vmatprep.subr.mxu0 0.0
    %1040 = vmatpush1.msra.mxu0 0.0
    %1041 = vmatprep.subr.mxu0 0.0
    %1042 = vmatpush1.msra.mxu0 0.0
    %1043 = vmatprep.subr.mxu0 0.0
    %1044 = vmatpush1.msra.mxu0 0.0
    %1045 = vmatprep.subr.mxu0 0.0
    %1046 = vmatpush1.msra.mxu0 0.0
    %1047 = vmatprep.subr.mxu0 0.0
    %1048 = vmatpush1.msra.mxu0 0.0
    %1049 = vmatprep.subr.mxu0 0.0
    %1050 = vmatpush1.msra.mxu0 0.0
    %1051 = vmatprep.subr.mxu0 0.0
    %1052 = vmatpush1.msra.mxu0 0.0
    %1053 = vmatprep.subr.mxu0 0.0
    %1054 = vmatpush1.msra.mxu0 0.0
    %1055 = vmatprep.subr.mxu0 0.0
    %1056 = vmatpush1.msra.mxu0 0.0
    %1057 = vmatprep.subr.mxu0 0.0
    %1058 = vmatpush1.msra.mxu0 0.0
    %1059 = vmatprep.subr.mxu0 0.0
    %1060 = vmatpush1.msra.mxu0 0.0
    %1061 = vmatprep.subr.mxu0 0.0
    %1062 = vmatpush1.msra.mxu0 0.0
    %1063 = vmatprep.mubr.f32.mxu0 0.0
    %1064 = vmatmul.mubr.f32.gmra.mrb[0].mxu0 %v994
    %v1065 = vpop.f32.mrb[0].mxu0
    %v1066 = vadd.f32 0.0, %v1065
    %v1067 = vpop.f32.mrb[0].mxu0
    %1068 = vmatprep.mubr.f32.mxu0 0.0
    %1069 = vmatmul.mubr.f32.gmra.mrb[0].mxu0 %v997
    %v1070 = vpop.f32.mrb[0].mxu0
    %v1071 = vadd.f32 0.0, %v1070
    %v1072 = vpop.f32.mrb[0].mxu0
    %1073 = vdwg.mxu0
    %1076 = vrot.lane.b32.xlu0 %v666, 8
    %v1077 = vpop.permute.xlu0 %1076
    %1078 = vrot.lane.b32.xlu0 %v671, 8
    %v1079 = vpop.permute.xlu0 %1078
    %1084 = vrot.lane.b32.xlu0 %v866, 16
    %v1085 = vpop.permute.xlu0 %1084
    %1086 = vrot.lane.b32.xlu0 %v871, 16
    %v1087 = vpop.permute.xlu0 %1086
    %1092 = vrot.lane.b32.xlu0 %v1066, 24
    %v1093 = vpop.permute.xlu0 %1092
    %1094 = vrot.lane.b32.xlu0 %v1071, 24
    %v1095 = vpop.permute.xlu0 %1094
    %v1098 = vsel %vm280, %v466, %v1077
    %v1099 = vsel %vm280, %v471, %v1079
    %v1100 = vsel %vm364, %v1098, %v1085
    %v1101 = vsel %vm364, %v1099, %v1087
    %vm1102 = vcmask 195584
    %v1103 = vsel %vm1102, %v1100, %v1093
    %v1104 = vsel %vm1102, %v1101, %v1095
    %v1105 = vlaneseq
    %v1106 = vshrl.u32 %v1105, 7
    %v1107 = vsub.s32 0, %v1106
    %v1108 = vrot.slane %v181, %v1107
    %1113 = vrot.lane.b32.xlu0 %v164, 32
    %v1114 = vpop.permute.xlu0 %1113
    %1115 = vrot.lane.b32.xlu0 %v165, 32
    %v1116 = vpop.permute.xlu0 %1115
    %1117 = vrot.lane.b32.xlu0 %v166, 32
    %v1118 = vpop.permute.xlu0 %1117
    %1119 = vrot.lane.b32.xlu0 %v167, 32
    %v1120 = vpop.permute.xlu0 %1119
    %v1126 = vsel %vm192, %v1103, 0
    %v1129 = vsel %vm192, %v1104, 0
    %1131 = vmatprep.subr.mxu0 0.0
    %1132 = vmatpush1.msra.mxu0 %v1114
    %1133 = vmatprep.subr.mxu0 0.0
    %1134 = vmatpush1.msra.mxu0 %v1116
    %1135 = vmatprep.subr.mxu0 0.0
    %1136 = vmatpush1.msra.mxu0 %v1118
    %1137 = vmatprep.subr.mxu0 0.0
    %1138 = vmatpush1.msra.mxu0 %v1120
    %1139 = vmatprep.subr.mxu0 0.0
    %1140 = vmatpush1.msra.mxu0 0.0
    %1141 = vmatprep.subr.mxu0 0.0
    %1142 = vmatpush1.msra.mxu0 0.0
    %1143 = vmatprep.subr.mxu0 0.0
    %1144 = vmatpush1.msra.mxu0 0.0
    %1145 = vmatprep.subr.mxu0 0.0
    %1146 = vmatpush1.msra.mxu0 0.0
    %1147 = vmatprep.subr.mxu0 0.0
    %1148 = vmatpush1.msra.mxu0 0.0
    %1149 = vmatprep.subr.mxu0 0.0
    %1150 = vmatpush1.msra.mxu0 0.0
    %1151 = vmatprep.subr.mxu0 0.0
    %1152 = vmatpush1.msra.mxu0 0.0
    %1153 = vmatprep.subr.mxu0 0.0
    %1154 = vmatpush1.msra.mxu0 0.0
    %1155 = vmatprep.subr.mxu0 0.0
    %1156 = vmatpush1.msra.mxu0 0.0
    %1157 = vmatprep.subr.mxu0 0.0
    %1158 = vmatpush1.msra.mxu0 0.0
    %1159 = vmatprep.subr.mxu0 0.0
    %1160 = vmatpush1.msra.mxu0 0.0
    %1161 = vmatprep.subr.mxu0 0.0
    %1162 = vmatpush1.msra.mxu0 0.0
    %1163 = vmatprep.subr.mxu0 0.0
    %1164 = vmatpush1.msra.mxu0 0.0
    %1165 = vmatprep.subr.mxu0 0.0
    %1166 = vmatpush1.msra.mxu0 0.0
    %1167 = vmatprep.subr.mxu0 0.0
    %1168 = vmatpush1.msra.mxu0 0.0
    %1169 = vmatprep.subr.mxu0 0.0
    %1170 = vmatpush1.msra.mxu0 0.0
    %1171 = vmatprep.subr.mxu0 0.0
    %1172 = vmatpush1.msra.mxu0 0.0
    %1173 = vmatprep.subr.mxu0 0.0
    %1174 = vmatpush1.msra.mxu0 0.0
    %1175 = vmatprep.subr.mxu0 0.0
    %1176 = vmatpush1.msra.mxu0 0.0
    %1177 = vmatprep.subr.mxu0 0.0
    %1178 = vmatpush1.msra.mxu0 0.0
    %1179 = vmatprep.subr.mxu0 0.0
    %1180 = vmatpush1.msra.mxu0 0.0
    %1181 = vmatprep.subr.mxu0 0.0
    %1182 = vmatpush1.msra.mxu0 0.0
    %1183 = vmatprep.subr.mxu0 0.0
    %1184 = vmatpush1.msra.mxu0 0.0
    %1185 = vmatprep.subr.mxu0 0.0
    %1186 = vmatpush1.msra.mxu0 0.0
    %1187 = vmatprep.subr.mxu0 0.0
    %1188 = vmatpush1.msra.mxu0 0.0
    %1189 = vmatprep.subr.mxu0 0.0
    %1190 = vmatpush1.msra.mxu0 0.0
    %1191 = vmatprep.subr.mxu0 0.0
    %1192 = vmatpush1.msra.mxu0 0.0
    %1193 = vmatprep.subr.mxu0 0.0
    %1194 = vmatpush1.msra.mxu0 0.0
    %1195 = vmatprep.mubr.f32.mxu0 0.0
    %1196 = vmatmul.mubr.f32.gmra.mrb[0].mxu0 %v1126
    %v1197 = vpop.f32.mrb[0].mxu0
    %v1198 = vadd.f32 %v1108, %v1197
    %v1199 = vpop.f32.mrb[0].mxu0
    %1200 = vmatprep.mubr.f32.mxu0 0.0
    %1201 = vmatmul.mubr.f32.gmra.mrb[0].mxu0 %v1129
    %v1202 = vpop.f32.mrb[0].mxu0
    %v1203 = vadd.f32 %v1108, %v1202
    %v1204 = vpop.f32.mrb[0].mxu0
    %1205 = vdwg.mxu0
    %v1206 = vadd.f32 %v156, %v1198
    %v1207 = vadd.f32 %v161, %v1203
    %v1208 = vsel %vm192, %v1206, 0.0
    %1209 = vadd.xlane.f32.xlu0 %v1208
    %v1210 = vpop.xlane.xlu0 %1209
    %v1211 = vsel %vm192, %v1207, 0.0
    %1212 = vadd.xlane.f32.xlu0 %v1211
    %v1213 = vpop.xlane.xlu0 %1212
    %v1214 = vrcp.pop 32.0
    %v1215 = vmul.f32 %v1210, %v1214
    %v1216 = vmul.f32 %v1213, %v1214
    %v1217 = vsub.f32 %v1206, %v1215
    %v1218 = vsub.f32 %v1207, %v1216
    %v1219 = vmul.f32 %v1217, %v1217
    %v1220 = vmul.f32 %v1218, %v1218
    %v1221 = vsel %vm192, %v1219, 0.0
    %1222 = vadd.xlane.f32.xlu0 %v1221
    %v1223 = vpop.xlane.xlu0 %1222
    %v1224 = vsel %vm192, %v1220, 0.0
    %1225 = vadd.xlane.f32.xlu0 %v1224
    %v1226 = vpop.xlane.xlu0 %1225
    %v1227 = vmul.f32 %v1223, %v1214
    %v1228 = vmul.f32 %v1226, %v1214
    %v1229 = vadd.f32 %v1227, 1e-05
    %v1230 = vadd.f32 %v1228, 1e-05
    %v1231 = vrsqrt.pop %v1229
    %v1232 = vrsqrt.pop %v1230
    %v1233 = vmul.f32 %v1217, %v1231
    %v1234 = vmul.f32 %v1218, %v1232
    %v1235 = vlaneseq
    %v1236 = vshrl.u32 %v1235, 7
    %v1237 = vsub.s32 0, %v1236
    %v1238 = vrot.slane %v184, %v1237
    %v1239 = vmul.f32 %v1233, %v1238
    %v1240 = vmul.f32 %v1234, %v1238
    %v1241 = vlaneseq
    %v1242 = vshrl.u32 %v1241, 7
    %v1243 = vsub.s32 0, %v1242
    %v1244 = vrot.slane %v185, %v1243
    %v1245 = vadd.f32 %v1239, %v1244
    %v1246 = vadd.f32 %v1240, %v1244
    %v1247 = vlaneseq
    %v1248 = vshrl.u32 %v1247, 7
    %v1249 = vsub.s32 0, %v1248
    %v1250 = vrot.slane %v182, %v1249
    %v1252 = vsel %vm192, %v1245, 0
    %v1255 = vsel %vm192, %v1246, 0
    %1257 = vmatprep.subr.mxu0 0.0
    %1258 = vmatpush1.msra.mxu0 %v168
    %1259 = vmatprep.subr.mxu0 0.0
    %1260 = vmatpush1.msra.mxu0 %v169
    %1261 = vmatprep.subr.mxu0 0.0
    %1262 = vmatpush1.msra.mxu0 %v170
    %1263 = vmatprep.subr.mxu0 0.0
    %1264 = vmatpush1.msra.mxu0 %v171
    %1265 = vmatprep.subr.mxu0 0.0
    %1266 = vmatpush1.msra.mxu0 0.0
    %1267 = vmatprep.subr.mxu0 0.0
    %1268 = vmatpush1.msra.mxu0 0.0
    %1269 = vmatprep.subr.mxu0 0.0
    %1270 = vmatpush1.msra.mxu0 0.0
    %1271 = vmatprep.subr.mxu0 0.0
    %1272 = vmatpush1.msra.mxu0 0.0
    %1273 = vmatprep.subr.mxu0 0.0
    %1274 = vmatpush1.msra.mxu0 0.0
    %1275 = vmatprep.subr.mxu0 0.0
    %1276 = vmatpush1.msra.mxu0 0.0
    %1277 = vmatprep.subr.mxu0 0.0
    %1278 = vmatpush1.msra.mxu0 0.0
    %1279 = vmatprep.subr.mxu0 0.0
    %1280 = vmatpush1.msra.mxu0 0.0
    %1281 = vmatprep.subr.mxu0 0.0
    %1282 = vmatpush1.msra.mxu0 0.0
    %1283 = vmatprep.subr.mxu0 0.0
    %1284 = vmatpush1.msra.mxu0 0.0
    %1285 = vmatprep.subr.mxu0 0.0
    %1286 = vmatpush1.msra.mxu0 0.0
    %1287 = vmatprep.subr.mxu0 0.0
    %1288 = vmatpush1.msra.mxu0 0.0
    %1289 = vmatprep.subr.mxu0 0.0
    %1290 = vmatpush1.msra.mxu0 0.0
    %1291 = vmatprep.subr.mxu0 0.0
    %1292 = vmatpush1.msra.mxu0 0.0
    %1293 = vmatprep.subr.mxu0 0.0
    %1294 = vmatpush1.msra.mxu0 0.0
    %1295 = vmatprep.subr.mxu0 0.0
    %1296 = vmatpush1.msra.mxu0 0.0
    %1297 = vmatprep.subr.mxu0 0.0
    %1298 = vmatpush1.msra.mxu0 0.0
    %1299 = vmatprep.subr.mxu0 0.0
    %1300 = vmatpush1.msra.mxu0 0.0
    %1301 = vmatprep.subr.mxu0 0.0
    %1302 = vmatpush1.msra.mxu0 0.0
    %1303 = vmatprep.subr.mxu0 0.0
    %1304 = vmatpush1.msra.mxu0 0.0
    %1305 = vmatprep.subr.mxu0 0.0
    %1306 = vmatpush1.msra.mxu0 0.0
    %1307 = vmatprep.subr.mxu0 0.0
    %1308 = vmatpush1.msra.mxu0 0.0
    %1309 = vmatprep.subr.mxu0 0.0
    %1310 = vmatpush1.msra.mxu0 0.0
    %1311 = vmatprep.subr.mxu0 0.0
    %1312 = vmatpush1.msra.mxu0 0.0
    %1313 = vmatprep.subr.mxu0 0.0
    %1314 = vmatpush1.msra.mxu0 0.0
    %1315 = vmatprep.subr.mxu0 0.0
    %1316 = vmatpush1.msra.mxu0 0.0
    %1317 = vmatprep.subr.mxu0 0.0
    %1318 = vmatpush1.msra.mxu0 0.0
    %1319 = vmatprep.subr.mxu0 0.0
    %1320 = vmatpush1.msra.mxu0 0.0
    %1321 = vmatprep.mubr.f32.mxu0 0.0
    %1322 = vmatmul.mubr.f32.gmra.mrb[0].mxu0 %v1252
    %v1323 = vpop.f32.mrb[0].mxu0
    %v1324 = vadd.f32 %v1250, %v1323
    %v1325 = vpop.f32.mrb[0].mxu0
    %1326 = vmatprep.mubr.f32.mxu0 0.0
    %1327 = vmatmul.mubr.f32.gmra.mrb[0].mxu0 %v1255
    %v1328 = vpop.f32.mrb[0].mxu0
    %v1329 = vadd.f32 %v1250, %v1328
    %v1330 = vpop.f32.mrb[0].mxu0
    %1331 = vdwg.mxu0
    %v1332 = vmax.f32 %v1324, 0.0
    %v1333 = vmax.f32 %v1329, 0.0
    %v1334 = vlaneseq
    %v1335 = vshrl.u32 %v1334, 7
    %v1336 = vsub.s32 0, %v1335
    %v1337 = vrot.slane %v183, %v1336
    %v1339 = vsel %vm82, %v1332, 0
    %v1342 = vsel %vm82, %v1333, 0
    %1344 = vmatprep.subr.mxu0 0.0
    %1345 = vmatpush1.msra.mxu0 %v172
    %1346 = vmatprep.subr.mxu0 0.0
    %1347 = vmatpush1.msra.mxu0 %v173
    %1348 = vmatprep.subr.mxu0 0.0
    %1349 = vmatpush1.msra.mxu0 %v174
    %1350 = vmatprep.subr.mxu0 0.0
    %1351 = vmatpush1.msra.mxu0 %v175
    %1352 = vmatprep.subr.mxu0 0.0
    %1353 = vmatpush1.msra.mxu0 %v176
    %1354 = vmatprep.subr.mxu0 0.0
    %1355 = vmatpush1.msra.mxu0 %v177
    %1356 = vmatprep.subr.mxu0 0.0
    %1357 = vmatpush1.msra.mxu0 %v178
    %1358 = vmatprep.subr.mxu0 0.0
    %1359 = vmatpush1.msra.mxu0 %v179
    %1360 = vmatprep.subr.mxu0 0.0
    %1361 = vmatpush1.msra.mxu0 0.0
    %1362 = vmatprep.subr.mxu0 0.0
    %1363 = vmatpush1.msra.mxu0 0.0
    %1364 = vmatprep.subr.mxu0 0.0
    %1365 = vmatpush1.msra.mxu0 0.0
    %1366 = vmatprep.subr.mxu0 0.0
    %1367 = vmatpush1.msra.mxu0 0.0
    %1368 = vmatprep.subr.mxu0 0.0
    %1369 = vmatpush1.msra.mxu0 0.0
    %1370 = vmatprep.subr.mxu0 0.0
    %1371 = vmatpush1.msra.mxu0 0.0
    %1372 = vmatprep.subr.mxu0 0.0
    %1373 = vmatpush1.msra.mxu0 0.0
    %1374 = vmatprep.subr.mxu0 0.0
    %1375 = vmatpush1.msra.mxu0 0.0
    %1376 = vmatprep.subr.mxu0 0.0
    %1377 = vmatpush1.msra.mxu0 0.0
    %1378 = vmatprep.subr.mxu0 0.0
    %1379 = vmatpush1.msra.mxu0 0.0
    %1380 = vmatprep.subr.mxu0 0.0
    %1381 = vmatpush1.msra.mxu0 0.0
    %1382 = vmatprep.subr.mxu0 0.0
    %1383 = vmatpush1.msra.mxu0 0.0
    %1384 = vmatprep.subr.mxu0 0.0
    %1385 = vmatpush1.msra.mxu0 0.0
    %1386 = vmatprep.subr.mxu0 0.0
    %1387 = vmatpush1.msra.mxu0 0.0
    %1388 = vmatprep.subr.mxu0 0.0
    %1389 = vmatpush1.msra.mxu0 0.0
    %1390 = vmatprep.subr.mxu0 0.0
    %1391 = vmatpush1.msra.mxu0 0.0
    %1392 = vmatprep.subr.mxu0 0.0
    %1393 = vmatpush1.msra.mxu0 0.0
    %1394 = vmatprep.subr.mxu0 0.0
    %1395 = vmatpush1.msra.mxu0 0.0
    %1396 = vmatprep.subr.mxu0 0.0
    %1397 = vmatpush1.msra.mxu0 0.0
    %1398 = vmatprep.subr.mxu0 0.0
    %1399 = vmatpush1.msra.mxu0 0.0
    %1400 = vmatprep.subr.mxu0 0.0
    %1401 = vmatpush1.msra.mxu0 0.0
    %1402 = vmatprep.subr.mxu0 0.0
    %1403 = vmatpush1.msra.mxu0 0.0
    %1404 = vmatprep.subr.mxu0 0.0
    %1405 = vmatpush1.msra.mxu0 0.0
    %1406 = vmatprep.subr.mxu0 0.0
    %1407 = vmatpush1.msra.mxu0 0.0
    %1408 = vmatprep.mubr.f32.mxu0 0.0
    %1409 = vmatmul.mubr.f32.gmra.mrb[0].mxu0 %v1339
    %v1410 = vpop.f32.mrb[0].mxu0
    %v1411 = vadd.f32 %v1337, %v1410
    %v1412 = vpop.f32.mrb[0].mxu0
    %1413 = vmatprep.mubr.f32.mxu0 0.0
    %1414 = vmatmul.mubr.f32.gmra.mrb[0].mxu0 %v1342
    %v1415 = vpop.f32.mrb[0].mxu0
    %v1416 = vadd.f32 %v1337, %v1415
    %v1417 = vpop.f32.mrb[0].mxu0
    %1418 = vdwg.mxu0
    %v1419 = vadd.f32 %v1245, %v1411
    %v1420 = vadd.f32 %v1246, %v1416
    %v1421 = vsel %vm192, %v1419, 0.0
    %1422 = vadd.xlane.f32.xlu0 %v1421
    %v1423 = vpop.xlane.xlu0 %1422
    %v1424 = vsel %vm192, %v1420, 0.0
    %1425 = vadd.xlane.f32.xlu0 %v1424
    %v1426 = vpop.xlane.xlu0 %1425
    %v1427 = vmul.f32 %v1423, %v1214
    %v1428 = vmul.f32 %v1426, %v1214
    %v1429 = vsub.f32 %v1419, %v1427
    %v1430 = vsub.f32 %v1420, %v1428
    %v1431 = vmul.f32 %v1429, %v1429
    %v1432 = vmul.f32 %v1430, %v1430
    %v1433 = vsel %vm192, %v1431, 0.0
    %1434 = vadd.xlane.f32.xlu0 %v1433
    %v1435 = vpop.xlane.xlu0 %1434
    %v1436 = vsel %vm192, %v1432, 0.0
    %1437 = vadd.xlane.f32.xlu0 %v1436
    %v1438 = vpop.xlane.xlu0 %1437
    %v1439 = vmul.f32 %v1435, %v1214
    %v1440 = vmul.f32 %v1438, %v1214
    %v1441 = vadd.f32 %v1439, 1e-05
    %v1442 = vadd.f32 %v1440, 1e-05
    %v1443 = vrsqrt.pop %v1441
    %v1444 = vrsqrt.pop %v1442
    %v1445 = vmul.f32 %v1429, %v1443
    %v1446 = vmul.f32 %v1430, %v1444
    %v1447 = vlaneseq
    %v1448 = vshrl.u32 %v1447, 7
    %v1449 = vsub.s32 0, %v1448
    %v1450 = vrot.slane %v186, %v1449
    %v1451 = vmul.f32 %v1445, %v1450
    %v1452 = vmul.f32 %v1446, %v1450
    %v1453 = vlaneseq
    %v1454 = vshrl.u32 %v1453, 7
    %v1455 = vsub.s32 0, %v1454
    %v1456 = vrot.slane %v187, %v1455
    %v1457 = vadd.f32 %v1451, %v1456
    %v1458 = vadd.f32 %v1452, %v1456
    %v1459 = vld [vmem:[%s3 + $0x8] sm:$0xff]
    %v1460 = vld [vmem:[%s3 + $0x10] sm:$0xff]
    %v1461 = vld [vmem:[%s3 + $0x20] sm:$0xff]
    %v1462 = vld [vmem:[%s3 + $0x28] sm:$0xff]
    %v1463 = vld [vmem:[%s3 + $0x38] sm:$0xff]
    %v1464 = vld [vmem:[%s3 + $0x40] sm:$0xff]
    %v1465 = vld [vmem:[%s3 + $0x50] sm:$0xff]
    %v1466 = vld [vmem:[%s3 + $0x58] sm:$0xff]
    %v1467 = vld [vmem:[#allocation7 + $0x9] sm:$0x1]
    %v1468 = vld [vmem:[#allocation7 + $0xa] sm:$0x1]
    %v1469 = vld [vmem:[#allocation7 + $0xb] sm:$0x1]
    %v1470 = vld [vmem:[#allocation7 + $0xc] sm:$0x1]
    %v1471 = vld [vmem:[#allocation7 + $0xd] sm:$0x1]
    %v1472 = vld [vmem:[#allocation7 + $0xe] sm:$0x1]
    %v1473 = vld [vmem:[#allocation7 + $0xf] sm:$0x1]
    %v1474 = vld [vmem:[#allocation7 + $0x10] sm:$0x1]
    %v1475 = vlaneseq
    %v1476 = vshrl.u32 %v1475, 7
    %v1477 = vsub.s32 0, %v1476
    %v1478 = vrot.slane %v1467, %v1477
    %1487 = vrot.lane.b32.xlu0 %v1459, 64
    %v1488 = vpop.permute.xlu0 %1487
    %1489 = vrot.lane.b32.xlu0 %v1460, 64
    %v1490 = vpop.permute.xlu0 %1489
    %1491 = vrot.lane.b32.xlu0 %v1461, 64
    %v1492 = vpop.permute.xlu0 %1491
    %1493 = vrot.lane.b32.xlu0 %v1462, 64
    %v1494 = vpop.permute.xlu0 %1493
    %1495 = vrot.lane.b32.xlu0 %v1463, 64
    %v1496 = vpop.permute.xlu0 %1495
    %1497 = vrot.lane.b32.xlu0 %v1464, 64
    %v1498 = vpop.permute.xlu0 %1497
    %1499 = vrot.lane.b32.xlu0 %v1465, 64
    %v1500 = vpop.permute.xlu0 %1499
    %1501 = vrot.lane.b32.xlu0 %v1466, 64
    %v1502 = vpop.permute.xlu0 %1501
    %v1503 = vsel %vm82, %v1488, %v1490
    %v1504 = vsel %vm82, %v1492, %v1494
    %v1505 = vsel %vm82, %v1496, %v1498
    %v1506 = vsel %vm82, %v1500, %v1502
    %v1512 = vsel %vm192, %v1457, 0
    %v1515 = vsel %vm192, %v1458, 0
    %1517 = vmatprep.subr.mxu0 0.0
    %1518 = vmatpush1.msra.mxu0 %v1503
    %1519 = vmatprep.subr.mxu0 0.0
    %1520 = vmatpush1.msra.mxu0 %v1504
    %1521 = vmatprep.subr.mxu0 0.0
    %1522 = vmatpush1.msra.mxu0 %v1505
    %1523 = vmatprep.subr.mxu0 0.0
    %1524 = vmatpush1.msra.mxu0 %v1506
    %1525 = vmatprep.subr.mxu0 0.0
    %1526 = vmatpush1.msra.mxu0 0.0
    %1527 = vmatprep.subr.mxu0 0.0
    %1528 = vmatpush1.msra.mxu0 0.0
    %1529 = vmatprep.subr.mxu0 0.0
    %1530 = vmatpush1.msra.mxu0 0.0
    %1531 = vmatprep.subr.mxu0 0.0
    %1532 = vmatpush1.msra.mxu0 0.0
    %1533 = vmatprep.subr.mxu0 0.0
    %1534 = vmatpush1.msra.mxu0 0.0
    %1535 = vmatprep.subr.mxu0 0.0
    %1536 = vmatpush1.msra.mxu0 0.0
    %1537 = vmatprep.subr.mxu0 0.0
    %1538 = vmatpush1.msra.mxu0 0.0
    %1539 = vmatprep.subr.mxu0 0.0
    %1540 = vmatpush1.msra.mxu0 0.0
    %1541 = vmatprep.subr.mxu0 0.0
    %1542 = vmatpush1.msra.mxu0 0.0
    %1543 = vmatprep.subr.mxu0 0.0
    %1544 = vmatpush1.msra.mxu0 0.0
    %1545 = vmatprep.subr.mxu0 0.0
    %1546 = vmatpush1.msra.mxu0 0.0
    %1547 = vmatprep.subr.mxu0 0.0
    %1548 = vmatpush1.msra.mxu0 0.0
    %1549 = vmatprep.subr.mxu0 0.0
    %1550 = vmatpush1.msra.mxu0 0.0
    %1551 = vmatprep.subr.mxu0 0.0
    %1552 = vmatpush1.msra.mxu0 0.0
    %1553 = vmatprep.subr.mxu0 0.0
    %1554 = vmatpush1.msra.mxu0 0.0
    %1555 = vmatprep.subr.mxu0 0.0
    %1556 = vmatpush1.msra.mxu0 0.0
    %1557 = vmatprep.subr.mxu0 0.0
    %1558 = vmatpush1.msra.mxu0 0.0
    %1559 = vmatprep.subr.mxu0 0.0
    %1560 = vmatpush1.msra.mxu0 0.0
    %1561 = vmatprep.subr.mxu0 0.0
    %1562 = vmatpush1.msra.mxu0 0.0
    %1563 = vmatprep.subr.mxu0 0.0
    %1564 = vmatpush1.msra.mxu0 0.0
    %1565 = vmatprep.subr.mxu0 0.0
    %1566 = vmatpush1.msra.mxu0 0.0
    %1567 = vmatprep.subr.mxu0 0.0
    %1568 = vmatpush1.msra.mxu0 0.0
    %1569 = vmatprep.subr.mxu0 0.0
    %1570 = vmatpush1.msra.mxu0 0.0
    %1571 = vmatprep.subr.mxu0 0.0
    %1572 = vmatpush1.msra.mxu0 0.0
    %1573 = vmatprep.subr.mxu0 0.0
    %1574 = vmatpush1.msra.mxu0 0.0
    %1575 = vmatprep.subr.mxu0 0.0
    %1576 = vmatpush1.msra.mxu0 0.0
    %1577 = vmatprep.subr.mxu0 0.0
    %1578 = vmatpush1.msra.mxu0 0.0
    %1579 = vmatprep.subr.mxu0 0.0
    %1580 = vmatpush1.msra.mxu0 0.0
    %1581 = vmatprep.mubr.f32.mxu0 0.0
    %1582 = vmatmul.mubr.f32.gmra.mrb[0].mxu0 %v1512
    %v1583 = vpop.f32.mrb[0].mxu0
    %v1584 = vadd.f32 %v1478, %v1583
    %v1585 = vpop.f32.mrb[0].mxu0
    %1586 = vmatprep.mubr.f32.mxu0 0.0
    %1587 = vmatmul.mubr.f32.gmra.mrb[0].mxu0 %v1515
    %v1588 = vpop.f32.mrb[0].mxu0
    %v1589 = vadd.f32 %v1478, %v1588
    %v1590 = vpop.f32.mrb[0].mxu0
    %1591 = vdwg.mxu0
    %1594 = vrot.lane.b32.xlu0 %v1584, 96
    %v1595 = vpop.permute.xlu0 %1594
    %1596 = vrot.lane.b32.xlu0 %v1589, 96
    %v1597 = vpop.permute.xlu0 %1596
    %v1598 = vsel %vm280, %v1584, 0
    %v1600 = vsel %vm280, %v1589, 0
    %v1602 = vsel %vm280, %v1595, 0
    %v1604 = vsel %vm280, %v1597, 0
    %1606 = vmatprep.subr.mxu0 0.0
    %1607 = vmatpush1.xpose.msra.mxu0 %v1602
    %1608 = vmatprep.subr.mxu0 0.0
    %1609 = vmatpush1.xpose.msra.mxu0 %v1604
    %1610 = vmatprep.subr.mxu0 0.0
    %1611 = vmatpush1.xpose.msra.mxu0 0.0
    %1612 = vmatprep.subr.mxu0 0.0
    %1613 = vmatpush1.xpose.msra.mxu0 0.0
    %1614 = vmatprep.subr.mxu0 0.0
    %1615 = vmatpush1.xpose.msra.mxu0 0.0
    %1616 = vmatprep.subr.mxu0 0.0
    %1617 = vmatpush1.xpose.msra.mxu0 0.0
    %1618 = vmatprep.subr.mxu0 0.0
    %1619 = vmatpush1.xpose.msra.mxu0 0.0
    %1620 = vmatprep.subr.mxu0 0.0
    %1621 = vmatpush1.xpose.msra.mxu0 0.0
    %1622 = vmatprep.subr.mxu0 0.0
    %1623 = vmatpush1.xpose.msra.mxu0 0.0
    %1624 = vmatprep.subr.mxu0 0.0
    %1625 = vmatpush1.xpose.msra.mxu0 0.0
    %1626 = vmatprep.subr.mxu0 0.0
    %1627 = vmatpush1.xpose.msra.mxu0 0.0
    %1628 = vmatprep.subr.mxu0 0.0
    %1629 = vmatpush1.xpose.msra.mxu0 0.0
    %1630 = vmatprep.subr.mxu0 0.0
    %1631 = vmatpush1.xpose.msra.mxu0 0.0
    %1632 = vmatprep.subr.mxu0 0.0
    %1633 = vmatpush1.xpose.msra.mxu0 0.0
    %1634 = vmatprep.subr.mxu0 0.0
    %1635 = vmatpush1.xpose.msra.mxu0 0.0
    %1636 = vmatprep.subr.mxu0 0.0
    %1637 = vmatpush1.xpose.msra.mxu0 0.0
    %1638 = vmatprep.subr.mxu0 0.0
    %1639 = vmatpush1.xpose.msra.mxu0 0.0
    %1640 = vmatprep.subr.mxu0 0.0
    %1641 = vmatpush1.xpose.msra.mxu0 0.0
    %1642 = vmatprep.subr.mxu0 0.0
    %1643 = vmatpush1.xpose.msra.mxu0 0.0
    %1644 = vmatprep.subr.mxu0 0.0
    %1645 = vmatpush1.xpose.msra.mxu0 0.0
    %1646 = vmatprep.subr.mxu0 0.0
    %1647 = vmatpush1.xpose.msra.mxu0 0.0
    %1648 = vmatprep.subr.mxu0 0.0
    %1649 = vmatpush1.xpose.msra.mxu0 0.0
    %1650 = vmatprep.subr.mxu0 0.0
    %1651 = vmatpush1.xpose.msra.mxu0 0.0
    %1652 = vmatprep.subr.mxu0 0.0
    %1653 = vmatpush1.xpose.msra.mxu0 0.0
    %1654 = vmatprep.subr.mxu0 0.0
    %1655 = vmatpush1.xpose.msra.mxu0 0.0
    %1656 = vmatprep.subr.mxu0 0.0
    %1657 = vmatpush1.xpose.msra.mxu0 0.0
    %1658 = vmatprep.subr.mxu0 0.0
    %1659 = vmatpush1.xpose.msra.mxu0 0.0
    %1660 = vmatprep.subr.mxu0 0.0
    %1661 = vmatpush1.xpose.msra.mxu0 0.0
    %1662 = vmatprep.subr.mxu0 0.0
    %1663 = vmatpush1.xpose.msra.mxu0 0.0
    %1664 = vmatprep.subr.mxu0 0.0
    %1665 = vmatpush1.xpose.msra.mxu0 0.0
    %1666 = vmatprep.subr.mxu0 0.0
    %1667 = vmatpush1.xpose.msra.mxu0 0.0
    %1668 = vmatprep.subr.mxu0 0.0
    %1669 = vmatpush1.xpose.msra.mxu0 0.0
    %1670 = vmatprep.mubr.f32.mxu0 0.0
    %1671 = vmatmul.mubr.f32.gmra.mrb[0].mxu0 %v1598
    %v1672 = vpop.f32.mrb[0].mxu0
    %v1673 = vadd.f32 %v65, %v1672
    %v1674 = vpop.f32.mrb[0].mxu0
    %1675 = vmatprep.mubr.f32.mxu0 0.0
    %1676 = vmatmul.mubr.f32.gmra.mrb[0].mxu0 %v1600
    %v1677 = vpop.f32.mrb[0].mxu0
    %v1678 = vadd.f32 %v66, %v1677
    %v1679 = vpop.f32.mrb[0].mxu0
    %1680 = vdwg.mxu0
    %v1681 = vsel %vm364, %v1673, -inf
    %1682 = vmax.xlane.f32.xlu0 %v1681
    %v1683 = vpop.xlane.xlu0 %1682
    %v1684 = vsel %vm364, %v1678, -inf
    %1685 = vmax.xlane.f32.xlu0 %v1684
    %v1686 = vpop.xlane.xlu0 %1685
    %v1687 = vsub.f32 %v1673, %v1683
    %v1688 = vsub.f32 %v1678, %v1686
    %v1689 = vmul.f32 %v1687, 1.442695
    %v1690 = vpow.pop %v1689
    %v1691 = vmul.f32 %v1688, 1.442695
    %v1692 = vpow.pop %v1691
    %v1693 = vsel %vm364, %v1690, 0.0
    %1694 = vadd.xlane.f32.xlu0 %v1693
    %v1695 = vpop.xlane.xlu0 %1694
    %v1696 = vsel %vm364, %v1692, 0.0
    %1697 = vadd.xlane.f32.xlu0 %v1696
    %v1698 = vpop.xlane.xlu0 %1697
    %v1699 = vrcp.pop %v1695
    %v1700 = vrcp.pop %v1698
    %v1701 = vmul.f32 %v1690, %v1699
    %v1702 = vmul.f32 %v1692, %v1700
    %1703 = vrot.lane.b32.xlu0 %v1584, 64
    %v1704 = vpop.permute.xlu0 %1703
    %1705 = vrot.lane.b32.xlu0 %v1589, 64
    %v1706 = vpop.permute.xlu0 %1705
    %v1710 = vsel %vm364, %v1701, 0
    %v1713 = vsel %vm364, %v1702, 0
    %1715 = vmatprep.subr.mxu0 0.0
    %1716 = vmatpush1.msra.mxu0 %v1704
    %1717 = vmatprep.subr.mxu0 0.0
    %1718 = vmatpush1.msra.mxu0 %v1706
    %1719 = vmatprep.subr.mxu0 0.0
    %1720 = vmatpush1.msra.mxu0 0.0
    %1721 = vmatprep.subr.mxu0 0.0
    %1722 = vmatpush1.msra.mxu0 0.0
    %1723 = vmatprep.subr.mxu0 0.0
    %1724 = vmatpush1.msra.mxu0 0.0
    %1725 = vmatprep.subr.mxu0 0.0
    %1726 = vmatpush1.msra.mxu0 0.0
    %1727 = vmatprep.subr.mxu0 0.0
    %1728 = vmatpush1.msra.mxu0 0.0
    %1729 = vmatprep.subr.mxu0 0.0
    %1730 = vmatpush1.msra.mxu0 0.0
    %1731 = vmatprep.subr.mxu0 0.0
    %1732 = vmatpush1.msra.mxu0 0.0
    %1733 = vmatprep.subr.mxu0 0.0
    %1734 = vmatpush1.msra.mxu0 0.0
    %1735 = vmatprep.subr.mxu0 0.0
    %1736 = vmatpush1.msra.mxu0 0.0
    %1737 = vmatprep.subr.mxu0 0.0
    %1738 = vmatpush1.msra.mxu0 0.0
    %1739 = vmatprep.subr.mxu0 0.0
    %1740 = vmatpush1.msra.mxu0 0.0
    %1741 = vmatprep.subr.mxu0 0.0
    %1742 = vmatpush1.msra.mxu0 0.0
    %1743 = vmatprep.subr.mxu0 0.0
    %1744 = vmatpush1.msra.mxu0 0.0
    %1745 = vmatprep.subr.mxu0 0.0
    %1746 = vmatpush1.msra.mxu0 0.0
    %1747 = vmatprep.subr.mxu0 0.0
    %1748 = vmatpush1.msra.mxu0 0.0
    %1749 = vmatprep.subr.mxu0 0.0
    %1750 = vmatpush1.msra.mxu0 0.0
    %1751 = vmatprep.subr.mxu0 0.0
    %1752 = vmatpush1.msra.mxu0 0.0
    %1753 = vmatprep.subr.mxu0 0.0
    %1754 = vmatpush1.msra.mxu0 0.0
    %1755 = vmatprep.subr.mxu0 0.0
    %1756 = vmatpush1.msra.mxu0 0.0
    %1757 = vmatprep.subr.mxu0 0.0
    %1758 = vmatpush1.msra.mxu0 0.0
    %1759 = vmatprep.subr.mxu0 0.0
    %1760 = vmatpush1.msra.mxu0 0.0
    %1761 = vmatprep.subr.mxu0 0.0
    %1762 = vmatpush1.msra.mxu0 0.0
    %1763 = vmatprep.subr.mxu0 0.0
    %1764 = vmatpush1.msra.mxu0 0.0
    %1765 = vmatprep.subr.mxu0 0.0
    %1766 = vmatpush1.msra.mxu0 0.0
    %1767 = vmatprep.subr.mxu0 0.0
    %1768 = vmatpush1.msra.mxu0 0.0
    %1769 = vmatprep.subr.mxu0 0.0
    %1770 = vmatpush1.msra.mxu0 0.0
    %1771 = vmatprep.subr.mxu0 0.0
    %1772 = vmatpush1.msra.mxu0 0.0
    %1773 = vmatprep.subr.mxu0 0.0
    %1774 = vmatpush1.msra.mxu0 0.0
    %1775 = vmatprep.subr.mxu0 0.0
    %1776 = vmatpush1.msra.mxu0 0.0
    %1777 = vmatprep.subr.mxu0 0.0
    %1778 = vmatpush1.msra.mxu0 0.0
    %1779 = vmatprep.mubr.f32.mxu0 0.0
    %1780 = vmatmul.mubr.f32.gmra.mrb[0].mxu0 %v1710
    %v1781 = vpop.f32.mrb[0].mxu0
    %v1782 = vadd.f32 0.0, %v1781
    %v1783 = vpop.f32.mrb[0].mxu0
    %1784 = vmatprep.mubr.f32.mxu0 0.0
    %1785 = vmatmul.mubr.f32.gmra.mrb[0].mxu0 %v1713
    %v1786 = vpop.f32.mrb[0].mxu0
    %v1787 = vadd.f32 0.0, %v1786
    %v1788 = vpop.f32.mrb[0].mxu0
    %1789 = vdwg.mxu0
    %1790 = vrot.lane.b32.xlu0 %v1584, 120
    %v1791 = vpop.permute.xlu0 %1790
    %1792 = vrot.lane.b32.xlu0 %v1589, 120
    %v1793 = vpop.permute.xlu0 %1792
    %1794 = vrot.lane.b32.xlu0 %v1584, 88
    %v1795 = vpop.permute.xlu0 %1794
    %1796 = vrot.lane.b32.xlu0 %v1589, 88
    %v1797 = vpop.permute.xlu0 %1796
    %v1798 = vsel %vm280, %v1791, 0
    %v1800 = vsel %vm280, %v1793, 0
    %v1802 = vsel %vm280, %v1795, 0
    %v1804 = vsel %vm280, %v1797, 0
    %1806 = vmatprep.subr.mxu0 0.0
    %1807 = vmatpush1.xpose.msra.mxu0 %v1802
    %1808 = vmatprep.subr.mxu0 0.0
    %1809 = vmatpush1.xpose.msra.mxu0 %v1804
    %1810 = vmatprep.subr.mxu0 0.0
    %1811 = vmatpush1.xpose.msra.mxu0 0.0
    %1812 = vmatprep.subr.mxu0 0.0
    %1813 = vmatpush1.xpose.msra.mxu0 0.0
    %1814 = vmatprep.subr.mxu0 0.0
    %1815 = vmatpush1.xpose.msra.mxu0 0.0
    %1816 = vmatprep.subr.mxu0 0.0
    %1817 = vmatpush1.xpose.msra.mxu0 0.0
    %1818 = vmatprep.subr.mxu0 0.0
    %1819 = vmatpush1.xpose.msra.mxu0 0.0
    %1820 = vmatprep.subr.mxu0 0.0
    %1821 = vmatpush1.xpose.msra.mxu0 0.0
    %1822 = vmatprep.subr.mxu0 0.0
    %1823 = vmatpush1.xpose.msra.mxu0 0.0
    %1824 = vmatprep.subr.mxu0 0.0
    %1825 = vmatpush1.xpose.msra.mxu0 0.0
    %1826 = vmatprep.subr.mxu0 0.0
    %1827 = vmatpush1.xpose.msra.mxu0 0.0
    %1828 = vmatprep.subr.mxu0 0.0
    %1829 = vmatpush1.xpose.msra.mxu0 0.0
    %1830 = vmatprep.subr.mxu0 0.0
    %1831 = vmatpush1.xpose.msra.mxu0 0.0
    %1832 = vmatprep.subr.mxu0 0.0
    %1833 = vmatpush1.xpose.msra.mxu0 0.0
    %1834 = vmatprep.subr.mxu0 0.0
    %1835 = vmatpush1.xpose.msra.mxu0 0.0
    %1836 = vmatprep.subr.mxu0 0.0
    %1837 = vmatpush1.xpose.msra.mxu0 0.0
    %1838 = vmatprep.subr.mxu0 0.0
    %1839 = vmatpush1.xpose.msra.mxu0 0.0
    %1840 = vmatprep.subr.mxu0 0.0
    %1841 = vmatpush1.xpose.msra.mxu0 0.0
    %1842 = vmatprep.subr.mxu0 0.0
    %1843 = vmatpush1.xpose.msra.mxu0 0.0
    %1844 = vmatprep.subr.mxu0 0.0
    %1845 = vmatpush1.xpose.msra.mxu0 0.0
    %1846 = vmatprep.subr.mxu0 0.0
    %1847 = vmatpush1.xpose.msra.mxu0 0.0
    %1848 = vmatprep.subr.mxu0 0.0
    %1849 = vmatpush1.xpose.msra.mxu0 0.0
    %1850 = vmatprep.subr.mxu0 0.0
    %1851 = vmatpush1.xpose.msra.mxu0 0.0
    %1852 = vmatprep.subr.mxu0 0.0
    %1853 = vmatpush1.xpose.msra.mxu0 0.0
    %1854 = vmatprep.subr.mxu0 0.0
    %1855 = vmatpush1.xpose.msra.mxu0 0.0
    %1856 = vmatprep.subr.mxu0 0.0
    %1857 = vmatpush1.xpose.msra.mxu0 0.0
    %1858 = vmatprep.subr.mxu0 0.0
    %1859 = vmatpush1.xpose.msra.mxu0 0.0
    %1860 = vmatprep.subr.mxu0 0.0
    %1861 = vmatpush1.xpose.msra.mxu0 0.0
    %1862 = vmatprep.subr.mxu0 0.0
    %1863 = vmatpush1.xpose.msra.mxu0 0.0
    %1864 = vmatprep.subr.mxu0 0.0
    %1865 = vmatpush1.xpose.msra.mxu0 0.0
    %1866 = vmatprep.subr.mxu0 0.0
    %1867 = vmatpush1.xpose.msra.mxu0 0.0
    %1868 = vmatprep.subr.mxu0 0.0
    %1869 = vmatpush1.xpose.msra.mxu0 0.0
    %1870 = vmatprep.mubr.f32.mxu0 0.0
    %1871 = vmatmul.mubr.f32.gmra.mrb[0].mxu0 %v1798
    %v1872 = vpop.f32.mrb[0].mxu0
    %v1873 = vadd.f32 %v65, %v1872
    %v1874 = vpop.f32.mrb[0].mxu0
    %1875 = vmatprep.mubr.f32.mxu0 0.0
    %1876 = vmatmul.mubr.f32.gmra.mrb[0].mxu0 %v1800
    %v1877 = vpop.f32.mrb[0].mxu0
    %v1878 = vadd.f32 %v66, %v1877
    %v1879 = vpop.f32.mrb[0].mxu0
    %1880 = vdwg.mxu0
    %v1881 = vsel %vm364, %v1873, -inf
    %1882 = vmax.xlane.f32.xlu0 %v1881
    %v1883 = vpop.xlane.xlu0 %1882
    %v1884 = vsel %vm364, %v1878, -inf
    %1885 = vmax.xlane.f32.xlu0 %v1884
    %v1886 = vpop.xlane.xlu0 %1885
    %v1887 = vsub.f32 %v1873, %v1883
    %v1888 = vsub.f32 %v1878, %v1886
    %v1889 = vmul.f32 %v1887, 1.442695
    %v1890 = vpow.pop %v1889
    %v1891 = vmul.f32 %v1888, 1.442695
    %v1892 = vpow.pop %v1891
    %v1893 = vsel %vm364, %v1890, 0.0
    %1894 = vadd.xlane.f32.xlu0 %v1893
    %v1895 = vpop.xlane.xlu0 %1894
    %v1896 = vsel %vm364, %v1892, 0.0
    %1897 = vadd.xlane.f32.xlu0 %v1896
    %v1898 = vpop.xlane.xlu0 %1897
    %v1899 = vrcp.pop %v1895
    %v1900 = vrcp.pop %v1898
    %v1901 = vmul.f32 %v1890, %v1899
    %v1902 = vmul.f32 %v1892, %v1900
    %1903 = vrot.lane.b32.xlu0 %v1584, 56
    %v1904 = vpop.permute.xlu0 %1903
    %1905 = vrot.lane.b32.xlu0 %v1589, 56
    %v1906 = vpop.permute.xlu0 %1905
    %v1910 = vsel %vm364, %v1901, 0
    %v1913 = vsel %vm364, %v1902, 0
    %1915 = vmatprep.subr.mxu0 0.0
    %1916 = vmatpush1.msra.mxu0 %v1904
    %1917 = vmatprep.subr.mxu0 0.0
    %1918 = vmatpush1.msra.mxu0 %v1906
    %1919 = vmatprep.subr.mxu0 0.0
    %1920 = vmatpush1.msra.mxu0 0.0
    %1921 = vmatprep.subr.mxu0 0.0
    %1922 = vmatpush1.msra.mxu0 0.0
    %1923 = vmatprep.subr.mxu0 0.0
    %1924 = vmatpush1.msra.mxu0 0.0
    %1925 = vmatprep.subr.mxu0 0.0
    %1926 = vmatpush1.msra.mxu0 0.0
    %1927 = vmatprep.subr.mxu0 0.0
    %1928 = vmatpush1.msra.mxu0 0.0
    %1929 = vmatprep.subr.mxu0 0.0
    %1930 = vmatpush1.msra.mxu0 0.0
    %1931 = vmatprep.subr.mxu0 0.0
    %1932 = vmatpush1.msra.mxu0 0.0
    %1933 = vmatprep.subr.mxu0 0.0
    %1934 = vmatpush1.msra.mxu0 0.0
    %1935 = vmatprep.subr.mxu0 0.0
    %1936 = vmatpush1.msra.mxu0 0.0
    %1937 = vmatprep.subr.mxu0 0.0
    %1938 = vmatpush1.msra.mxu0 0.0
    %1939 = vmatprep.subr.mxu0 0.0
    %1940 = vmatpush1.msra.mxu0 0.0
    %1941 = vmatprep.subr.mxu0 0.0
    %1942 = vmatpush1.msra.mxu0 0.0
    %1943 = vmatprep.subr.mxu0 0.0
    %1944 = vmatpush1.msra.mxu0 0.0
    %1945 = vmatprep.subr.mxu0 0.0
    %1946 = vmatpush1.msra.mxu0 0.0
    %1947 = vmatprep.subr.mxu0 0.0
    %1948 = vmatpush1.msra.mxu0 0.0
    %1949 = vmatprep.subr.mxu0 0.0
    %1950 = vmatpush1.msra.mxu0 0.0
    %1951 = vmatprep.subr.mxu0 0.0
    %1952 = vmatpush1.msra.mxu0 0.0
    %1953 = vmatprep.subr.mxu0 0.0
    %1954 = vmatpush1.msra.mxu0 0.0
    %1955 = vmatprep.subr.mxu0 0.0
    %1956 = vmatpush1.msra.mxu0 0.0
    %1957 = vmatprep.subr.mxu0 0.0
    %1958 = vmatpush1.msra.mxu0 0.0
    %1959 = vmatprep.subr.mxu0 0.0
    %1960 = vmatpush1.msra.mxu0 0.0
    %1961 = vmatprep.subr.mxu0 0.0
    %1962 = vmatpush1.msra.mxu0 0.0
    %1963 = vmatprep.subr.mxu0 0.0
    %1964 = vmatpush1.msra.mxu0 0.0
    %1965 = vmatprep.subr.mxu0 0.0
    %1966 = vmatpush1.msra.mxu0 0.0
    %1967 = vmatprep.subr.mxu0 0.0
    %1968 = vmatpush1.msra.mxu0 0.0
    %1969 = vmatprep.subr.mxu0 0.0
    %1970 = vmatpush1.msra.mxu0 0.0
    %1971 = vmatprep.subr.mxu0 0.0
    %1972 = vmatpush1.msra.mxu0 0.0
    %1973 = vmatprep.subr.mxu0 0.0
    %1974 = vmatpush1.msra.mxu0 0.0
    %1975 = vmatprep.subr.mxu0 0.0
    %1976 = vmatpush1.msra.mxu0 0.0
    %1977 = vmatprep.subr.mxu0 0.0
    %1978 = vmatpush1.msra.mxu0 0.0
    %1979 = vmatprep.mubr.f32.mxu0 0.0
    %1980 = vmatmul.mubr.f32.gmra.mrb[0].mxu0 %v1910
    %v1981 = vpop.f32.mrb[0].mxu0
    %v1982 = vadd.f32 0.0, %v1981
    %v1983 = vpop.f32.mrb[0].mxu0
    %1984 = vmatprep.mubr.f32.mxu0 0.0
    %1985 = vmatmul.mubr.f32.gmra.mrb[0].mxu0 %v1913
    %v1986 = vpop.f32.mrb[0].mxu0
    %v1987 = vadd.f32 0.0, %v1986
    %v1988 = vpop.f32.mrb[0].mxu0
    %1989 = vdwg.mxu0
    %1990 = vrot.lane.b32.xlu0 %v1584, 112
    %v1991 = vpop.permute.xlu0 %1990
    %1992 = vrot.lane.b32.xlu0 %v1589, 112
    %v1993 = vpop.permute.xlu0 %1992
    %1994 = vrot.lane.b32.xlu0 %v1584, 80
    %v1995 = vpop.permute.xlu0 %1994
    %1996 = vrot.lane.b32.xlu0 %v1589, 80
    %v1997 = vpop.permute.xlu0 %1996
    %v1998 = vsel %vm280, %v1991, 0
    %v2000 = vsel %vm280, %v1993, 0
    %v2002 = vsel %vm280, %v1995, 0
    %v2004 = vsel %vm280, %v1997, 0
    %2006 = vmatprep.subr.mxu0 0.0
    %2007 = vmatpush1.xpose.msra.mxu0 %v2002
    %2008 = vmatprep.subr.mxu0 0.0
    %2009 = vmatpush1.xpose.msra.mxu0 %v2004
    %2010 = vmatprep.subr.mxu0 0.0
    %2011 = vmatpush1.xpose.msra.mxu0 0.0
    %2012 = vmatprep.subr.mxu0 0.0
    %2013 = vmatpush1.xpose.msra.mxu0 0.0
    %2014 = vmatprep.subr.mxu0 0.0
    %2015 = vmatpush1.xpose.msra.mxu0 0.0
    %2016 = vmatprep.subr.mxu0 0.0
    %2017 = vmatpush1.xpose.msra.mxu0 0.0
    %2018 = vmatprep.subr.mxu0 0.0
    %2019 = vmatpush1.xpose.msra.mxu0 0.0
    %2020 = vmatprep.subr.mxu0 0.0
    %2021 = vmatpush1.xpose.msra.mxu0 0.0
    %2022 = vmatprep.subr.mxu0 0.0
    %2023 = vmatpush1.xpose.msra.mxu0 0.0
    %2024 = vmatprep.subr.mxu0 0.0
    %2025 = vmatpush1.xpose.msra.mxu0 0.0
    %2026 = vmatprep.subr.mxu0 0.0
    %2027 = vmatpush1.xpose.msra.mxu0 0.0
    %2028 = vmatprep.subr.mxu0 0.0
    %2029 = vmatpush1.xpose.msra.mxu0 0.0
    %2030 = vmatprep.subr.mxu0 0.0
    %2031 = vmatpush1.xpose.msra.mxu0 0.0
    %2032 = vmatprep.subr.mxu0 0.0
    %2033 = vmatpush1.xpose.msra.mxu0 0.0
    %2034 = vmatprep.subr.mxu0 0.0
    %2035 = vmatpush1.xpose.msra.mxu0 0.0
    %2036 = vmatprep.subr.mxu0 0.0
    %2037 = vmatpush1.xpose.msra.mxu0 0.0
    %2038 = vmatprep.subr.mxu0 0.0
    %2039 = vmatpush1.xpose.msra.mxu0 0.0
    %2040 = vmatprep.subr.mxu0 0.0
    %2041 = vmatpush1.xpose.msra.mxu0 0.0
    %2042 = vmatprep.subr.mxu0 0.0
    %2043 = vmatpush1.xpose.msra.mxu0 0.0
    %2044 = vmatprep.subr.mxu0 0.0
    %2045 = vmatpush1.xpose.msra.mxu0 0.0
    %2046 = vmatprep.subr.mxu0 0.0
    %2047 = vmatpush1.xpose.msra.mxu0 0.0
    %2048 = vmatprep.subr.mxu0 0.0
    %2049 = vmatpush1.xpose.msra.mxu0 0.0
    %2050 = vmatprep.subr.mxu0 0.0
    %2051 = vmatpush1.xpose.msra.mxu0 0.0
    %2052 = vmatprep.subr.mxu0 0.0
    %2053 = vmatpush1.xpose.msra.mxu0 0.0
    %2054 = vmatprep.subr.mxu0 0.0
    %2055 = vmatpush1.xpose.msra.mxu0 0.0
    %2056 = vmatprep.subr.mxu0 0.0
    %2057 = vmatpush1.xpose.msra.mxu0 0.0
    %2058 = vmatprep.subr.mxu0 0.0
    %2059 = vmatpush1.xpose.msra.mxu0 0.0
    %2060 = vmatprep.subr.mxu0 0.0
    %2061 = vmatpush1.xpose.msra.mxu0 0.0
    %2062 = vmatprep.subr.mxu0 0.0
    %2063 = vmatpush1.xpose.msra.mxu0 0.0
    %2064 = vmatprep.subr.mxu0 0.0
    %2065 = vmatpush1.xpose.msra.mxu0 0.0
    %2066 = vmatprep.subr.mxu0 0.0
    %2067 = vmatpush1.xpose.msra.mxu0 0.0
    %2068 = vmatprep.subr.mxu0 0.0
    %2069 = vmatpush1.xpose.msra.mxu0 0.0
    %2070 = vmatprep.mubr.f32.mxu0 0.0
    %2071 = vmatmul.mubr.f32.gmra.mrb[0].mxu0 %v1998
    %v2072 = vpop.f32.mrb[0].mxu0
    %v2073 = vadd.f32 %v65, %v2072
    %v2074 = vpop.f32.mrb[0].mxu0
    %2075 = vmatprep.mubr.f32.mxu0 0.0
    %2076 = vmatmul.mubr.f32.gmra.mrb[0].mxu0 %v2000
    %v2077 = vpop.f32.mrb[0].mxu0
    %v2078 = vadd.f32 %v66, %v2077
    %v2079 = vpop.f32.mrb[0].mxu0
    %2080 = vdwg.mxu0
    %v2081 = vsel %vm364, %v2073, -inf
    %2082 = vmax.xlane.f32.xlu0 %v2081
    %v2083 = vpop.xlane.xlu0 %2082
    %v2084 = vsel %vm364, %v2078, -inf
    %2085 = vmax.xlane.f32.xlu0 %v2084
    %v2086 = vpop.xlane.xlu0 %2085
    %v2087 = vsub.f32 %v2073, %v2083
    %v2088 = vsub.f32 %v2078, %v2086
    %v2089 = vmul.f32 %v2087, 1.442695
    %v2090 = vpow.pop %v2089
    %v2091 = vmul.f32 %v2088, 1.442695
    %v2092 = vpow.pop %v2091
    %v2093 = vsel %vm364, %v2090, 0.0
    %2094 = vadd.xlane.f32.xlu0 %v2093
    %v2095 = vpop.xlane.xlu0 %2094
    %v2096 = vsel %vm364, %v2092, 0.0
    %2097 = vadd.xlane.f32.xlu0 %v2096
    %v2098 = vpop.xlane.xlu0 %2097
    %v2099 = vrcp.pop %v2095
    %v2100 = vrcp.pop %v2098
    %v2101 = vmul.f32 %v2090, %v2099
    %v2102 = vmul.f32 %v2092, %v2100
    %2103 = vrot.lane.b32.xlu0 %v1584, 48
    %v2104 = vpop.permute.xlu0 %2103
    %2105 = vrot.lane.b32.xlu0 %v1589, 48
    %v2106 = vpop.permute.xlu0 %2105
    %v2110 = vsel %vm364, %v2101, 0
    %v2113 = vsel %vm364, %v2102, 0
    %2115 = vmatprep.subr.mxu0 0.0
    %2116 = vmatpush1.msra.mxu0 %v2104
    %2117 = vmatprep.subr.mxu0 0.0
    %2118 = vmatpush1.msra.mxu0 %v2106
    %2119 = vmatprep.subr.mxu0 0.0
    %2120 = vmatpush1.msra.mxu0 0.0
    %2121 = vmatprep.subr.mxu0 0.0
    %2122 = vmatpush1.msra.mxu0 0.0
    %2123 = vmatprep.subr.mxu0 0.0
    %2124 = vmatpush1.msra.mxu0 0.0
    %2125 = vmatprep.subr.mxu0 0.0
    %2126 = vmatpush1.msra.mxu0 0.0
    %2127 = vmatprep.subr.mxu0 0.0
    %2128 = vmatpush1.msra.mxu0 0.0
    %2129 = vmatprep.subr.mxu0 0.0
    %2130 = vmatpush1.msra.mxu0 0.0
    %2131 = vmatprep.subr.mxu0 0.0
    %2132 = vmatpush1.msra.mxu0 0.0
    %2133 = vmatprep.subr.mxu0 0.0
    %2134 = vmatpush1.msra.mxu0 0.0
    %2135 = vmatprep.subr.mxu0 0.0
    %2136 = vmatpush1.msra.mxu0 0.0
    %2137 = vmatprep.subr.mxu0 0.0
    %2138 = vmatpush1.msra.mxu0 0.0
    %2139 = vmatprep.subr.mxu0 0.0
    %2140 = vmatpush1.msra.mxu0 0.0
    %2141 = vmatprep.subr.mxu0 0.0
    %2142 = vmatpush1.msra.mxu0 0.0
    %2143 = vmatprep.subr.mxu0 0.0
    %2144 = vmatpush1.msra.mxu0 0.0
    %2145 = vmatprep.subr.mxu0 0.0
    %2146 = vmatpush1.msra.mxu0 0.0
    %2147 = vmatprep.subr.mxu0 0.0
    %2148 = vmatpush1.msra.mxu0 0.0
    %2149 = vmatprep.subr.mxu0 0.0
    %2150 = vmatpush1.msra.mxu0 0.0
    %2151 = vmatprep.subr.mxu0 0.0
    %2152 = vmatpush1.msra.mxu0 0.0
    %2153 = vmatprep.subr.mxu0 0.0
    %2154 = vmatpush1.msra.mxu0 0.0
    %2155 = vmatprep.subr.mxu0 0.0
    %2156 = vmatpush1.msra.mxu0 0.0
    %2157 = vmatprep.subr.mxu0 0.0
    %2158 = vmatpush1.msra.mxu0 0.0
    %2159 = vmatprep.subr.mxu0 0.0
    %2160 = vmatpush1.msra.mxu0 0.0
    %2161 = vmatprep.subr.mxu0 0.0
    %2162 = vmatpush1.msra.mxu0 0.0
    %2163 = vmatprep.subr.mxu0 0.0
    %2164 = vmatpush1.msra.mxu0 0.0
    %2165 = vmatprep.subr.mxu0 0.0
    %2166 = vmatpush1.msra.mxu0 0.0
    %2167 = vmatprep.subr.mxu0 0.0
    %2168 = vmatpush1.msra.mxu0 0.0
    %2169 = vmatprep.subr.mxu0 0.0
    %2170 = vmatpush1.msra.mxu0 0.0
    %2171 = vmatprep.subr.mxu0 0.0
    %2172 = vmatpush1.msra.mxu0 0.0
    %2173 = vmatprep.subr.mxu0 0.0
    %2174 = vmatpush1.msra.mxu0 0.0
    %2175 = vmatprep.subr.mxu0 0.0
    %2176 = vmatpush1.msra.mxu0 0.0
    %2177 = vmatprep.subr.mxu0 0.0
    %2178 = vmatpush1.msra.mxu0 0.0
    %2179 = vmatprep.mubr.f32.mxu0 0.0
    %2180 = vmatmul.mubr.f32.gmra.mrb[0].mxu0 %v2110
    %v2181 = vpop.f32.mrb[0].mxu0
    %v2182 = vadd.f32 0.0, %v2181
    %v2183 = vpop.f32.mrb[0].mxu0
    %2184 = vmatprep.mubr.f32.mxu0 0.0
    %2185 = vmatmul.mubr.f32.gmra.mrb[0].mxu0 %v2113
    %v2186 = vpop.f32.mrb[0].mxu0
    %v2187 = vadd.f32 0.0, %v2186
    %v2188 = vpop.f32.mrb[0].mxu0
    %2189 = vdwg.mxu0
    %2190 = vrot.lane.b32.xlu0 %v1584, 104
    %v2191 = vpop.permute.xlu0 %2190
    %2192 = vrot.lane.b32.xlu0 %v1589, 104
    %v2193 = vpop.permute.xlu0 %2192
    %2194 = vrot.lane.b32.xlu0 %v1584, 72
    %v2195 = vpop.permute.xlu0 %2194
    %2196 = vrot.lane.b32.xlu0 %v1589, 72
    %v2197 = vpop.permute.xlu0 %2196
    %v2198 = vsel %vm280, %v2191, 0
    %v2200 = vsel %vm280, %v2193, 0
    %v2202 = vsel %vm280, %v2195, 0
    %v2204 = vsel %vm280, %v2197, 0
    %2206 = vmatprep.subr.mxu0 0.0
    %2207 = vmatpush1.xpose.msra.mxu0 %v2202
    %2208 = vmatprep.subr.mxu0 0.0
    %2209 = vmatpush1.xpose.msra.mxu0 %v2204
    %2210 = vmatprep.subr.mxu0 0.0
    %2211 = vmatpush1.xpose.msra.mxu0 0.0
    %2212 = vmatprep.subr.mxu0 0.0
    %2213 = vmatpush1.xpose.msra.mxu0 0.0
    %2214 = vmatprep.subr.mxu0 0.0
    %2215 = vmatpush1.xpose.msra.mxu0 0.0
    %2216 = vmatprep.subr.mxu0 0.0
    %2217 = vmatpush1.xpose.msra.mxu0 0.0
    %2218 = vmatprep.subr.mxu0 0.0
    %2219 = vmatpush1.xpose.msra.mxu0 0.0
    %2220 = vmatprep.subr.mxu0 0.0
    %2221 = vmatpush1.xpose.msra.mxu0 0.0
    %2222 = vmatprep.subr.mxu0 0.0
    %2223 = vmatpush1.xpose.msra.mxu0 0.0
    %2224 = vmatprep.subr.mxu0 0.0
    %2225 = vmatpush1.xpose.msra.mxu0 0.0
    %2226 = vmatprep.subr.mxu0 0.0
    %2227 = vmatpush1.xpose.msra.mxu0 0.0
    %2228 = vmatprep.subr.mxu0 0.0
    %2229 = vmatpush1.xpose.msra.mxu0 0.0
    %2230 = vmatprep.subr.mxu0 0.0
    %2231 = vmatpush1.xpose.msra.mxu0 0.0
    %2232 = vmatprep.subr.mxu0 0.0
    %2233 = vmatpush1.xpose.msra.mxu0 0.0
    %2234 = vmatprep.subr.mxu0 0.0
    %2235 = vmatpush1.xpose.msra.mxu0 0.0
    %2236 = vmatprep.subr.mxu0 0.0
    %2237 = vmatpush1.xpose.msra.mxu0 0.0
    %2238 = vmatprep.subr.mxu0 0.0
    %2239 = vmatpush1.xpose.msra.mxu0 0.0
    %2240 = vmatprep.subr.mxu0 0.0
    %2241 = vmatpush1.xpose.msra.mxu0 0.0
    %2242 = vmatprep.subr.mxu0 0.0
    %2243 = vmatpush1.xpose.msra.mxu0 0.0
    %2244 = vmatprep.subr.mxu0 0.0
    %2245 = vmatpush1.xpose.msra.mxu0 0.0
    %2246 = vmatprep.subr.mxu0 0.0
    %2247 = vmatpush1.xpose.msra.mxu0 0.0
    %2248 = vmatprep.subr.mxu0 0.0
    %2249 = vmatpush1.xpose.msra.mxu0 0.0
    %2250 = vmatprep.subr.mxu0 0.0
    %2251 = vmatpush1.xpose.msra.mxu0 0.0
    %2252 = vmatprep.subr.mxu0 0.0
    %2253 = vmatpush1.xpose.msra.mxu0 0.0
    %2254 = vmatprep.subr.mxu0 0.0
    %2255 = vmatpush1.xpose.msra.mxu0 0.0
    %2256 = vmatprep.subr.mxu0 0.0
    %2257 = vmatpush1.xpose.msra.mxu0 0.0
    %2258 = vmatprep.subr.mxu0 0.0
    %2259 = vmatpush1.xpose.msra.mxu0 0.0
    %2260 = vmatprep.subr.mxu0 0.0
    %2261 = vmatpush1.xpose.msra.mxu0 0.0
    %2262 = vmatprep.subr.mxu0 0.0
    %2263 = vmatpush1.xpose.msra.mxu0 0.0
    %2264 = vmatprep.subr.mxu0 0.0
    %2265 = vmatpush1.xpose.msra.mxu0 0.0
    %2266 = vmatprep.subr.mxu0 0.0
    %2267 = vmatpush1.xpose.msra.mxu0 0.0
    %2268 = vmatprep.subr.mxu0 0.0
    %2269 = vmatpush1.xpose.msra.mxu0 0.0
    %2270 = vmatprep.mubr.f32.mxu0 0.0
    %2271 = vmatmul.mubr.f32.gmra.mrb[0].mxu0 %v2198
    %v2272 = vpop.f32.mrb[0].mxu0
    %v2273 = vadd.f32 %v65, %v2272
    %v2274 = vpop.f32.mrb[0].mxu0
    %2275 = vmatprep.mubr.f32.mxu0 0.0
    %2276 = vmatmul.mubr.f32.gmra.mrb[0].mxu0 %v2200
    %v2277 = vpop.f32.mrb[0].mxu0
    %v2278 = vadd.f32 %v66, %v2277
    %v2279 = vpop.f32.mrb[0].mxu0
    %2280 = vdwg.mxu0
    %v2281 = vsel %vm364, %v2273, -inf
    %2282 = vmax.xlane.f32.xlu0 %v2281
    %v2283 = vpop.xlane.xlu0 %2282
    %v2284 = vsel %vm364, %v2278, -inf
    %2285 = vmax.xlane.f32.xlu0 %v2284
    %v2286 = vpop.xlane.xlu0 %2285
    %v2287 = vsub.f32 %v2273, %v2283
    %v2288 = vsub.f32 %v2278, %v2286
    %v2289 = vmul.f32 %v2287, 1.442695
    %v2290 = vpow.pop %v2289
    %v2291 = vmul.f32 %v2288, 1.442695
    %v2292 = vpow.pop %v2291
    %v2293 = vsel %vm364, %v2290, 0.0
    %2294 = vadd.xlane.f32.xlu0 %v2293
    %v2295 = vpop.xlane.xlu0 %2294
    %v2296 = vsel %vm364, %v2292, 0.0
    %2297 = vadd.xlane.f32.xlu0 %v2296
    %v2298 = vpop.xlane.xlu0 %2297
    %v2299 = vrcp.pop %v2295
    %v2300 = vrcp.pop %v2298
    %v2301 = vmul.f32 %v2290, %v2299
    %v2302 = vmul.f32 %v2292, %v2300
    %2303 = vrot.lane.b32.xlu0 %v1584, 40
    %v2304 = vpop.permute.xlu0 %2303
    %2305 = vrot.lane.b32.xlu0 %v1589, 40
    %v2306 = vpop.permute.xlu0 %2305
    %v2310 = vsel %vm364, %v2301, 0
    %v2313 = vsel %vm364, %v2302, 0
    %2315 = vmatprep.subr.mxu0 0.0
    %2316 = vmatpush1.msra.mxu0 %v2304
    %2317 = vmatprep.subr.mxu0 0.0
    %2318 = vmatpush1.msra.mxu0 %v2306
    %2319 = vmatprep.subr.mxu0 0.0
    %2320 = vmatpush1.msra.mxu0 0.0
    %2321 = vmatprep.subr.mxu0 0.0
    %2322 = vmatpush1.msra.mxu0 0.0
    %2323 = vmatprep.subr.mxu0 0.0
    %2324 = vmatpush1.msra.mxu0 0.0
    %2325 = vmatprep.subr.mxu0 0.0
    %2326 = vmatpush1.msra.mxu0 0.0
    %2327 = vmatprep.subr.mxu0 0.0
    %2328 = vmatpush1.msra.mxu0 0.0
    %2329 = vmatprep.subr.mxu0 0.0
    %2330 = vmatpush1.msra.mxu0 0.0
    %2331 = vmatprep.subr.mxu0 0.0
    %2332 = vmatpush1.msra.mxu0 0.0
    %2333 = vmatprep.subr.mxu0 0.0
    %2334 = vmatpush1.msra.mxu0 0.0
    %2335 = vmatprep.subr.mxu0 0.0
    %2336 = vmatpush1.msra.mxu0 0.0
    %2337 = vmatprep.subr.mxu0 0.0
    %2338 = vmatpush1.msra.mxu0 0.0
    %2339 = vmatprep.subr.mxu0 0.0
    %2340 = vmatpush1.msra.mxu0 0.0
    %2341 = vmatprep.subr.mxu0 0.0
    %2342 = vmatpush1.msra.mxu0 0.0
    %2343 = vmatprep.subr.mxu0 0.0
    %2344 = vmatpush1.msra.mxu0 0.0
    %2345 = vmatprep.subr.mxu0 0.0
    %2346 = vmatpush1.msra.mxu0 0.0
    %2347 = vmatprep.subr.mxu0 0.0
    %2348 = vmatpush1.msra.mxu0 0.0
    %2349 = vmatprep.subr.mxu0 0.0
    %2350 = vmatpush1.msra.mxu0 0.0
    %2351 = vmatprep.subr.mxu0 0.0
    %2352 = vmatpush1.msra.mxu0 0.0
    %2353 = vmatprep.subr.mxu0 0.0
    %2354 = vmatpush1.msra.mxu0 0.0
    %2355 = vmatprep.subr.mxu0 0.0
    %2356 = vmatpush1.msra.mxu0 0.0
    %2357 = vmatprep.subr.mxu0 0.0
    %2358 = vmatpush1.msra.mxu0 0.0
    %2359 = vmatprep.subr.mxu0 0.0
    %2360 = vmatpush1.msra.mxu0 0.0
    %2361 = vmatprep.subr.mxu0 0.0
    %2362 = vmatpush1.msra.mxu0 0.0
    %2363 = vmatprep.subr.mxu0 0.0
    %2364 = vmatpush1.msra.mxu0 0.0
    %2365 = vmatprep.subr.mxu0 0.0
    %2366 = vmatpush1.msra.mxu0 0.0
    %2367 = vmatprep.subr.mxu0 0.0
    %2368 = vmatpush1.msra.mxu0 0.0
    %2369 = vmatprep.subr.mxu0 0.0
    %2370 = vmatpush1.msra.mxu0 0.0
    %2371 = vmatprep.subr.mxu0 0.0
    %2372 = vmatpush1.msra.mxu0 0.0
    %2373 = vmatprep.subr.mxu0 0.0
    %2374 = vmatpush1.msra.mxu0 0.0
    %2375 = vmatprep.subr.mxu0 0.0
    %2376 = vmatpush1.msra.mxu0 0.0
    %2377 = vmatprep.subr.mxu0 0.0
    %2378 = vmatpush1.msra.mxu0 0.0
    %2379 = vmatprep.mubr.f32.mxu0 0.0
    %2380 = vmatmul.mubr.f32.gmra.mrb[0].mxu0 %v2310
    %v2381 = vpop.f32.mrb[0].mxu0
    %v2382 = vadd.f32 0.0, %v2381
    %v2383 = vpop.f32.mrb[0].mxu0
    %2384 = vmatprep.mubr.f32.mxu0 0.0
    %2385 = vmatmul.mubr.f32.gmra.mrb[0].mxu0 %v2313
    %v2386 = vpop.f32.mrb[0].mxu0
    %v2387 = vadd.f32 0.0, %v2386
    %v2388 = vpop.f32.mrb[0].mxu0
    %2389 = vdwg.mxu0
    %2392 = vrot.lane.b32.xlu0 %v1982, 8
    %v2393 = vpop.permute.xlu0 %2392
    %2394 = vrot.lane.b32.xlu0 %v1987, 8
    %v2395 = vpop.permute.xlu0 %2394
    %2400 = vrot.lane.b32.xlu0 %v2182, 16
    %v2401 = vpop.permute.xlu0 %2400
    %2402 = vrot.lane.b32.xlu0 %v2187, 16
    %v2403 = vpop.permute.xlu0 %2402
    %2408 = vrot.lane.b32.xlu0 %v2382, 24
    %v2409 = vpop.permute.xlu0 %2408
    %2410 = vrot.lane.b32.xlu0 %v2387, 24
    %v2411 = vpop.permute.xlu0 %2410
    %v2414 = vsel %vm280, %v1782, %v2393
    %v2415 = vsel %vm280, %v1787, %v2395
    %v2416 = vsel %vm364, %v2414, %v2401
    %v2417 = vsel %vm364, %v2415, %v2403
    %v2418 = vsel %vm1102, %v2416, %v2409
    %v2419 = vsel %vm1102, %v2417, %v2411
    %v2420 = vlaneseq
    %v2421 = vshrl.u32 %v2420, 7
    %v2422 = vsub.s32 0, %v2421
    %v2423 = vrot.slane %v1468, %v2422
    %2424 = vrot.lane.b32.xlu0 %v1460, 96
    %v2425 = vpop.permute.xlu0 %2424
    %2426 = vrot.lane.b32.xlu0 %v1462, 96
    %v2427 = vpop.permute.xlu0 %2426
    %2428 = vrot.lane.b32.xlu0 %v1464, 96
    %v2429 = vpop.permute.xlu0 %2428
    %2430 = vrot.lane.b32.xlu0 %v1466, 96
    %v2431 = vpop.permute.xlu0 %2430
    %v2437 = vsel %vm192, %v2418, 0
    %v2440 = vsel %vm192, %v2419, 0
    %2442 = vmatprep.subr.mxu0 0.0
    %2443 = vmatpush1.msra.mxu0 %v2425
    %2444 = vmatprep.subr.mxu0 0.0
    %2445 = vmatpush1.msra.mxu0 %v2427
    %2446 = vmatprep.subr.mxu0 0.0
    %2447 = vmatpush1.msra.mxu0 %v2429
    %2448 = vmatprep.subr.mxu0 0.0
    %2449 = vmatpush1.msra.mxu0 %v2431
    %2450 = vmatprep.subr.mxu0 0.0
    %2451 = vmatpush1.msra.mxu0 0.0
    %2452 = vmatprep.subr.mxu0 0.0
    %2453 = vmatpush1.msra.mxu0 0.0
    %2454 = vmatprep.subr.mxu0 0.0
    %2455 = vmatpush1.msra.mxu0 0.0
    %2456 = vmatprep.subr.mxu0 0.0
    %2457 = vmatpush1.msra.mxu0 0.0
    %2458 = vmatprep.subr.mxu0 0.0
    %2459 = vmatpush1.msra.mxu0 0.0
    %2460 = vmatprep.subr.mxu0 0.0
    %2461 = vmatpush1.msra.mxu0 0.0
    %2462 = vmatprep.subr.mxu0 0.0
    %2463 = vmatpush1.msra.mxu0 0.0
    %2464 = vmatprep.subr.mxu0 0.0
    %2465 = vmatpush1.msra.mxu0 0.0
    %2466 = vmatprep.subr.mxu0 0.0
    %2467 = vmatpush1.msra.mxu0 0.0
    %2468 = vmatprep.subr.mxu0 0.0
    %2469 = vmatpush1.msra.mxu0 0.0
    %2470 = vmatprep.subr.mxu0 0.0
    %2471 = vmatpush1.msra.mxu0 0.0
    %2472 = vmatprep.subr.mxu0 0.0
    %2473 = vmatpush1.msra.mxu0 0.0
    %2474 = vmatprep.subr.mxu0 0.0
    %2475 = vmatpush1.msra.mxu0 0.0
    %2476 = vmatprep.subr.mxu0 0.0
    %2477 = vmatpush1.msra.mxu0 0.0
    %2478 = vmatprep.subr.mxu0 0.0
    %2479 = vmatpush1.msra.mxu0 0.0
    %2480 = vmatprep.subr.mxu0 0.0
    %2481 = vmatpush1.msra.mxu0 0.0
    %2482 = vmatprep.subr.mxu0 0.0
    %2483 = vmatpush1.msra.mxu0 0.0
    %2484 = vmatprep.subr.mxu0 0.0
    %2485 = vmatpush1.msra.mxu0 0.0
    %2486 = vmatprep.subr.mxu0 0.0
    %2487 = vmatpush1.msra.mxu0 0.0
    %2488 = vmatprep.subr.mxu0 0.0
    %2489 = vmatpush1.msra.mxu0 0.0
    %2490 = vmatprep.subr.mxu0 0.0
    %2491 = vmatpush1.msra.mxu0 0.0
    %2492 = vmatprep.subr.mxu0 0.0
    %2493 = vmatpush1.msra.mxu0 0.0
    %2494 = vmatprep.subr.mxu0 0.0
    %2495 = vmatpush1.msra.mxu0 0.0
    %2496 = vmatprep.subr.mxu0 0.0
    %2497 = vmatpush1.msra.mxu0 0.0
    %2498 = vmatprep.subr.mxu0 0.0
    %2499 = vmatpush1.msra.mxu0 0.0
    %2500 = vmatprep.subr.mxu0 0.0
    %2501 = vmatpush1.msra.mxu0 0.0
    %2502 = vmatprep.subr.mxu0 0.0
    %2503 = vmatpush1.msra.mxu0 0.0
    %2504 = vmatprep.subr.mxu0 0.0
    %2505 = vmatpush1.msra.mxu0 0.0
    %2506 = vmatprep.mubr.f32.mxu0 0.0
    %2507 = vmatmul.mubr.f32.gmra.mrb[0].mxu0 %v2437
    %v2508 = vpop.f32.mrb[0].mxu0
    %v2509 = vadd.f32 %v2423, %v2508
    %v2510 = vpop.f32.mrb[0].mxu0
    %2511 = vmatprep.mubr.f32.mxu0 0.0
    %2512 = vmatmul.mubr.f32.gmra.mrb[0].mxu0 %v2440
    %v2513 = vpop.f32.mrb[0].mxu0
    %v2514 = vadd.f32 %v2423, %v2513
    %v2515 = vpop.f32.mrb[0].mxu0
    %2516 = vdwg.mxu0
    %v2517 = vadd.f32 %v1457, %v2509
    %v2518 = vadd.f32 %v1458, %v2514
    %v2519 = vsel %vm192, %v2517, 0.0
    %2520 = vadd.xlane.f32.xlu0 %v2519
    %v2521 = vpop.xlane.xlu0 %2520
    %v2522 = vsel %vm192, %v2518, 0.0
    %2523 = vadd.xlane.f32.xlu0 %v2522
    %v2524 = vpop.xlane.xlu0 %2523
    %v2525 = vmul.f32 %v2521, %v1214
    %v2526 = vmul.f32 %v2524, %v1214
    %v2527 = vsub.f32 %v2517, %v2525
    %v2528 = vsub.f32 %v2518, %v2526
    %v2529 = vmul.f32 %v2527, %v2527
    %v2530 = vmul.f32 %v2528, %v2528
    %v2531 = vsel %vm192, %v2529, 0.0
    %2532 = vadd.xlane.f32.xlu0 %v2531
    %v2533 = vpop.xlane.xlu0 %2532
    %v2534 = vsel %vm192, %v2530, 0.0
    %2535 = vadd.xlane.f32.xlu0 %v2534
    %v2536 = vpop.xlane.xlu0 %2535
    %v2537 = vmul.f32 %v2533, %v1214
    %v2538 = vmul.f32 %v2536, %v1214
    %v2539 = vadd.f32 %v2537, 1e-05
    %v2540 = vadd.f32 %v2538, 1e-05
    %v2541 = vrsqrt.pop %v2539
    %v2542 = vrsqrt.pop %v2540
    %v2543 = vmul.f32 %v2527, %v2541
    %v2544 = vmul.f32 %v2528, %v2542
    %v2545 = vlaneseq
    %v2546 = vshrl.u32 %v2545, 7
    %v2547 = vsub.s32 0, %v2546
    %v2548 = vrot.slane %v1471, %v2547
    %v2549 = vmul.f32 %v2543, %v2548
    %v2550 = vmul.f32 %v2544, %v2548
    %v2551 = vlaneseq
    %v2552 = vshrl.u32 %v2551, 7
    %v2553 = vsub.s32 0, %v2552
    %v2554 = vrot.slane %v1472, %v2553
    %v2555 = vadd.f32 %v2549, %v2554
    %v2556 = vadd.f32 %v2550, %v2554
    %v2557 = vlaneseq
    %v2558 = vshrl.u32 %v2557, 7
    %v2559 = vsub.s32 0, %v2558
    %v2560 = vrot.slane %v1469, %v2559
    %v2566 = vsel %vm192, %v2555, 0
    %v2569 = vsel %vm192, %v2556, 0
    %2571 = vmatprep.subr.mxu0 0.0
    %2572 = vmatpush1.msra.mxu0 %v1490
    %2573 = vmatprep.subr.mxu0 0.0
    %2574 = vmatpush1.msra.mxu0 %v1494
    %2575 = vmatprep.subr.mxu0 0.0
    %2576 = vmatpush1.msra.mxu0 %v1498
    %2577 = vmatprep.subr.mxu0 0.0
    %2578 = vmatpush1.msra.mxu0 %v1502
    %2579 = vmatprep.subr.mxu0 0.0
    %2580 = vmatpush1.msra.mxu0 0.0
    %2581 = vmatprep.subr.mxu0 0.0
    %2582 = vmatpush1.msra.mxu0 0.0
    %2583 = vmatprep.subr.mxu0 0.0
    %2584 = vmatpush1.msra.mxu0 0.0
    %2585 = vmatprep.subr.mxu0 0.0
    %2586 = vmatpush1.msra.mxu0 0.0
    %2587 = vmatprep.subr.mxu0 0.0
    %2588 = vmatpush1.msra.mxu0 0.0
    %2589 = vmatprep.subr.mxu0 0.0
    %2590 = vmatpush1.msra.mxu0 0.0
    %2591 = vmatprep.subr.mxu0 0.0
    %2592 = vmatpush1.msra.mxu0 0.0
    %2593 = vmatprep.subr.mxu0 0.0
    %2594 = vmatpush1.msra.mxu0 0.0
    %2595 = vmatprep.subr.mxu0 0.0
    %2596 = vmatpush1.msra.mxu0 0.0
    %2597 = vmatprep.subr.mxu0 0.0
    %2598 = vmatpush1.msra.mxu0 0.0
    %2599 = vmatprep.subr.mxu0 0.0
    %2600 = vmatpush1.msra.mxu0 0.0
    %2601 = vmatprep.subr.mxu0 0.0
    %2602 = vmatpush1.msra.mxu0 0.0
    %2603 = vmatprep.subr.mxu0 0.0
    %2604 = vmatpush1.msra.mxu0 0.0
    %2605 = vmatprep.subr.mxu0 0.0
    %2606 = vmatpush1.msra.mxu0 0.0
    %2607 = vmatprep.subr.mxu0 0.0
    %2608 = vmatpush1.msra.mxu0 0.0
    %2609 = vmatprep.subr.mxu0 0.0
    %2610 = vmatpush1.msra.mxu0 0.0
    %2611 = vmatprep.subr.mxu0 0.0
    %2612 = vmatpush1.msra.mxu0 0.0
    %2613 = vmatprep.subr.mxu0 0.0
    %2614 = vmatpush1.msra.mxu0 0.0
    %2615 = vmatprep.subr.mxu0 0.0
    %2616 = vmatpush1.msra.mxu0 0.0
    %2617 = vmatprep.subr.mxu0 0.0
    %2618 = vmatpush1.msra.mxu0 0.0
    %2619 = vmatprep.subr.mxu0 0.0
    %2620 = vmatpush1.msra.mxu0 0.0
    %2621 = vmatprep.subr.mxu0 0.0
    %2622 = vmatpush1.msra.mxu0 0.0
    %2623 = vmatprep.subr.mxu0 0.0
    %2624 = vmatpush1.msra.mxu0 0.0
    %2625 = vmatprep.subr.mxu0 0.0
    %2626 = vmatpush1.msra.mxu0 0.0
    %2627 = vmatprep.subr.mxu0 0.0
    %2628 = vmatpush1.msra.mxu0 0.0
    %2629 = vmatprep.subr.mxu0 0.0
    %2630 = vmatpush1.msra.mxu0 0.0
    %2631 = vmatprep.subr.mxu0 0.0
    %2632 = vmatpush1.msra.mxu0 0.0
    %2633 = vmatprep.subr.mxu0 0.0
    %2634 = vmatpush1.msra.mxu0 0.0
    %2635 = vmatprep.mubr.f32.mxu0 0.0
    %2636 = vmatmul.mubr.f32.gmra.mrb[0].mxu0 %v2566
    %v2637 = vpop.f32.mrb[0].mxu0
    %v2638 = vadd.f32 %v2560, %v2637
    %v2639 = vpop.f32.mrb[0].mxu0
    %2640 = vmatprep.mubr.f32.mxu0 0.0
    %2641 = vmatmul.mubr.f32.gmra.mrb[0].mxu0 %v2569
    %v2642 = vpop.f32.mrb[0].mxu0
    %v2643 = vadd.f32 %v2560, %v2642
    %v2644 = vpop.f32.mrb[0].mxu0
    %2645 = vdwg.mxu0
    %v2646 = vmax.f32 %v2638, 0.0
    %v2647 = vmax.f32 %v2643, 0.0
    %v2648 = vlaneseq
    %v2649 = vshrl.u32 %v2648, 7
    %v2650 = vsub.s32 0, %v2649
    %v2651 = vrot.slane %v1470, %v2650
    %2660 = vrot.lane.b32.xlu0 %v172, 96
    %v2661 = vpop.permute.xlu0 %2660
    %2662 = vrot.lane.b32.xlu0 %v173, 96
    %v2663 = vpop.permute.xlu0 %2662
    %2664 = vrot.lane.b32.xlu0 %v174, 96
    %v2665 = vpop.permute.xlu0 %2664
    %2666 = vrot.lane.b32.xlu0 %v175, 96
    %v2667 = vpop.permute.xlu0 %2666
    %2668 = vrot.lane.b32.xlu0 %v176, 96
    %v2669 = vpop.permute.xlu0 %2668
    %2670 = vrot.lane.b32.xlu0 %v177, 96
    %v2671 = vpop.permute.xlu0 %2670
    %2672 = vrot.lane.b32.xlu0 %v178, 96
    %v2673 = vpop.permute.xlu0 %2672
    %2674 = vrot.lane.b32.xlu0 %v179, 96
    %v2675 = vpop.permute.xlu0 %2674
    %v2685 = vsel %vm82, %v2646, 0
    %v2688 = vsel %vm82, %v2647, 0
    %2690 = vmatprep.subr.mxu0 0.0
    %2691 = vmatpush1.msra.mxu0 %v2661
    %2692 = vmatprep.subr.mxu0 0.0
    %2693 = vmatpush1.msra.mxu0 %v2663
    %2694 = vmatprep.subr.mxu0 0.0
    %2695 = vmatpush1.msra.mxu0 %v2665
    %2696 = vmatprep.subr.mxu0 0.0
    %2697 = vmatpush1.msra.mxu0 %v2667
    %2698 = vmatprep.subr.mxu0 0.0
    %2699 = vmatpush1.msra.mxu0 %v2669
    %2700 = vmatprep.subr.mxu0 0.0
    %2701 = vmatpush1.msra.mxu0 %v2671
    %2702 = vmatprep.subr.mxu0 0.0
    %2703 = vmatpush1.msra.mxu0 %v2673
    %2704 = vmatprep.subr.mxu0 0.0
    %2705 = vmatpush1.msra.mxu0 %v2675
    %2706 = vmatprep.subr.mxu0 0.0
    %2707 = vmatpush1.msra.mxu0 0.0
    %2708 = vmatprep.subr.mxu0 0.0
    %2709 = vmatpush1.msra.mxu0 0.0
    %2710 = vmatprep.subr.mxu0 0.0
    %2711 = vmatpush1.msra.mxu0 0.0
    %2712 = vmatprep.subr.mxu0 0.0
    %2713 = vmatpush1.msra.mxu0 0.0
    %2714 = vmatprep.subr.mxu0 0.0
    %2715 = vmatpush1.msra.mxu0 0.0
    %2716 = vmatprep.subr.mxu0 0.0
    %2717 = vmatpush1.msra.mxu0 0.0
    %2718 = vmatprep.subr.mxu0 0.0
    %2719 = vmatpush1.msra.mxu0 0.0
    %2720 = vmatprep.subr.mxu0 0.0
    %2721 = vmatpush1.msra.mxu0 0.0
    %2722 = vmatprep.subr.mxu0 0.0
    %2723 = vmatpush1.msra.mxu0 0.0
    %2724 = vmatprep.subr.mxu0 0.0
    %2725 = vmatpush1.msra.mxu0 0.0
    %2726 = vmatprep.subr.mxu0 0.0
    %2727 = vmatpush1.msra.mxu0 0.0
    %2728 = vmatprep.subr.mxu0 0.0
    %2729 = vmatpush1.msra.mxu0 0.0
    %2730 = vmatprep.subr.mxu0 0.0
    %2731 = vmatpush1.msra.mxu0 0.0
    %2732 = vmatprep.subr.mxu0 0.0
    %2733 = vmatpush1.msra.mxu0 0.0
    %2734 = vmatprep.subr.mxu0 0.0
    %2735 = vmatpush1.msra.mxu0 0.0
    %2736 = vmatprep.subr.mxu0 0.0
    %2737 = vmatpush1.msra.mxu0 0.0
    %2738 = vmatprep.subr.mxu0 0.0
    %2739 = vmatpush1.msra.mxu0 0.0
    %2740 = vmatprep.subr.mxu0 0.0
    %2741 = vmatpush1.msra.mxu0 0.0
    %2742 = vmatprep.subr.mxu0 0.0
    %2743 = vmatpush1.msra.mxu0 0.0
    %2744 = vmatprep.subr.mxu0 0.0
    %2745 = vmatpush1.msra.mxu0 0.0
    %2746 = vmatprep.subr.mxu0 0.0
    %2747 = vmatpush1.msra.mxu0 0.0
    %2748 = vmatprep.subr.mxu0 0.0
    %2749 = vmatpush1.msra.mxu0 0.0
    %2750 = vmatprep.subr.mxu0 0.0
    %2751 = vmatpush1.msra.mxu0 0.0
    %2752 = vmatprep.subr.mxu0 0.0
    %2753 = vmatpush1.msra.mxu0 0.0
    %2754 = vmatprep.mubr.f32.mxu0 0.0
    %2755 = vmatmul.mubr.f32.gmra.mrb[0].mxu0 %v2685
    %v2756 = vpop.f32.mrb[0].mxu0
    %v2757 = vadd.f32 %v2651, %v2756
    %v2758 = vpop.f32.mrb[0].mxu0
    %2759 = vmatprep.mubr.f32.mxu0 0.0
    %2760 = vmatmul.mubr.f32.gmra.mrb[0].mxu0 %v2688
    %v2761 = vpop.f32.mrb[0].mxu0
    %v2762 = vadd.f32 %v2651, %v2761
    %v2763 = vpop.f32.mrb[0].mxu0
    %2764 = vdwg.mxu0
    %v2765 = vadd.f32 %v2555, %v2757
    %v2766 = vadd.f32 %v2556, %v2762
    %v2767 = vsel %vm192, %v2765, 0.0
    %2768 = vadd.xlane.f32.xlu0 %v2767
    %v2769 = vpop.xlane.xlu0 %2768
    %v2770 = vsel %vm192, %v2766, 0.0
    %2771 = vadd.xlane.f32.xlu0 %v2770
    %v2772 = vpop.xlane.xlu0 %2771
    %v2773 = vmul.f32 %v2769, %v1214
    %v2774 = vmul.f32 %v2772, %v1214
    %v2775 = vsub.f32 %v2765, %v2773
    %v2776 = vsub.f32 %v2766, %v2774
    %v2777 = vmul.f32 %v2775, %v2775
    %v2778 = vmul.f32 %v2776, %v2776
    %v2779 = vsel %vm192, %v2777, 0.0
    %2780 = vadd.xlane.f32.xlu0 %v2779
    %v2781 = vpop.xlane.xlu0 %2780
    %v2782 = vsel %vm192, %v2778, 0.0
    %2783 = vadd.xlane.f32.xlu0 %v2782
    %v2784 = vpop.xlane.xlu0 %2783
    %v2785 = vmul.f32 %v2781, %v1214
    %v2786 = vmul.f32 %v2784, %v1214
    %v2787 = vadd.f32 %v2785, 1e-05
    %v2788 = vadd.f32 %v2786, 1e-05
    %v2789 = vrsqrt.pop %v2787
    %v2790 = vrsqrt.pop %v2788
    %v2791 = vmul.f32 %v2775, %v2789
    %v2792 = vmul.f32 %v2776, %v2790
    %v2793 = vlaneseq
    %v2794 = vshrl.u32 %v2793, 7
    %v2795 = vsub.s32 0, %v2794
    %v2796 = vrot.slane %v1473, %v2795
    %v2797 = vmul.f32 %v2791, %v2796
    %v2798 = vmul.f32 %v2792, %v2796
    %v2799 = vlaneseq
    %v2800 = vshrl.u32 %v2799, 7
    %v2801 = vsub.s32 0, %v2800
    %v2802 = vrot.slane %v1474, %v2801
    %v2803 = vadd.f32 %v2797, %v2802
    %v2804 = vadd.f32 %v2798, %v2802
    %2805 = vst.msk [vmem:[#allocation8] sm:$0xff] %vm192, %v2803
    %2806 = vst.msk [vmem:[#allocation8 + $0x8] sm:$0xff] %vm192, %v2804
    // Predicated region
    $region38: #{internal_temporal_relation_forward.1} parent=1 // pred_check
      _
    $region39: #{internal_temporal_relation_forward.1} parent=1 // pred_check_branch
      %2808 = sbr.rel (0) target = $region41
    $region40: #{internal_temporal_relation_forward.1} parent=1 // pred_region
      %s2810 = ssub.s32 256, 256
      %2811 = vsyncadd [#allocation4], %s2810
      %s2812 = sshll.u32 [#allocation8], 4
      %s2813 = int_to_ptr.vmem [resolvable:$true] %s2812
      %2818 = dma.vmem_to_hbm [thread:$0]  %s2813, 256, %s6, [#allocation4], 128, 128, 8
    $region41: #{internal_temporal_relation_forward.1} parent=1 // pred_fallthru
      _
    // Predicated region
    $region42: #{internal_temporal_relation_forward.1} parent=1 // pred_check
      _
    $region43: #{internal_temporal_relation_forward.1} parent=1 // pred_check_branch
      %2820 = sbr.rel (0) target = $region45
    $region44: #{internal_temporal_relation_forward.1} parent=1 // pred_region
      %2821 = dma.done [#allocation4], 256
    $region45: #{internal_temporal_relation_forward.1} parent=1 // pred_fallthru
      _
    %2822 = vsyncpa [#allocation3], 1
    %2823 = vsyncpa [#allocation6], 1
    %2824 = vsyncpa [#allocation4], 1

</llo_original>
